<compile_context>
chip_gen: v7x
topology: tpu7x:2x2x1
jax: 0.10.0
libtpu: 0.0.40
codegen_flags: <defaults>
</compile_context>

<pallas_src>
import jax
import jax.numpy as jnp
from jax.experimental import pallas as pl
from jax.experimental.pallas import tpu as pltpu

BT = 8            # batch tile (one grid step)
C1 = 16           # conv1 output channels
K1 = 27           # conv1 im2col depth (3*3*3)
K1P = 32          # padded contraction dim (multiple of 8)
NLOGITS = 10
NPAD = 128        # lane-dense logits width
H1 = W1 = 16      # conv1 output spatial
HP = WP = 8       # pooled spatial
NPOS = HP * WP    # 64 pooled positions
KD = NPOS * C1    # 1024 = folded conv2+dense contraction depth


# ------------------------------ fused kernel -------------------------------

def _student_kernel(p_ref, w1_ref, b1_ref, wc_ref, bc_ref, o_ref):
    # p_ref : (BT, 4*NPOS, K1P)  conv1 patches, rows per image ordered
    #                            (pool_di, pool_dj, i, j)
    # w1_ref: (K1P, C1)          conv1 weight, flatten order (ci, kh, kw)
    # b1_ref: (1, C1)
    # wc_ref: (KD, NPAD)         folded conv2+dense weight, rows (i, j, c1)
    # bc_ref: (1, NPAD)          folded conv2+dense bias
    # o_ref : (BT, NPAD)
    patches = p_ref[...].reshape(BT * 4 * NPOS, K1P)             # (2048, 32)

    # conv1 as GEMM + bias + LeakyReLU(0.2), all in VMEM.
    h1 = jnp.dot(patches, w1_ref[...],
                 preferred_element_type=jnp.float32) + b1_ref[...]   # (2048, 16)
    h1 = jnp.maximum(h1, 0.2 * h1)                               # leaky relu

    # MaxPool2d(2): the 4 pool phases are a contiguous major axis per image.
    h1 = h1.reshape(BT, 4, NPOS, C1)
    pooled = jnp.max(h1, axis=1)                                 # (BT, 64, 16)

    # conv2 + NCHW flatten + dense, pre-folded into one linear map and
    # executed as a single GEMM.
    flat = pooled.reshape(BT, KD)                                # (BT, 1024)
    o_ref[...] = jnp.dot(flat, wc_ref[...],
                         preferred_element_type=jnp.float32) + bc_ref[...]


# --------------------------- host-side input prep --------------------------

def _conv1_patches(x):
    """x: (B, 3, 32, 32) -> (B, 4*NPOS, K1P).

    Per-image row order (pool_di, pool_dj, i, j); column order (ci, kh, kw)
    matches PyTorch's (O, C, kh, kw) weight flatten, zero-padded 27 -> 32."""
    B = x.shape[0]
    xp = jnp.pad(x, ((0, 0), (0, 0), (1, 1), (1, 1)))            # (B, 3, 34, 34)
    taps = [xp[:, :, kh:kh + 2 * H1:2, kw:kw + 2 * W1:2]
            for kh in range(3) for kw in range(3)]               # (B, 3, 16, 16)
    t = jnp.stack(taps, axis=2)                                  # (B, 3, 9, 16, 16)
    t = t.reshape(B, K1, H1, W1)                                 # k = (ci, kh, kw)
    t = t.reshape(B, K1, HP, 2, WP, 2)                           # [b, k, i, di, j, dj]
    t = jnp.transpose(t, (0, 3, 5, 2, 4, 1))                     # [b, di, dj, i, j, k]
    t = t.reshape(B, 4 * NPOS, K1)
    return jnp.pad(t, ((0, 0), (0, 0), (0, K1P - K1)))


# ------------------------- one-time parameter prep --------------------------

def prepare_params(params):
    """Reshape/pad weights once; fold conv2 (stride 2, pad 1) + NCHW flatten +
    dense into a single linear map from the pooled activation to the logits."""
    hp = jax.lax.Precision.HIGHEST
    w1, b1 = params["w1"], params["b1"]
    w2, b2 = params["w2"], params["b2"]
    wd, bd = params["wd"], params["bd"]

    w1p = jnp.pad(w1.reshape(C1, K1).T, ((0, K1P - K1), (0, 0)))      # (32, 16)
    b1p = b1.reshape(1, C1)

    C2 = w2.shape[0]
    wd_r = wd.reshape(NLOGITS, C2, 4, 4)                              # [n, c2, u, v]
    # A[kh,kw,c1,n,u,v] = sum_c2 w2[c2,c1,kh,kw] * wd[n, (c2,u,v)]
    A = jnp.einsum('dchw,nduv->hwcnuv', w2, wd_r, precision=hp)
    wcp = jnp.zeros((HP + 2, WP + 2, C1, NLOGITS), jnp.float32)
    for kh in range(3):
        for kw in range(3):
            # pooled index i = 2u + kh - 1 -> padded index i+1 = 2u + kh
            wcp = wcp.at[kh:kh + 8:2, kw:kw + 8:2].add(
                jnp.transpose(A[kh, kw], (2, 3, 0, 1)))               # [u, v, c1, n]
    wc = wcp[1:HP + 1, 1:WP + 1].reshape(NPOS, C1, NLOGITS)           # (64, 16, 10)
    wc = jnp.pad(wc, ((0, 0), (0, 0), (0, NPAD - NLOGITS)))           # lane-dense
    wc = wc.reshape(KD, NPAD)                                         # rows (i,j,c1)
    bc = bd + jnp.einsum('nduv,d->n', wd_r, b2, precision=hp)
    bc = jnp.pad(bc, (0, NPAD - NLOGITS)).reshape(1, NPAD)
    return {"w1p": w1p, "b1p": b1p, "wc": wc, "bc": bc}


# --------------------------------- forward ---------------------------------

def student_forward(x, prep):
    B = x.shape[0]
    b_pad = -(-B // BT) * BT
    if b_pad != B:
        x = jnp.pad(x, ((0, b_pad - B), (0, 0), (0, 0), (0, 0)))
    patches = _conv1_patches(x)                                   # (b_pad, 256, 32)

    out = pl.pallas_call(
        _student_kernel,
        out_shape=jax.ShapeDtypeStruct((b_pad, NPAD), jnp.float32),
        grid=(b_pad // BT,),
        in_specs=[
            pl.BlockSpec((BT, 4 * NPOS, K1P), lambda g: (g, 0, 0)),
            pl.BlockSpec((K1P, C1), lambda g: (0, 0)),
            pl.BlockSpec((1, C1), lambda g: (0, 0)),
            pl.BlockSpec((KD, NPAD), lambda g: (0, 0)),
            pl.BlockSpec((1, NPAD), lambda g: (0, 0)),
        ],
        out_specs=pl.BlockSpec((BT, NPAD), lambda g: (g, 0)),
        compiler_params=pltpu.CompilerParams(
            dimension_semantics=("parallel",)),
    )(patches, prep["w1p"], prep["b1p"], prep["wc"], prep["bc"])
    return out[:B, :NLOGITS]


# ----------------------------- reference / init ----------------------------

def _reference_forward(x, params):
    hp = jax.lax.Precision.HIGHEST
    out = jax.lax.conv_general_dilated(
        x, params["w1"], window_strides=(2, 2), padding=((1, 1), (1, 1)),
        dimension_numbers=("NCHW", "OIHW", "NCHW"), precision=hp)
    out = out + params["b1"][None, :, None, None]
    out = jnp.where(out >= 0, out, 0.2 * out)
    out = jnp.max(jnp.stack([out[:, :, 0::2, 0::2], out[:, :, 0::2, 1::2],
                             out[:, :, 1::2, 0::2], out[:, :, 1::2, 1::2]]), axis=0)
    out = jax.lax.conv_general_dilated(
        out, params["w2"], window_strides=(2, 2), padding=((1, 1), (1, 1)),
        dimension_numbers=("NCHW", "OIHW", "NCHW"), precision=hp)
    out = out + params["b2"][None, :, None, None]
    flat = out.reshape(out.shape[0], -1)
    return jnp.matmul(flat, params["wd"].T, precision=hp) + params["bd"]


def init_params(key):
    ks = jax.random.split(key, 6)
    scale = 0.05
    return {
        "w1": scale * jax.random.normal(ks[0], (16, 3, 3, 3), jnp.float32),
        "b1": scale * jax.random.normal(ks[1], (16,), jnp.float32),
        "w2": scale * jax.random.normal(ks[2], (32, 16, 3, 3), jnp.float32),
        "b2": scale * jax.random.normal(ks[3], (32,), jnp.float32),
        "wd": scale * jax.random.normal(ks[4], (10, 4 * 4 * 32), jnp.float32),
        "bd": scale * jax.random.normal(ks[5], (10,), jnp.float32),
    }


if __name__ == "__main__":
    key = jax.random.PRNGKey(0)
    pkey, xkey = jax.random.split(key)
    params = init_params(pkey)
    prep = prepare_params(params)
    # dense(4*4*32 -> 10) implies 32x32 CIFAR-style input
    x = jax.random.normal(xkey, (2, 3, 32, 32), jnp.float32)

    logits = jax.jit(student_forward)(x, prep)
    jax.block_until_ready(logits)
    assert logits.shape == (2, NLOGITS) and logits.dtype == jnp.float32

    ref = _reference_forward(x, params)
    assert jnp.allclose(logits, ref, atol=2e-3, rtol=2e-2), (
        "mismatch vs plain-JAX reference")
    print("KERNEL_OK")
</pallas_src>

<mosaic_0001>
module attributes {stable_mosaic.version = 11 : i64} {
  func.func @_student_kernel(%arg0: i32, %arg1: memref<8x256x32xf32, #tpu.memory_space<vmem>>, %arg2: memref<32x16xf32, #tpu.memory_space<vmem>>, %arg3: memref<1x16xf32, #tpu.memory_space<vmem>>, %arg4: memref<1024x128xf32, #tpu.memory_space<vmem>>, %arg5: memref<1x128xf32, #tpu.memory_space<vmem>>, %arg6: memref<8x128xf32, #tpu.memory_space<vmem>>) attributes {dimension_semantics = [#tpu.dimension_semantics<parallel>], iteration_bounds = array<i64: 1>, scalar_prefetch = 0 : i64, scratch_operands = 0 : i64, tpu.core_type = #tpu.core_type<tc>, window_params = [{transform_indices = @transform_0, window_bounds = array<i64: 8, 256, 32>}, {pipeline_mode = #tpu.pipeline_mode<synchronous>, transform_indices = @transform_1, window_bounds = array<i64: 32, 16>}, {pipeline_mode = #tpu.pipeline_mode<synchronous>, transform_indices = @transform_2, window_bounds = array<i64: 1, 16>}, {pipeline_mode = #tpu.pipeline_mode<synchronous>, transform_indices = @transform_3, window_bounds = array<i64: 1024, 128>}, {pipeline_mode = #tpu.pipeline_mode<synchronous>, transform_indices = @transform_4, window_bounds = array<i64: 1, 128>}, {transform_indices = @transform_5, window_bounds = array<i64: 8, 128>}]} {
    %c0 = arith.constant 0 : index
    %c0_0 = arith.constant 0 : index
    %c0_1 = arith.constant 0 : index
    %0 = vector.load %arg1[%c0, %c0_0, %c0_1] : memref<8x256x32xf32, #tpu.memory_space<vmem>>, vector<8x256x32xf32>
    %1 = vector.shape_cast %0 : vector<8x256x32xf32> to vector<2048x32xf32>
    %c0_2 = arith.constant 0 : index
    %c0_3 = arith.constant 0 : index
    %2 = vector.load %arg2[%c0_2, %c0_3] : memref<32x16xf32, #tpu.memory_space<vmem>>, vector<32x16xf32>
    %cst = arith.constant dense<0.000000e+00> : vector<2048x16xf32>
    %3 = tpu.matmul %1, %2, %cst {dimension_numbers = #tpu.dot_dimension_numbers<[1], [0], [0], [1], [0, 0, 1, 1], [], []>} : vector<2048x32xf32>, vector<32x16xf32>, vector<2048x16xf32> -> vector<2048x16xf32>
    %c0_4 = arith.constant 0 : index
    %c0_5 = arith.constant 0 : index
    %4 = vector.load %arg3[%c0_4, %c0_5] : memref<1x16xf32, #tpu.memory_space<vmem>>, vector<1x16xf32>
    %5 = vector.broadcast %4 : vector<1x16xf32> to vector<2048x16xf32>
    %6 = arith.addf %3, %5 : vector<2048x16xf32>
    %cst_6 = arith.constant 2.000000e-01 : f32
    %7 = vector.broadcast %cst_6 : f32 to vector<2048x16xf32>
    %8 = arith.mulf %7, %6 : vector<2048x16xf32>
    %9 = arith.maximumf %6, %8 : vector<2048x16xf32>
    %10 = vector.shape_cast %9 : vector<2048x16xf32> to vector<8x4x64x16xf32>
    %cst_7 = arith.constant dense<0xFF800000> : vector<8x64x16xf32>
    %11 = vector.multi_reduction <maximumf>, %10, %cst_7 [1] : vector<8x4x64x16xf32> to vector<8x64x16xf32>
    %12 = vector.shape_cast %11 : vector<8x64x16xf32> to vector<8x1024xf32>
    %c0_8 = arith.constant 0 : index
    %c0_9 = arith.constant 0 : index
    %13 = vector.load %arg4[%c0_8, %c0_9] : memref<1024x128xf32, #tpu.memory_space<vmem>>, vector<1024x128xf32>
    %cst_10 = arith.constant dense<0.000000e+00> : vector<8x128xf32>
    %14 = tpu.matmul %12, %13, %cst_10 {dimension_numbers = #tpu.dot_dimension_numbers<[1], [0], [0], [1], [0, 0, 1, 1], [], []>} : vector<8x1024xf32>, vector<1024x128xf32>, vector<8x128xf32> -> vector<8x128xf32>
    %c0_11 = arith.constant 0 : index
    %c0_12 = arith.constant 0 : index
    %15 = vector.load %arg5[%c0_11, %c0_12] : memref<1x128xf32, #tpu.memory_space<vmem>>, vector<1x128xf32>
    %16 = vector.broadcast %15 : vector<1x128xf32> to vector<8x128xf32>
    %17 = arith.addf %14, %16 : vector<8x128xf32>
    %c0_13 = arith.constant 0 : index
    %c0_14 = arith.constant 0 : index
    %18 = vector.load %arg6[%c0_13, %c0_14] : memref<8x128xf32, #tpu.memory_space<vmem>>, vector<8x128xf32>
    tpu.vector_store %arg6[%c0_13, %c0_14], %17 {strides = array<i32>} : memref<8x128xf32, #tpu.memory_space<vmem>>, vector<8x128xf32>,
    return
  }
  func.func @transform_0(%arg0: i32) -> (i32, i32, i32) {
    %c0_i32 = arith.constant 0 : i32
    %c0_i32_0 = arith.constant 0 : i32
    %c0_i32_1 = arith.constant 0 : i32
    return %arg0, %c0_i32, %c0_i32_0 : i32, i32, i32
  }
  func.func @transform_1(%arg0: i32) -> (i32, i32) {
    %c0_i32 = arith.constant 0 : i32
    %c0_i32_0 = arith.constant 0 : i32
    %c0_i32_1 = arith.constant 0 : i32
    return %c0_i32, %c0_i32_0 : i32, i32
  }
  func.func @transform_2(%arg0: i32) -> (i32, i32) {
    %c0_i32 = arith.constant 0 : i32
    %c0_i32_0 = arith.constant 0 : i32
    %c0_i32_1 = arith.constant 0 : i32
    return %c0_i32, %c0_i32_0 : i32, i32
  }
  func.func @transform_3(%arg0: i32) -> (i32, i32) {
    %c0_i32 = arith.constant 0 : i32
    %c0_i32_0 = arith.constant 0 : i32
    %c0_i32_1 = arith.constant 0 : i32
    return %c0_i32, %c0_i32_0 : i32, i32
  }
  func.func @transform_4(%arg0: i32) -> (i32, i32) {
    %c0_i32 = arith.constant 0 : i32
    %c0_i32_0 = arith.constant 0 : i32
    %c0_i32_1 = arith.constant 0 : i32
    return %c0_i32, %c0_i32_0 : i32, i32
  }
  func.func @transform_5(%arg0: i32) -> (i32, i32) {
    %c0_i32 = arith.constant 0 : i32
    %c0_i32_0 = arith.constant 0 : i32
    return %arg0, %c0_i32 : i32, i32
  }
}

</mosaic_0001>

<llo_original>
// kernel: student_forward.1
$region0: #{student_forward.1}
  #allocation0 [shape = 'u32[]', space=smem, size = 0x4, offset = 0x4, fixed_abs, tag = 'smem constant byte address 0x4 - core index']
  #allocation1 [shape = 'u32[144,128]{1,0:T(1,128)}', space=vmem, size = 0x12000, scoped, tag = 'internal scratch']
  %s0 = inlined_call_operand.vmem [shape: f32[8,256,32], index: 0, kind: input, shape index: {}]
  %s1 = inlined_call_operand.vmem [shape: f32[32,16], index: 1, kind: input, shape index: {}]
  %s2 = inlined_call_operand.vmem [shape: f32[1,16], index: 2, kind: input, shape index: {}]
  %s3 = inlined_call_operand.vmem [shape: f32[1024,128], index: 3, kind: input, shape index: {}]
  %s4 = inlined_call_operand.vmem [shape: f32[1,128], index: 4, kind: input, shape index: {}]
  %s5 = inlined_call_operand.vmem [shape: f32[8,128], index: 5, kind: output, shape index: {}]
  %s6 = sld [smem:[#allocation0]]
  $region30: #{student_forward.1} parent=0
    _
  %s8 = ssub.s32 1, %s6
  %s9 = scalar_select 0, %s8, %s6
  // Predicated region
  $region2: #{student_forward.1} parent=0 // pred_check
    _
  $region3: #{student_forward.1} parent=0 // pred_check_branch
    %11 = sbr.rel (0) target = $region5
  $region4: #{student_forward.1} parent=0 // pred_region
    _
  $region5: #{student_forward.1} parent=0 // pred_fallthru
    _
  // Predicated region
  $region6: #{student_forward.1} parent=0 // pred_check
    _
  $region7: #{student_forward.1} parent=0 // pred_check_branch
    %13 = sbr.rel (0) target = $region9
  $region8: #{student_forward.1} parent=0 // pred_region
    _
  $region9: #{student_forward.1} parent=0 // pred_fallthru
    _
  // Predicated region
  $region10: #{student_forward.1} parent=0 // pred_check
    _
  $region11: #{student_forward.1} parent=0 // pred_check_branch
    %15 = sbr.rel (0) target = $region13
  $region12: #{student_forward.1} parent=0 // pred_region
    _
  $region13: #{student_forward.1} parent=0 // pred_fallthru
    _
  // Predicated region
  $region14: #{student_forward.1} parent=0 // pred_check
    _
  $region15: #{student_forward.1} parent=0 // pred_check_branch
    %17 = sbr.rel (0) target = $region17
  $region16: #{student_forward.1} parent=0 // pred_region
    _
  $region17: #{student_forward.1} parent=0 // pred_fallthru
    _
  // Predicated region
  $region18: #{student_forward.1} parent=0 // pred_check
    _
  $region19: #{student_forward.1} parent=0 // pred_check_branch
    %19 = sbr.rel (0) target = $region21
  $region20: #{student_forward.1} parent=0 // pred_region
    _
  $region21: #{student_forward.1} parent=0 // pred_fallthru
    _
  %v20 = vld [vmem:[%s0] sm:$0xff]
  %v21 = vld [vmem:[%s0 + $0x8] sm:$0xff]
  %v22 = vld [vmem:[%s0 + $0x10] sm:$0xff]
  %v23 = vld [vmem:[%s0 + $0x18] sm:$0xff]
  %v24 = vld [vmem:[%s0 + $0x20] sm:$0xff]
  %v25 = vld [vmem:[%s0 + $0x28] sm:$0xff]
  %v26 = vld [vmem:[%s0 + $0x30] sm:$0xff]
  %v27 = vld [vmem:[%s0 + $0x38] sm:$0xff]
  %v28 = vld [vmem:[%s0 + $0x40] sm:$0xff]
  %v29 = vld [vmem:[%s0 + $0x48] sm:$0xff]
  %v30 = vld [vmem:[%s0 + $0x50] sm:$0xff]
  %v31 = vld [vmem:[%s0 + $0x58] sm:$0xff]
  %v32 = vld [vmem:[%s0 + $0x60] sm:$0xff]
  %v33 = vld [vmem:[%s0 + $0x68] sm:$0xff]
  %v34 = vld [vmem:[%s0 + $0x70] sm:$0xff]
  %v35 = vld [vmem:[%s0 + $0x78] sm:$0xff]
  %v36 = vld [vmem:[%s0 + $0x80] sm:$0xff]
  %v37 = vld [vmem:[%s0 + $0x88] sm:$0xff]
  %v38 = vld [vmem:[%s0 + $0x90] sm:$0xff]
  %v39 = vld [vmem:[%s0 + $0x98] sm:$0xff]
  %v40 = vld [vmem:[%s0 + $0xa0] sm:$0xff]
  %v41 = vld [vmem:[%s0 + $0xa8] sm:$0xff]
  %v42 = vld [vmem:[%s0 + $0xb0] sm:$0xff]
  %v43 = vld [vmem:[%s0 + $0xb8] sm:$0xff]
  %v44 = vld [vmem:[%s0 + $0xc0] sm:$0xff]
  %v45 = vld [vmem:[%s0 + $0xc8] sm:$0xff]
  %v46 = vld [vmem:[%s0 + $0xd0] sm:$0xff]
  %v47 = vld [vmem:[%s0 + $0xd8] sm:$0xff]
  %v48 = vld [vmem:[%s0 + $0xe0] sm:$0xff]
  %v49 = vld [vmem:[%s0 + $0xe8] sm:$0xff]
  %v50 = vld [vmem:[%s0 + $0xf0] sm:$0xff]
  %v51 = vld [vmem:[%s0 + $0xf8] sm:$0xff]
  %v52 = vld [vmem:[%s0 + $0x100] sm:$0xff]
  %v53 = vld [vmem:[%s0 + $0x108] sm:$0xff]
  %v54 = vld [vmem:[%s0 + $0x110] sm:$0xff]
  %v55 = vld [vmem:[%s0 + $0x118] sm:$0xff]
  %v56 = vld [vmem:[%s0 + $0x120] sm:$0xff]
  %v57 = vld [vmem:[%s0 + $0x128] sm:$0xff]
  %v58 = vld [vmem:[%s0 + $0x130] sm:$0xff]
  %v59 = vld [vmem:[%s0 + $0x138] sm:$0xff]
  %v60 = vld [vmem:[%s0 + $0x140] sm:$0xff]
  %v61 = vld [vmem:[%s0 + $0x148] sm:$0xff]
  %v62 = vld [vmem:[%s0 + $0x150] sm:$0xff]
  %v63 = vld [vmem:[%s0 + $0x158] sm:$0xff]
  %v64 = vld [vmem:[%s0 + $0x160] sm:$0xff]
  %v65 = vld [vmem:[%s0 + $0x168] sm:$0xff]
  %v66 = vld [vmem:[%s0 + $0x170] sm:$0xff]
  %v67 = vld [vmem:[%s0 + $0x178] sm:$0xff]
  %v68 = vld [vmem:[%s0 + $0x180] sm:$0xff]
  %v69 = vld [vmem:[%s0 + $0x188] sm:$0xff]
  %v70 = vld [vmem:[%s0 + $0x190] sm:$0xff]
  %v71 = vld [vmem:[%s0 + $0x198] sm:$0xff]
  %v72 = vld [vmem:[%s0 + $0x1a0] sm:$0xff]
  %v73 = vld [vmem:[%s0 + $0x1a8] sm:$0xff]
  %v74 = vld [vmem:[%s0 + $0x1b0] sm:$0xff]
  %v75 = vld [vmem:[%s0 + $0x1b8] sm:$0xff]
  %v76 = vld [vmem:[%s0 + $0x1c0] sm:$0xff]
  %v77 = vld [vmem:[%s0 + $0x1c8] sm:$0xff]
  %v78 = vld [vmem:[%s0 + $0x1d0] sm:$0xff]
  %v79 = vld [vmem:[%s0 + $0x1d8] sm:$0xff]
  %v80 = vld [vmem:[%s0 + $0x1e0] sm:$0xff]
  %v81 = vld [vmem:[%s0 + $0x1e8] sm:$0xff]
  %v82 = vld [vmem:[%s0 + $0x1f0] sm:$0xff]
  %v83 = vld [vmem:[%s0 + $0x1f8] sm:$0xff]
  %v84 = vld [vmem:[%s0 + $0x200] sm:$0xff]
  %v85 = vld [vmem:[%s0 + $0x208] sm:$0xff]
  %v86 = vld [vmem:[%s0 + $0x210] sm:$0xff]
  %v87 = vld [vmem:[%s0 + $0x218] sm:$0xff]
  %v88 = vld [vmem:[%s0 + $0x220] sm:$0xff]
  %v89 = vld [vmem:[%s0 + $0x228] sm:$0xff]
  %v90 = vld [vmem:[%s0 + $0x230] sm:$0xff]
  %v91 = vld [vmem:[%s0 + $0x238] sm:$0xff]
  %v92 = vld [vmem:[%s0 + $0x240] sm:$0xff]
  %v93 = vld [vmem:[%s0 + $0x248] sm:$0xff]
  %v94 = vld [vmem:[%s0 + $0x250] sm:$0xff]
  %v95 = vld [vmem:[%s0 + $0x258] sm:$0xff]
  %v96 = vld [vmem:[%s0 + $0x260] sm:$0xff]
  %v97 = vld [vmem:[%s0 + $0x268] sm:$0xff]
  %v98 = vld [vmem:[%s0 + $0x270] sm:$0xff]
  %v99 = vld [vmem:[%s0 + $0x278] sm:$0xff]
  %v100 = vld [vmem:[%s0 + $0x280] sm:$0xff]
  %v101 = vld [vmem:[%s0 + $0x288] sm:$0xff]
  %v102 = vld [vmem:[%s0 + $0x290] sm:$0xff]
  %v103 = vld [vmem:[%s0 + $0x298] sm:$0xff]
  %v104 = vld [vmem:[%s0 + $0x2a0] sm:$0xff]
  %v105 = vld [vmem:[%s0 + $0x2a8] sm:$0xff]
  %v106 = vld [vmem:[%s0 + $0x2b0] sm:$0xff]
  %v107 = vld [vmem:[%s0 + $0x2b8] sm:$0xff]
  %v108 = vld [vmem:[%s0 + $0x2c0] sm:$0xff]
  %v109 = vld [vmem:[%s0 + $0x2c8] sm:$0xff]
  %v110 = vld [vmem:[%s0 + $0x2d0] sm:$0xff]
  %v111 = vld [vmem:[%s0 + $0x2d8] sm:$0xff]
  %v112 = vld [vmem:[%s0 + $0x2e0] sm:$0xff]
  %v113 = vld [vmem:[%s0 + $0x2e8] sm:$0xff]
  %v114 = vld [vmem:[%s0 + $0x2f0] sm:$0xff]
  %v115 = vld [vmem:[%s0 + $0x2f8] sm:$0xff]
  %v116 = vld [vmem:[%s0 + $0x300] sm:$0xff]
  %v117 = vld [vmem:[%s0 + $0x308] sm:$0xff]
  %v118 = vld [vmem:[%s0 + $0x310] sm:$0xff]
  %v119 = vld [vmem:[%s0 + $0x318] sm:$0xff]
  %v120 = vld [vmem:[%s0 + $0x320] sm:$0xff]
  %v121 = vld [vmem:[%s0 + $0x328] sm:$0xff]
  %v122 = vld [vmem:[%s0 + $0x330] sm:$0xff]
  %v123 = vld [vmem:[%s0 + $0x338] sm:$0xff]
  %v124 = vld [vmem:[%s0 + $0x340] sm:$0xff]
  %v125 = vld [vmem:[%s0 + $0x348] sm:$0xff]
  %v126 = vld [vmem:[%s0 + $0x350] sm:$0xff]
  %v127 = vld [vmem:[%s0 + $0x358] sm:$0xff]
  %v128 = vld [vmem:[%s0 + $0x360] sm:$0xff]
  %v129 = vld [vmem:[%s0 + $0x368] sm:$0xff]
  %v130 = vld [vmem:[%s0 + $0x370] sm:$0xff]
  %v131 = vld [vmem:[%s0 + $0x378] sm:$0xff]
  %v132 = vld [vmem:[%s0 + $0x380] sm:$0xff]
  %v133 = vld [vmem:[%s0 + $0x388] sm:$0xff]
  %v134 = vld [vmem:[%s0 + $0x390] sm:$0xff]
  %v135 = vld [vmem:[%s0 + $0x398] sm:$0xff]
  %v136 = vld [vmem:[%s0 + $0x3a0] sm:$0xff]
  %v137 = vld [vmem:[%s0 + $0x3a8] sm:$0xff]
  %v138 = vld [vmem:[%s0 + $0x3b0] sm:$0xff]
  %v139 = vld [vmem:[%s0 + $0x3b8] sm:$0xff]
  %v140 = vld [vmem:[%s0 + $0x3c0] sm:$0xff]
  %v141 = vld [vmem:[%s0 + $0x3c8] sm:$0xff]
  %v142 = vld [vmem:[%s0 + $0x3d0] sm:$0xff]
  %v143 = vld [vmem:[%s0 + $0x3d8] sm:$0xff]
  %v144 = vld [vmem:[%s0 + $0x3e0] sm:$0xff]
  %v145 = vld [vmem:[%s0 + $0x3e8] sm:$0xff]
  %v146 = vld [vmem:[%s0 + $0x3f0] sm:$0xff]
  %v147 = vld [vmem:[%s0 + $0x3f8] sm:$0xff]
  %v148 = vld [vmem:[%s0 + $0x400] sm:$0xff]
  %v149 = vld [vmem:[%s0 + $0x408] sm:$0xff]
  %v150 = vld [vmem:[%s0 + $0x410] sm:$0xff]
  %v151 = vld [vmem:[%s0 + $0x418] sm:$0xff]
  %v152 = vld [vmem:[%s0 + $0x420] sm:$0xff]
  %v153 = vld [vmem:[%s0 + $0x428] sm:$0xff]
  %v154 = vld [vmem:[%s0 + $0x430] sm:$0xff]
  %v155 = vld [vmem:[%s0 + $0x438] sm:$0xff]
  %v156 = vld [vmem:[%s0 + $0x440] sm:$0xff]
  %v157 = vld [vmem:[%s0 + $0x448] sm:$0xff]
  %v158 = vld [vmem:[%s0 + $0x450] sm:$0xff]
  %v159 = vld [vmem:[%s0 + $0x458] sm:$0xff]
  %v160 = vld [vmem:[%s0 + $0x460] sm:$0xff]
  %v161 = vld [vmem:[%s0 + $0x468] sm:$0xff]
  %v162 = vld [vmem:[%s0 + $0x470] sm:$0xff]
  %v163 = vld [vmem:[%s0 + $0x478] sm:$0xff]
  %v164 = vld [vmem:[%s0 + $0x480] sm:$0xff]
  %v165 = vld [vmem:[%s0 + $0x488] sm:$0xff]
  %v166 = vld [vmem:[%s0 + $0x490] sm:$0xff]
  %v167 = vld [vmem:[%s0 + $0x498] sm:$0xff]
  %v168 = vld [vmem:[%s0 + $0x4a0] sm:$0xff]
  %v169 = vld [vmem:[%s0 + $0x4a8] sm:$0xff]
  %v170 = vld [vmem:[%s0 + $0x4b0] sm:$0xff]
  %v171 = vld [vmem:[%s0 + $0x4b8] sm:$0xff]
  %v172 = vld [vmem:[%s0 + $0x4c0] sm:$0xff]
  %v173 = vld [vmem:[%s0 + $0x4c8] sm:$0xff]
  %v174 = vld [vmem:[%s0 + $0x4d0] sm:$0xff]
  %v175 = vld [vmem:[%s0 + $0x4d8] sm:$0xff]
  %v176 = vld [vmem:[%s0 + $0x4e0] sm:$0xff]
  %v177 = vld [vmem:[%s0 + $0x4e8] sm:$0xff]
  %v178 = vld [vmem:[%s0 + $0x4f0] sm:$0xff]
  %v179 = vld [vmem:[%s0 + $0x4f8] sm:$0xff]
  %v180 = vld [vmem:[%s0 + $0x500] sm:$0xff]
  %v181 = vld [vmem:[%s0 + $0x508] sm:$0xff]
  %v182 = vld [vmem:[%s0 + $0x510] sm:$0xff]
  %v183 = vld [vmem:[%s0 + $0x518] sm:$0xff]
  %v184 = vld [vmem:[%s0 + $0x520] sm:$0xff]
  %v185 = vld [vmem:[%s0 + $0x528] sm:$0xff]
  %v186 = vld [vmem:[%s0 + $0x530] sm:$0xff]
  %v187 = vld [vmem:[%s0 + $0x538] sm:$0xff]
  %v188 = vld [vmem:[%s0 + $0x540] sm:$0xff]
  %v189 = vld [vmem:[%s0 + $0x548] sm:$0xff]
  %v190 = vld [vmem:[%s0 + $0x550] sm:$0xff]
  %v191 = vld [vmem:[%s0 + $0x558] sm:$0xff]
  %v192 = vld [vmem:[%s0 + $0x560] sm:$0xff]
  %v193 = vld [vmem:[%s0 + $0x568] sm:$0xff]
  %v194 = vld [vmem:[%s0 + $0x570] sm:$0xff]
  %v195 = vld [vmem:[%s0 + $0x578] sm:$0xff]
  %v196 = vld [vmem:[%s0 + $0x580] sm:$0xff]
  %v197 = vld [vmem:[%s0 + $0x588] sm:$0xff]
  %v198 = vld [vmem:[%s0 + $0x590] sm:$0xff]
  %v199 = vld [vmem:[%s0 + $0x598] sm:$0xff]
  %v200 = vld [vmem:[%s0 + $0x5a0] sm:$0xff]
  %v201 = vld [vmem:[%s0 + $0x5a8] sm:$0xff]
  %v202 = vld [vmem:[%s0 + $0x5b0] sm:$0xff]
  %v203 = vld [vmem:[%s0 + $0x5b8] sm:$0xff]
  %v204 = vld [vmem:[%s0 + $0x5c0] sm:$0xff]
  %v205 = vld [vmem:[%s0 + $0x5c8] sm:$0xff]
  %v206 = vld [vmem:[%s0 + $0x5d0] sm:$0xff]
  %v207 = vld [vmem:[%s0 + $0x5d8] sm:$0xff]
  %v208 = vld [vmem:[%s0 + $0x5e0] sm:$0xff]
  %v209 = vld [vmem:[%s0 + $0x5e8] sm:$0xff]
  %v210 = vld [vmem:[%s0 + $0x5f0] sm:$0xff]
  %v211 = vld [vmem:[%s0 + $0x5f8] sm:$0xff]
  %v212 = vld [vmem:[%s0 + $0x600] sm:$0xff]
  %v213 = vld [vmem:[%s0 + $0x608] sm:$0xff]
  %v214 = vld [vmem:[%s0 + $0x610] sm:$0xff]
  %v215 = vld [vmem:[%s0 + $0x618] sm:$0xff]
  %v216 = vld [vmem:[%s0 + $0x620] sm:$0xff]
  %v217 = vld [vmem:[%s0 + $0x628] sm:$0xff]
  %v218 = vld [vmem:[%s0 + $0x630] sm:$0xff]
  %v219 = vld [vmem:[%s0 + $0x638] sm:$0xff]
  %v220 = vld [vmem:[%s0 + $0x640] sm:$0xff]
  %v221 = vld [vmem:[%s0 + $0x648] sm:$0xff]
  %v222 = vld [vmem:[%s0 + $0x650] sm:$0xff]
  %v223 = vld [vmem:[%s0 + $0x658] sm:$0xff]
  %v224 = vld [vmem:[%s0 + $0x660] sm:$0xff]
  %v225 = vld [vmem:[%s0 + $0x668] sm:$0xff]
  %v226 = vld [vmem:[%s0 + $0x670] sm:$0xff]
  %v227 = vld [vmem:[%s0 + $0x678] sm:$0xff]
  %v228 = vld [vmem:[%s0 + $0x680] sm:$0xff]
  %v229 = vld [vmem:[%s0 + $0x688] sm:$0xff]
  %v230 = vld [vmem:[%s0 + $0x690] sm:$0xff]
  %v231 = vld [vmem:[%s0 + $0x698] sm:$0xff]
  %v232 = vld [vmem:[%s0 + $0x6a0] sm:$0xff]
  %v233 = vld [vmem:[%s0 + $0x6a8] sm:$0xff]
  %v234 = vld [vmem:[%s0 + $0x6b0] sm:$0xff]
  %v235 = vld [vmem:[%s0 + $0x6b8] sm:$0xff]
  %v236 = vld [vmem:[%s0 + $0x6c0] sm:$0xff]
  %v237 = vld [vmem:[%s0 + $0x6c8] sm:$0xff]
  %v238 = vld [vmem:[%s0 + $0x6d0] sm:$0xff]
  %v239 = vld [vmem:[%s0 + $0x6d8] sm:$0xff]
  %v240 = vld [vmem:[%s0 + $0x6e0] sm:$0xff]
  %v241 = vld [vmem:[%s0 + $0x6e8] sm:$0xff]
  %v242 = vld [vmem:[%s0 + $0x6f0] sm:$0xff]
  %v243 = vld [vmem:[%s0 + $0x6f8] sm:$0xff]
  %v244 = vld [vmem:[%s0 + $0x700] sm:$0xff]
  %v245 = vld [vmem:[%s0 + $0x708] sm:$0xff]
  %v246 = vld [vmem:[%s0 + $0x710] sm:$0xff]
  %v247 = vld [vmem:[%s0 + $0x718] sm:$0xff]
  %v248 = vld [vmem:[%s0 + $0x720] sm:$0xff]
  %v249 = vld [vmem:[%s0 + $0x728] sm:$0xff]
  %v250 = vld [vmem:[%s0 + $0x730] sm:$0xff]
  %v251 = vld [vmem:[%s0 + $0x738] sm:$0xff]
  %v252 = vld [vmem:[%s0 + $0x740] sm:$0xff]
  %v253 = vld [vmem:[%s0 + $0x748] sm:$0xff]
  %v254 = vld [vmem:[%s0 + $0x750] sm:$0xff]
  %v255 = vld [vmem:[%s0 + $0x758] sm:$0xff]
  %v256 = vld [vmem:[%s0 + $0x760] sm:$0xff]
  %v257 = vld [vmem:[%s0 + $0x768] sm:$0xff]
  %v258 = vld [vmem:[%s0 + $0x770] sm:$0xff]
  %v259 = vld [vmem:[%s0 + $0x778] sm:$0xff]
  %v260 = vld [vmem:[%s0 + $0x780] sm:$0xff]
  %v261 = vld [vmem:[%s0 + $0x788] sm:$0xff]
  %v262 = vld [vmem:[%s0 + $0x790] sm:$0xff]
  %v263 = vld [vmem:[%s0 + $0x798] sm:$0xff]
  %v264 = vld [vmem:[%s0 + $0x7a0] sm:$0xff]
  %v265 = vld [vmem:[%s0 + $0x7a8] sm:$0xff]
  %v266 = vld [vmem:[%s0 + $0x7b0] sm:$0xff]
  %v267 = vld [vmem:[%s0 + $0x7b8] sm:$0xff]
  %v268 = vld [vmem:[%s0 + $0x7c0] sm:$0xff]
  %v269 = vld [vmem:[%s0 + $0x7c8] sm:$0xff]
  %v270 = vld [vmem:[%s0 + $0x7d0] sm:$0xff]
  %v271 = vld [vmem:[%s0 + $0x7d8] sm:$0xff]
  %v272 = vld [vmem:[%s0 + $0x7e0] sm:$0xff]
  %v273 = vld [vmem:[%s0 + $0x7e8] sm:$0xff]
  %v274 = vld [vmem:[%s0 + $0x7f0] sm:$0xff]
  %v275 = vld [vmem:[%s0 + $0x7f8] sm:$0xff]
  %v276 = vld [vmem:[%s1] sm:$0xff]
  %v277 = vld [vmem:[%s1 + $0x8] sm:$0xff]
  %v278 = vld [vmem:[%s1 + $0x10] sm:$0xff]
  %v279 = vld [vmem:[%s1 + $0x18] sm:$0xff]
  %v280 = vld [vmem:[%s2] sm:$0x1]
  %v282 = vlaneseq
  %v283 = vshrl.u32 %v282, 7
  %v284 = vsub.s32 0, %v283
  %v285 = vrot.slane %v280, %v284
  %vm287 = vcmask 261120
  %v289 = vsel %vm287, %v20, 0
  %v292 = vsel %vm287, %v21, 0
  %v295 = vsel %vm287, %v22, 0
  %v298 = vsel %vm287, %v23, 0
  %v301 = vsel %vm287, %v24, 0
  %v304 = vsel %vm287, %v25, 0
  %v307 = vsel %vm287, %v26, 0
  %v310 = vsel %vm287, %v27, 0
  %v313 = vsel %vm287, %v28, 0
  %v316 = vsel %vm287, %v29, 0
  %v319 = vsel %vm287, %v30, 0
  %v322 = vsel %vm287, %v31, 0
  %v325 = vsel %vm287, %v32, 0
  %v328 = vsel %vm287, %v33, 0
  %v331 = vsel %vm287, %v34, 0
  %v334 = vsel %vm287, %v35, 0
  %v337 = vsel %vm287, %v36, 0
  %v340 = vsel %vm287, %v37, 0
  %v343 = vsel %vm287, %v38, 0
  %v346 = vsel %vm287, %v39, 0
  %v349 = vsel %vm287, %v40, 0
  %v352 = vsel %vm287, %v41, 0
  %v355 = vsel %vm287, %v42, 0
  %v358 = vsel %vm287, %v43, 0
  %v361 = vsel %vm287, %v44, 0
  %v364 = vsel %vm287, %v45, 0
  %v367 = vsel %vm287, %v46, 0
  %v370 = vsel %vm287, %v47, 0
  %v373 = vsel %vm287, %v48, 0
  %v376 = vsel %vm287, %v49, 0
  %v379 = vsel %vm287, %v50, 0
  %v382 = vsel %vm287, %v51, 0
  %v385 = vsel %vm287, %v52, 0
  %v388 = vsel %vm287, %v53, 0
  %v391 = vsel %vm287, %v54, 0
  %v394 = vsel %vm287, %v55, 0
  %v397 = vsel %vm287, %v56, 0
  %v400 = vsel %vm287, %v57, 0
  %v403 = vsel %vm287, %v58, 0
  %v406 = vsel %vm287, %v59, 0
  %v409 = vsel %vm287, %v60, 0
  %v412 = vsel %vm287, %v61, 0
  %v415 = vsel %vm287, %v62, 0
  %v418 = vsel %vm287, %v63, 0
  %v421 = vsel %vm287, %v64, 0
  %v424 = vsel %vm287, %v65, 0
  %v427 = vsel %vm287, %v66, 0
  %v430 = vsel %vm287, %v67, 0
  %v433 = vsel %vm287, %v68, 0
  %v436 = vsel %vm287, %v69, 0
  %v439 = vsel %vm287, %v70, 0
  %v442 = vsel %vm287, %v71, 0
  %v445 = vsel %vm287, %v72, 0
  %v448 = vsel %vm287, %v73, 0
  %v451 = vsel %vm287, %v74, 0
  %v454 = vsel %vm287, %v75, 0
  %v457 = vsel %vm287, %v76, 0
  %v460 = vsel %vm287, %v77, 0
  %v463 = vsel %vm287, %v78, 0
  %v466 = vsel %vm287, %v79, 0
  %v469 = vsel %vm287, %v80, 0
  %v472 = vsel %vm287, %v81, 0
  %v475 = vsel %vm287, %v82, 0
  %v478 = vsel %vm287, %v83, 0
  %v481 = vsel %vm287, %v84, 0
  %v484 = vsel %vm287, %v85, 0
  %v487 = vsel %vm287, %v86, 0
  %v490 = vsel %vm287, %v87, 0
  %v493 = vsel %vm287, %v88, 0
  %v496 = vsel %vm287, %v89, 0
  %v499 = vsel %vm287, %v90, 0
  %v502 = vsel %vm287, %v91, 0
  %v505 = vsel %vm287, %v92, 0
  %v508 = vsel %vm287, %v93, 0
  %v511 = vsel %vm287, %v94, 0
  %v514 = vsel %vm287, %v95, 0
  %v517 = vsel %vm287, %v96, 0
  %v520 = vsel %vm287, %v97, 0
  %v523 = vsel %vm287, %v98, 0
  %v526 = vsel %vm287, %v99, 0
  %v529 = vsel %vm287, %v100, 0
  %v532 = vsel %vm287, %v101, 0
  %v535 = vsel %vm287, %v102, 0
  %v538 = vsel %vm287, %v103, 0
  %v541 = vsel %vm287, %v104, 0
  %v544 = vsel %vm287, %v105, 0
  %v547 = vsel %vm287, %v106, 0
  %v550 = vsel %vm287, %v107, 0
  %v553 = vsel %vm287, %v108, 0
  %v556 = vsel %vm287, %v109, 0
  %v559 = vsel %vm287, %v110, 0
  %v562 = vsel %vm287, %v111, 0
  %v565 = vsel %vm287, %v112, 0
  %v568 = vsel %vm287, %v113, 0
  %v571 = vsel %vm287, %v114, 0
  %v574 = vsel %vm287, %v115, 0
  %v577 = vsel %vm287, %v116, 0
  %v580 = vsel %vm287, %v117, 0
  %v583 = vsel %vm287, %v118, 0
  %v586 = vsel %vm287, %v119, 0
  %v589 = vsel %vm287, %v120, 0
  %v592 = vsel %vm287, %v121, 0
  %v595 = vsel %vm287, %v122, 0
  %v598 = vsel %vm287, %v123, 0
  %v601 = vsel %vm287, %v124, 0
  %v604 = vsel %vm287, %v125, 0
  %v607 = vsel %vm287, %v126, 0
  %v610 = vsel %vm287, %v127, 0
  %v613 = vsel %vm287, %v128, 0
  %v616 = vsel %vm287, %v129, 0
  %v619 = vsel %vm287, %v130, 0
  %v622 = vsel %vm287, %v131, 0
  %v625 = vsel %vm287, %v132, 0
  %v628 = vsel %vm287, %v133, 0
  %v631 = vsel %vm287, %v134, 0
  %v634 = vsel %vm287, %v135, 0
  %v637 = vsel %vm287, %v136, 0
  %v640 = vsel %vm287, %v137, 0
  %v643 = vsel %vm287, %v138, 0
  %v646 = vsel %vm287, %v139, 0
  %v649 = vsel %vm287, %v140, 0
  %v652 = vsel %vm287, %v141, 0
  %v655 = vsel %vm287, %v142, 0
  %v658 = vsel %vm287, %v143, 0
  %v661 = vsel %vm287, %v144, 0
  %v664 = vsel %vm287, %v145, 0
  %v667 = vsel %vm287, %v146, 0
  %v670 = vsel %vm287, %v147, 0
  %v673 = vsel %vm287, %v148, 0
  %v676 = vsel %vm287, %v149, 0
  %v679 = vsel %vm287, %v150, 0
  %v682 = vsel %vm287, %v151, 0
  %v685 = vsel %vm287, %v152, 0
  %v688 = vsel %vm287, %v153, 0
  %v691 = vsel %vm287, %v154, 0
  %v694 = vsel %vm287, %v155, 0
  %v697 = vsel %vm287, %v156, 0
  %v700 = vsel %vm287, %v157, 0
  %v703 = vsel %vm287, %v158, 0
  %v706 = vsel %vm287, %v159, 0
  %v709 = vsel %vm287, %v160, 0
  %v712 = vsel %vm287, %v161, 0
  %v715 = vsel %vm287, %v162, 0
  %v718 = vsel %vm287, %v163, 0
  %v721 = vsel %vm287, %v164, 0
  %v724 = vsel %vm287, %v165, 0
  %v727 = vsel %vm287, %v166, 0
  %v730 = vsel %vm287, %v167, 0
  %v733 = vsel %vm287, %v168, 0
  %v736 = vsel %vm287, %v169, 0
  %v739 = vsel %vm287, %v170, 0
  %v742 = vsel %vm287, %v171, 0
  %v745 = vsel %vm287, %v172, 0
  %v748 = vsel %vm287, %v173, 0
  %v751 = vsel %vm287, %v174, 0
  %v754 = vsel %vm287, %v175, 0
  %v757 = vsel %vm287, %v176, 0
  %v760 = vsel %vm287, %v177, 0
  %v763 = vsel %vm287, %v178, 0
  %v766 = vsel %vm287, %v179, 0
  %v769 = vsel %vm287, %v180, 0
  %v772 = vsel %vm287, %v181, 0
  %v775 = vsel %vm287, %v182, 0
  %v778 = vsel %vm287, %v183, 0
  %v781 = vsel %vm287, %v184, 0
  %v784 = vsel %vm287, %v185, 0
  %v787 = vsel %vm287, %v186, 0
  %v790 = vsel %vm287, %v187, 0
  %v793 = vsel %vm287, %v188, 0
  %v796 = vsel %vm287, %v189, 0
  %v799 = vsel %vm287, %v190, 0
  %v802 = vsel %vm287, %v191, 0
  %v805 = vsel %vm287, %v192, 0
  %v808 = vsel %vm287, %v193, 0
  %v811 = vsel %vm287, %v194, 0
  %v814 = vsel %vm287, %v195, 0
  %v817 = vsel %vm287, %v196, 0
  %v820 = vsel %vm287, %v197, 0
  %v823 = vsel %vm287, %v198, 0
  %v826 = vsel %vm287, %v199, 0
  %v829 = vsel %vm287, %v200, 0
  %v832 = vsel %vm287, %v201, 0
  %v835 = vsel %vm287, %v202, 0
  %v838 = vsel %vm287, %v203, 0
  %v841 = vsel %vm287, %v204, 0
  %v844 = vsel %vm287, %v205, 0
  %v847 = vsel %vm287, %v206, 0
  %v850 = vsel %vm287, %v207, 0
  %v853 = vsel %vm287, %v208, 0
  %v856 = vsel %vm287, %v209, 0
  %v859 = vsel %vm287, %v210, 0
  %v862 = vsel %vm287, %v211, 0
  %v865 = vsel %vm287, %v212, 0
  %v868 = vsel %vm287, %v213, 0
  %v871 = vsel %vm287, %v214, 0
  %v874 = vsel %vm287, %v215, 0
  %v877 = vsel %vm287, %v216, 0
  %v880 = vsel %vm287, %v217, 0
  %v883 = vsel %vm287, %v218, 0
  %v886 = vsel %vm287, %v219, 0
  %v889 = vsel %vm287, %v220, 0
  %v892 = vsel %vm287, %v221, 0
  %v895 = vsel %vm287, %v222, 0
  %v898 = vsel %vm287, %v223, 0
  %v901 = vsel %vm287, %v224, 0
  %v904 = vsel %vm287, %v225, 0
  %v907 = vsel %vm287, %v226, 0
  %v910 = vsel %vm287, %v227, 0
  %v913 = vsel %vm287, %v228, 0
  %v916 = vsel %vm287, %v229, 0
  %v919 = vsel %vm287, %v230, 0
  %v922 = vsel %vm287, %v231, 0
  %v925 = vsel %vm287, %v232, 0
  %v928 = vsel %vm287, %v233, 0
  %v931 = vsel %vm287, %v234, 0
  %v934 = vsel %vm287, %v235, 0
  %v937 = vsel %vm287, %v236, 0
  %v940 = vsel %vm287, %v237, 0
  %v943 = vsel %vm287, %v238, 0
  %v946 = vsel %vm287, %v239, 0
  %v949 = vsel %vm287, %v240, 0
  %v952 = vsel %vm287, %v241, 0
  %v955 = vsel %vm287, %v242, 0
  %v958 = vsel %vm287, %v243, 0
  %v961 = vsel %vm287, %v244, 0
  %v964 = vsel %vm287, %v245, 0
  %v967 = vsel %vm287, %v246, 0
  %v970 = vsel %vm287, %v247, 0
  %v973 = vsel %vm287, %v248, 0
  %v976 = vsel %vm287, %v249, 0
  %v979 = vsel %vm287, %v250, 0
  %v982 = vsel %vm287, %v251, 0
  %v985 = vsel %vm287, %v252, 0
  %v988 = vsel %vm287, %v253, 0
  %v991 = vsel %vm287, %v254, 0
  %v994 = vsel %vm287, %v255, 0
  %v997 = vsel %vm287, %v256, 0
  %v1000 = vsel %vm287, %v257, 0
  %v1003 = vsel %vm287, %v258, 0
  %v1006 = vsel %vm287, %v259, 0
  %v1009 = vsel %vm287, %v260, 0
  %v1012 = vsel %vm287, %v261, 0
  %v1015 = vsel %vm287, %v262, 0
  %v1018 = vsel %vm287, %v263, 0
  %v1021 = vsel %vm287, %v264, 0
  %v1024 = vsel %vm287, %v265, 0
  %v1027 = vsel %vm287, %v266, 0
  %v1030 = vsel %vm287, %v267, 0
  %v1033 = vsel %vm287, %v268, 0
  %v1036 = vsel %vm287, %v269, 0
  %v1039 = vsel %vm287, %v270, 0
  %v1042 = vsel %vm287, %v271, 0
  %v1045 = vsel %vm287, %v272, 0
  %v1048 = vsel %vm287, %v273, 0
  %v1051 = vsel %vm287, %v274, 0
  %v1054 = vsel %vm287, %v275, 0
  %1056 = vmatprep.subr.mxu0 0.0
  %1057 = vmatpush1.msra.mxu0 %v276
  %1058 = vmatprep.subr.mxu0 0.0
  %1059 = vmatpush1.msra.mxu0 %v277
  %1060 = vmatprep.subr.mxu0 0.0
  %1061 = vmatpush1.msra.mxu0 %v278
  %1062 = vmatprep.subr.mxu0 0.0
  %1063 = vmatpush1.msra.mxu0 %v279
  %1064 = vmatprep.subr.mxu0 0.0
  %1065 = vmatpush1.msra.mxu0 0.0
  %1066 = vmatprep.subr.mxu0 0.0
  %1067 = vmatpush1.msra.mxu0 0.0
  %1068 = vmatprep.subr.mxu0 0.0
  %1069 = vmatpush1.msra.mxu0 0.0
  %1070 = vmatprep.subr.mxu0 0.0
  %1071 = vmatpush1.msra.mxu0 0.0
  %1072 = vmatprep.subr.mxu0 0.0
  %1073 = vmatpush1.msra.mxu0 0.0
  %1074 = vmatprep.subr.mxu0 0.0
  %1075 = vmatpush1.msra.mxu0 0.0
  %1076 = vmatprep.subr.mxu0 0.0
  %1077 = vmatpush1.msra.mxu0 0.0
  %1078 = vmatprep.subr.mxu0 0.0
  %1079 = vmatpush1.msra.mxu0 0.0
  %1080 = vmatprep.subr.mxu0 0.0
  %1081 = vmatpush1.msra.mxu0 0.0
  %1082 = vmatprep.subr.mxu0 0.0
  %1083 = vmatpush1.msra.mxu0 0.0
  %1084 = vmatprep.subr.mxu0 0.0
  %1085 = vmatpush1.msra.mxu0 0.0
  %1086 = vmatprep.subr.mxu0 0.0
  %1087 = vmatpush1.msra.mxu0 0.0
  %1088 = vmatprep.subr.mxu0 0.0
  %1089 = vmatpush1.msra.mxu0 0.0
  %1090 = vmatprep.subr.mxu0 0.0
  %1091 = vmatpush1.msra.mxu0 0.0
  %1092 = vmatprep.subr.mxu0 0.0
  %1093 = vmatpush1.msra.mxu0 0.0
  %1094 = vmatprep.subr.mxu0 0.0
  %1095 = vmatpush1.msra.mxu0 0.0
  %1096 = vmatprep.subr.mxu0 0.0
  %1097 = vmatpush1.msra.mxu0 0.0
  %1098 = vmatprep.subr.mxu0 0.0
  %1099 = vmatpush1.msra.mxu0 0.0
  %1100 = vmatprep.subr.mxu0 0.0
  %1101 = vmatpush1.msra.mxu0 0.0
  %1102 = vmatprep.subr.mxu0 0.0
  %1103 = vmatpush1.msra.mxu0 0.0
  %1104 = vmatprep.subr.mxu0 0.0
  %1105 = vmatpush1.msra.mxu0 0.0
  %1106 = vmatprep.subr.mxu0 0.0
  %1107 = vmatpush1.msra.mxu0 0.0
  %1108 = vmatprep.subr.mxu0 0.0
  %1109 = vmatpush1.msra.mxu0 0.0
  %1110 = vmatprep.subr.mxu0 0.0
  %1111 = vmatpush1.msra.mxu0 0.0
  %1112 = vmatprep.subr.mxu0 0.0
  %1113 = vmatpush1.msra.mxu0 0.0
  %1114 = vmatprep.subr.mxu0 0.0
  %1115 = vmatpush1.msra.mxu0 0.0
  %1116 = vmatprep.subr.mxu0 0.0
  %1117 = vmatpush1.msra.mxu0 0.0
  %1118 = vmatprep.subr.mxu0 0.0
  %1119 = vmatpush1.msra.mxu0 0.0
  %1120 = vmatprep.mubr.f32.mxu0 0.0
  %1121 = vmatmul.mubr.f32.gmra.mrb[0].mxu0 %v289
  %v1122 = vpop.f32.mrb[0].mxu0
  %v1123 = vadd.f32 %v285, %v1122
  %v1124 = vpop.f32.mrb[0].mxu0
  %1125 = vmatprep.mubr.f32.mxu0 0.0
  %1126 = vmatmul.mubr.f32.gmra.mrb[0].mxu0 %v292
  %v1127 = vpop.f32.mrb[0].mxu0
  %v1128 = vadd.f32 %v285, %v1127
  %v1129 = vpop.f32.mrb[0].mxu0
  %1130 = vmatprep.mubr.f32.mxu0 0.0
  %1131 = vmatmul.mubr.f32.gmra.mrb[0].mxu0 %v295
  %v1132 = vpop.f32.mrb[0].mxu0
  %v1133 = vadd.f32 %v285, %v1132
  %v1134 = vpop.f32.mrb[0].mxu0
  %1135 = vmatprep.mubr.f32.mxu0 0.0
  %1136 = vmatmul.mubr.f32.gmra.mrb[0].mxu0 %v298
  %v1137 = vpop.f32.mrb[0].mxu0
  %v1138 = vadd.f32 %v285, %v1137
  %v1139 = vpop.f32.mrb[0].mxu0
  %1140 = vmatprep.mubr.f32.mxu0 0.0
  %1141 = vmatmul.mubr.f32.gmra.mrb[0].mxu0 %v301
  %v1142 = vpop.f32.mrb[0].mxu0
  %v1143 = vadd.f32 %v285, %v1142
  %v1144 = vpop.f32.mrb[0].mxu0
  %1145 = vmatprep.mubr.f32.mxu0 0.0
  %1146 = vmatmul.mubr.f32.gmra.mrb[0].mxu0 %v304
  %v1147 = vpop.f32.mrb[0].mxu0
  %v1148 = vadd.f32 %v285, %v1147
  %v1149 = vpop.f32.mrb[0].mxu0
  %1150 = vmatprep.mubr.f32.mxu0 0.0
  %1151 = vmatmul.mubr.f32.gmra.mrb[0].mxu0 %v307
  %v1152 = vpop.f32.mrb[0].mxu0
  %v1153 = vadd.f32 %v285, %v1152
  %v1154 = vpop.f32.mrb[0].mxu0
  %1155 = vmatprep.mubr.f32.mxu0 0.0
  %1156 = vmatmul.mubr.f32.gmra.mrb[0].mxu0 %v310
  %v1157 = vpop.f32.mrb[0].mxu0
  %v1158 = vadd.f32 %v285, %v1157
  %v1159 = vpop.f32.mrb[0].mxu0
  %1160 = vmatprep.mubr.f32.mxu0 0.0
  %1161 = vmatmul.mubr.f32.gmra.mrb[0].mxu0 %v313
  %v1162 = vpop.f32.mrb[0].mxu0
  %v1163 = vadd.f32 %v285, %v1162
  %v1164 = vpop.f32.mrb[0].mxu0
  %1165 = vmatprep.mubr.f32.mxu0 0.0
  %1166 = vmatmul.mubr.f32.gmra.mrb[0].mxu0 %v316
  %v1167 = vpop.f32.mrb[0].mxu0
  %v1168 = vadd.f32 %v285, %v1167
  %v1169 = vpop.f32.mrb[0].mxu0
  %1170 = vmatprep.mubr.f32.mxu0 0.0
  %1171 = vmatmul.mubr.f32.gmra.mrb[0].mxu0 %v319
  %v1172 = vpop.f32.mrb[0].mxu0
  %v1173 = vadd.f32 %v285, %v1172
  %v1174 = vpop.f32.mrb[0].mxu0
  %1175 = vmatprep.mubr.f32.mxu0 0.0
  %1176 = vmatmul.mubr.f32.gmra.mrb[0].mxu0 %v322
  %v1177 = vpop.f32.mrb[0].mxu0
  %v1178 = vadd.f32 %v285, %v1177
  %v1179 = vpop.f32.mrb[0].mxu0
  %1180 = vmatprep.mubr.f32.mxu0 0.0
  %1181 = vmatmul.mubr.f32.gmra.mrb[0].mxu0 %v325
  %v1182 = vpop.f32.mrb[0].mxu0
  %v1183 = vadd.f32 %v285, %v1182
  %v1184 = vpop.f32.mrb[0].mxu0
  %1185 = vmatprep.mubr.f32.mxu0 0.0
  %1186 = vmatmul.mubr.f32.gmra.mrb[0].mxu0 %v328
  %v1187 = vpop.f32.mrb[0].mxu0
  %v1188 = vadd.f32 %v285, %v1187
  %v1189 = vpop.f32.mrb[0].mxu0
  %1190 = vmatprep.mubr.f32.mxu0 0.0
  %1191 = vmatmul.mubr.f32.gmra.mrb[0].mxu0 %v331
  %v1192 = vpop.f32.mrb[0].mxu0
  %v1193 = vadd.f32 %v285, %v1192
  %v1194 = vpop.f32.mrb[0].mxu0
  %1195 = vmatprep.mubr.f32.mxu0 0.0
  %1196 = vmatmul.mubr.f32.gmra.mrb[0].mxu0 %v334
  %v1197 = vpop.f32.mrb[0].mxu0
  %v1198 = vadd.f32 %v285, %v1197
  %v1199 = vpop.f32.mrb[0].mxu0
  %1200 = vmatprep.mubr.f32.mxu0 0.0
  %1201 = vmatmul.mubr.f32.gmra.mrb[0].mxu0 %v337
  %v1202 = vpop.f32.mrb[0].mxu0
  %v1203 = vadd.f32 %v285, %v1202
  %v1204 = vpop.f32.mrb[0].mxu0
  %1205 = vmatprep.mubr.f32.mxu0 0.0
  %1206 = vmatmul.mubr.f32.gmra.mrb[0].mxu0 %v340
  %v1207 = vpop.f32.mrb[0].mxu0
  %v1208 = vadd.f32 %v285, %v1207
  %v1209 = vpop.f32.mrb[0].mxu0
  %1210 = vmatprep.mubr.f32.mxu0 0.0
  %1211 = vmatmul.mubr.f32.gmra.mrb[0].mxu0 %v343
  %v1212 = vpop.f32.mrb[0].mxu0
  %v1213 = vadd.f32 %v285, %v1212
  %v1214 = vpop.f32.mrb[0].mxu0
  %1215 = vmatprep.mubr.f32.mxu0 0.0
  %1216 = vmatmul.mubr.f32.gmra.mrb[0].mxu0 %v346
  %v1217 = vpop.f32.mrb[0].mxu0
  %v1218 = vadd.f32 %v285, %v1217
  %v1219 = vpop.f32.mrb[0].mxu0
  %1220 = vmatprep.mubr.f32.mxu0 0.0
  %1221 = vmatmul.mubr.f32.gmra.mrb[0].mxu0 %v349
  %v1222 = vpop.f32.mrb[0].mxu0
  %v1223 = vadd.f32 %v285, %v1222
  %v1224 = vpop.f32.mrb[0].mxu0
  %1225 = vmatprep.mubr.f32.mxu0 0.0
  %1226 = vmatmul.mubr.f32.gmra.mrb[0].mxu0 %v352
  %v1227 = vpop.f32.mrb[0].mxu0
  %v1228 = vadd.f32 %v285, %v1227
  %v1229 = vpop.f32.mrb[0].mxu0
  %1230 = vmatprep.mubr.f32.mxu0 0.0
  %1231 = vmatmul.mubr.f32.gmra.mrb[0].mxu0 %v355
  %v1232 = vpop.f32.mrb[0].mxu0
  %v1233 = vadd.f32 %v285, %v1232
  %v1234 = vpop.f32.mrb[0].mxu0
  %1235 = vmatprep.mubr.f32.mxu0 0.0
  %1236 = vmatmul.mubr.f32.gmra.mrb[0].mxu0 %v358
  %v1237 = vpop.f32.mrb[0].mxu0
  %v1238 = vadd.f32 %v285, %v1237
  %v1239 = vpop.f32.mrb[0].mxu0
  %1240 = vmatprep.mubr.f32.mxu0 0.0
  %1241 = vmatmul.mubr.f32.gmra.mrb[0].mxu0 %v361
  %v1242 = vpop.f32.mrb[0].mxu0
  %v1243 = vadd.f32 %v285, %v1242
  %v1244 = vpop.f32.mrb[0].mxu0
  %1245 = vmatprep.mubr.f32.mxu0 0.0
  %1246 = vmatmul.mubr.f32.gmra.mrb[0].mxu0 %v364
  %v1247 = vpop.f32.mrb[0].mxu0
  %v1248 = vadd.f32 %v285, %v1247
  %v1249 = vpop.f32.mrb[0].mxu0
  %1250 = vmatprep.mubr.f32.mxu0 0.0
  %1251 = vmatmul.mubr.f32.gmra.mrb[0].mxu0 %v367
  %v1252 = vpop.f32.mrb[0].mxu0
  %v1253 = vadd.f32 %v285, %v1252
  %v1254 = vpop.f32.mrb[0].mxu0
  %1255 = vmatprep.mubr.f32.mxu0 0.0
  %1256 = vmatmul.mubr.f32.gmra.mrb[0].mxu0 %v370
  %v1257 = vpop.f32.mrb[0].mxu0
  %v1258 = vadd.f32 %v285, %v1257
  %v1259 = vpop.f32.mrb[0].mxu0
  %1260 = vmatprep.mubr.f32.mxu0 0.0
  %1261 = vmatmul.mubr.f32.gmra.mrb[0].mxu0 %v373
  %v1262 = vpop.f32.mrb[0].mxu0
  %v1263 = vadd.f32 %v285, %v1262
  %v1264 = vpop.f32.mrb[0].mxu0
  %1265 = vmatprep.mubr.f32.mxu0 0.0
  %1266 = vmatmul.mubr.f32.gmra.mrb[0].mxu0 %v376
  %v1267 = vpop.f32.mrb[0].mxu0
  %v1268 = vadd.f32 %v285, %v1267
  %v1269 = vpop.f32.mrb[0].mxu0
  %1270 = vmatprep.mubr.f32.mxu0 0.0
  %1271 = vmatmul.mubr.f32.gmra.mrb[0].mxu0 %v379
  %v1272 = vpop.f32.mrb[0].mxu0
  %v1273 = vadd.f32 %v285, %v1272
  %v1274 = vpop.f32.mrb[0].mxu0
  %1275 = vmatprep.mubr.f32.mxu0 0.0
  %1276 = vmatmul.mubr.f32.gmra.mrb[0].mxu0 %v382
  %v1277 = vpop.f32.mrb[0].mxu0
  %v1278 = vadd.f32 %v285, %v1277
  %v1279 = vpop.f32.mrb[0].mxu0
  %1280 = vmatprep.mubr.f32.mxu0 0.0
  %1281 = vmatmul.mubr.f32.gmra.mrb[0].mxu0 %v385
  %v1282 = vpop.f32.mrb[0].mxu0
  %v1283 = vadd.f32 %v285, %v1282
  %v1284 = vpop.f32.mrb[0].mxu0
  %1285 = vmatprep.mubr.f32.mxu0 0.0
  %1286 = vmatmul.mubr.f32.gmra.mrb[0].mxu0 %v388
  %v1287 = vpop.f32.mrb[0].mxu0
  %v1288 = vadd.f32 %v285, %v1287
  %v1289 = vpop.f32.mrb[0].mxu0
  %1290 = vmatprep.mubr.f32.mxu0 0.0
  %1291 = vmatmul.mubr.f32.gmra.mrb[0].mxu0 %v391
  %v1292 = vpop.f32.mrb[0].mxu0
  %v1293 = vadd.f32 %v285, %v1292
  %v1294 = vpop.f32.mrb[0].mxu0
  %1295 = vmatprep.mubr.f32.mxu0 0.0
  %1296 = vmatmul.mubr.f32.gmra.mrb[0].mxu0 %v394
  %v1297 = vpop.f32.mrb[0].mxu0
  %v1298 = vadd.f32 %v285, %v1297
  %v1299 = vpop.f32.mrb[0].mxu0
  %1300 = vmatprep.mubr.f32.mxu0 0.0
  %1301 = vmatmul.mubr.f32.gmra.mrb[0].mxu0 %v397
  %v1302 = vpop.f32.mrb[0].mxu0
  %v1303 = vadd.f32 %v285, %v1302
  %v1304 = vpop.f32.mrb[0].mxu0
  %1305 = vmatprep.mubr.f32.mxu0 0.0
  %1306 = vmatmul.mubr.f32.gmra.mrb[0].mxu0 %v400
  %v1307 = vpop.f32.mrb[0].mxu0
  %v1308 = vadd.f32 %v285, %v1307
  %v1309 = vpop.f32.mrb[0].mxu0
  %1310 = vmatprep.mubr.f32.mxu0 0.0
  %1311 = vmatmul.mubr.f32.gmra.mrb[0].mxu0 %v403
  %v1312 = vpop.f32.mrb[0].mxu0
  %v1313 = vadd.f32 %v285, %v1312
  %v1314 = vpop.f32.mrb[0].mxu0
  %1315 = vmatprep.mubr.f32.mxu0 0.0
  %1316 = vmatmul.mubr.f32.gmra.mrb[0].mxu0 %v406
  %v1317 = vpop.f32.mrb[0].mxu0
  %v1318 = vadd.f32 %v285, %v1317
  %v1319 = vpop.f32.mrb[0].mxu0
  %1320 = vmatprep.mubr.f32.mxu0 0.0
  %1321 = vmatmul.mubr.f32.gmra.mrb[0].mxu0 %v409
  %v1322 = vpop.f32.mrb[0].mxu0
  %v1323 = vadd.f32 %v285, %v1322
  %v1324 = vpop.f32.mrb[0].mxu0
  %1325 = vmatprep.mubr.f32.mxu0 0.0
  %1326 = vmatmul.mubr.f32.gmra.mrb[0].mxu0 %v412
  %v1327 = vpop.f32.mrb[0].mxu0
  %v1328 = vadd.f32 %v285, %v1327
  %v1329 = vpop.f32.mrb[0].mxu0
  %1330 = vmatprep.mubr.f32.mxu0 0.0
  %1331 = vmatmul.mubr.f32.gmra.mrb[0].mxu0 %v415
  %v1332 = vpop.f32.mrb[0].mxu0
  %v1333 = vadd.f32 %v285, %v1332
  %v1334 = vpop.f32.mrb[0].mxu0
  %1335 = vmatprep.mubr.f32.mxu0 0.0
  %1336 = vmatmul.mubr.f32.gmra.mrb[0].mxu0 %v418
  %v1337 = vpop.f32.mrb[0].mxu0
  %v1338 = vadd.f32 %v285, %v1337
  %v1339 = vpop.f32.mrb[0].mxu0
  %1340 = vmatprep.mubr.f32.mxu0 0.0
  %1341 = vmatmul.mubr.f32.gmra.mrb[0].mxu0 %v421
  %v1342 = vpop.f32.mrb[0].mxu0
  %v1343 = vadd.f32 %v285, %v1342
  %v1344 = vpop.f32.mrb[0].mxu0
  %1345 = vmatprep.mubr.f32.mxu0 0.0
  %1346 = vmatmul.mubr.f32.gmra.mrb[0].mxu0 %v424
  %v1347 = vpop.f32.mrb[0].mxu0
  %v1348 = vadd.f32 %v285, %v1347
  %v1349 = vpop.f32.mrb[0].mxu0
  %1350 = vmatprep.mubr.f32.mxu0 0.0
  %1351 = vmatmul.mubr.f32.gmra.mrb[0].mxu0 %v427
  %v1352 = vpop.f32.mrb[0].mxu0
  %v1353 = vadd.f32 %v285, %v1352
  %v1354 = vpop.f32.mrb[0].mxu0
  %1355 = vmatprep.mubr.f32.mxu0 0.0
  %1356 = vmatmul.mubr.f32.gmra.mrb[0].mxu0 %v430
  %v1357 = vpop.f32.mrb[0].mxu0
  %v1358 = vadd.f32 %v285, %v1357
  %v1359 = vpop.f32.mrb[0].mxu0
  %1360 = vmatprep.mubr.f32.mxu0 0.0
  %1361 = vmatmul.mubr.f32.gmra.mrb[0].mxu0 %v433
  %v1362 = vpop.f32.mrb[0].mxu0
  %v1363 = vadd.f32 %v285, %v1362
  %v1364 = vpop.f32.mrb[0].mxu0
  %1365 = vmatprep.mubr.f32.mxu0 0.0
  %1366 = vmatmul.mubr.f32.gmra.mrb[0].mxu0 %v436
  %v1367 = vpop.f32.mrb[0].mxu0
  %v1368 = vadd.f32 %v285, %v1367
  %v1369 = vpop.f32.mrb[0].mxu0
  %1370 = vmatprep.mubr.f32.mxu0 0.0
  %1371 = vmatmul.mubr.f32.gmra.mrb[0].mxu0 %v439
  %v1372 = vpop.f32.mrb[0].mxu0
  %v1373 = vadd.f32 %v285, %v1372
  %v1374 = vpop.f32.mrb[0].mxu0
  %1375 = vmatprep.mubr.f32.mxu0 0.0
  %1376 = vmatmul.mubr.f32.gmra.mrb[0].mxu0 %v442
  %v1377 = vpop.f32.mrb[0].mxu0
  %v1378 = vadd.f32 %v285, %v1377
  %v1379 = vpop.f32.mrb[0].mxu0
  %1380 = vmatprep.mubr.f32.mxu0 0.0
  %1381 = vmatmul.mubr.f32.gmra.mrb[0].mxu0 %v445
  %v1382 = vpop.f32.mrb[0].mxu0
  %v1383 = vadd.f32 %v285, %v1382
  %v1384 = vpop.f32.mrb[0].mxu0
  %1385 = vmatprep.mubr.f32.mxu0 0.0
  %1386 = vmatmul.mubr.f32.gmra.mrb[0].mxu0 %v448
  %v1387 = vpop.f32.mrb[0].mxu0
  %v1388 = vadd.f32 %v285, %v1387
  %v1389 = vpop.f32.mrb[0].mxu0
  %1390 = vmatprep.mubr.f32.mxu0 0.0
  %1391 = vmatmul.mubr.f32.gmra.mrb[0].mxu0 %v451
  %v1392 = vpop.f32.mrb[0].mxu0
  %v1393 = vadd.f32 %v285, %v1392
  %v1394 = vpop.f32.mrb[0].mxu0
  %1395 = vmatprep.mubr.f32.mxu0 0.0
  %1396 = vmatmul.mubr.f32.gmra.mrb[0].mxu0 %v454
  %v1397 = vpop.f32.mrb[0].mxu0
  %v1398 = vadd.f32 %v285, %v1397
  %v1399 = vpop.f32.mrb[0].mxu0
  %1400 = vmatprep.mubr.f32.mxu0 0.0
  %1401 = vmatmul.mubr.f32.gmra.mrb[0].mxu0 %v457
  %v1402 = vpop.f32.mrb[0].mxu0
  %v1403 = vadd.f32 %v285, %v1402
  %v1404 = vpop.f32.mrb[0].mxu0
  %1405 = vmatprep.mubr.f32.mxu0 0.0
  %1406 = vmatmul.mubr.f32.gmra.mrb[0].mxu0 %v460
  %v1407 = vpop.f32.mrb[0].mxu0
  %v1408 = vadd.f32 %v285, %v1407
  %v1409 = vpop.f32.mrb[0].mxu0
  %1410 = vmatprep.mubr.f32.mxu0 0.0
  %1411 = vmatmul.mubr.f32.gmra.mrb[0].mxu0 %v463
  %v1412 = vpop.f32.mrb[0].mxu0
  %v1413 = vadd.f32 %v285, %v1412
  %v1414 = vpop.f32.mrb[0].mxu0
  %1415 = vmatprep.mubr.f32.mxu0 0.0
  %1416 = vmatmul.mubr.f32.gmra.mrb[0].mxu0 %v466
  %v1417 = vpop.f32.mrb[0].mxu0
  %v1418 = vadd.f32 %v285, %v1417
  %v1419 = vpop.f32.mrb[0].mxu0
  %1420 = vmatprep.mubr.f32.mxu0 0.0
  %1421 = vmatmul.mubr.f32.gmra.mrb[0].mxu0 %v469
  %v1422 = vpop.f32.mrb[0].mxu0
  %v1423 = vadd.f32 %v285, %v1422
  %v1424 = vpop.f32.mrb[0].mxu0
  %1425 = vmatprep.mubr.f32.mxu0 0.0
  %1426 = vmatmul.mubr.f32.gmra.mrb[0].mxu0 %v472
  %v1427 = vpop.f32.mrb[0].mxu0
  %v1428 = vadd.f32 %v285, %v1427
  %v1429 = vpop.f32.mrb[0].mxu0
  %1430 = vmatprep.mubr.f32.mxu0 0.0
  %1431 = vmatmul.mubr.f32.gmra.mrb[0].mxu0 %v475
  %v1432 = vpop.f32.mrb[0].mxu0
  %v1433 = vadd.f32 %v285, %v1432
  %v1434 = vpop.f32.mrb[0].mxu0
  %1435 = vmatprep.mubr.f32.mxu0 0.0
  %1436 = vmatmul.mubr.f32.gmra.mrb[0].mxu0 %v478
  %v1437 = vpop.f32.mrb[0].mxu0
  %v1438 = vadd.f32 %v285, %v1437
  %v1439 = vpop.f32.mrb[0].mxu0
  %1440 = vmatprep.mubr.f32.mxu0 0.0
  %1441 = vmatmul.mubr.f32.gmra.mrb[0].mxu0 %v481
  %v1442 = vpop.f32.mrb[0].mxu0
  %v1443 = vadd.f32 %v285, %v1442
  %v1444 = vpop.f32.mrb[0].mxu0
  %1445 = vmatprep.mubr.f32.mxu0 0.0
  %1446 = vmatmul.mubr.f32.gmra.mrb[0].mxu0 %v484
  %v1447 = vpop.f32.mrb[0].mxu0
  %v1448 = vadd.f32 %v285, %v1447
  %v1449 = vpop.f32.mrb[0].mxu0
  %1450 = vmatprep.mubr.f32.mxu0 0.0
  %1451 = vmatmul.mubr.f32.gmra.mrb[0].mxu0 %v487
  %v1452 = vpop.f32.mrb[0].mxu0
  %v1453 = vadd.f32 %v285, %v1452
  %v1454 = vpop.f32.mrb[0].mxu0
  %1455 = vmatprep.mubr.f32.mxu0 0.0
  %1456 = vmatmul.mubr.f32.gmra.mrb[0].mxu0 %v490
  %v1457 = vpop.f32.mrb[0].mxu0
  %v1458 = vadd.f32 %v285, %v1457
  %v1459 = vpop.f32.mrb[0].mxu0
  %1460 = vmatprep.mubr.f32.mxu0 0.0
  %1461 = vmatmul.mubr.f32.gmra.mrb[0].mxu0 %v493
  %v1462 = vpop.f32.mrb[0].mxu0
  %v1463 = vadd.f32 %v285, %v1462
  %v1464 = vpop.f32.mrb[0].mxu0
  %1465 = vmatprep.mubr.f32.mxu0 0.0
  %1466 = vmatmul.mubr.f32.gmra.mrb[0].mxu0 %v496
  %v1467 = vpop.f32.mrb[0].mxu0
  %v1468 = vadd.f32 %v285, %v1467
  %v1469 = vpop.f32.mrb[0].mxu0
  %1470 = vmatprep.mubr.f32.mxu0 0.0
  %1471 = vmatmul.mubr.f32.gmra.mrb[0].mxu0 %v499
  %v1472 = vpop.f32.mrb[0].mxu0
  %v1473 = vadd.f32 %v285, %v1472
  %v1474 = vpop.f32.mrb[0].mxu0
  %1475 = vmatprep.mubr.f32.mxu0 0.0
  %1476 = vmatmul.mubr.f32.gmra.mrb[0].mxu0 %v502
  %v1477 = vpop.f32.mrb[0].mxu0
  %v1478 = vadd.f32 %v285, %v1477
  %v1479 = vpop.f32.mrb[0].mxu0
  %1480 = vmatprep.mubr.f32.mxu0 0.0
  %1481 = vmatmul.mubr.f32.gmra.mrb[0].mxu0 %v505
  %v1482 = vpop.f32.mrb[0].mxu0
  %v1483 = vadd.f32 %v285, %v1482
  %v1484 = vpop.f32.mrb[0].mxu0
  %1485 = vmatprep.mubr.f32.mxu0 0.0
  %1486 = vmatmul.mubr.f32.gmra.mrb[0].mxu0 %v508
  %v1487 = vpop.f32.mrb[0].mxu0
  %v1488 = vadd.f32 %v285, %v1487
  %v1489 = vpop.f32.mrb[0].mxu0
  %1490 = vmatprep.mubr.f32.mxu0 0.0
  %1491 = vmatmul.mubr.f32.gmra.mrb[0].mxu0 %v511
  %v1492 = vpop.f32.mrb[0].mxu0
  %v1493 = vadd.f32 %v285, %v1492
  %v1494 = vpop.f32.mrb[0].mxu0
  %1495 = vmatprep.mubr.f32.mxu0 0.0
  %1496 = vmatmul.mubr.f32.gmra.mrb[0].mxu0 %v514
  %v1497 = vpop.f32.mrb[0].mxu0
  %v1498 = vadd.f32 %v285, %v1497
  %v1499 = vpop.f32.mrb[0].mxu0
  %1500 = vmatprep.mubr.f32.mxu0 0.0
  %1501 = vmatmul.mubr.f32.gmra.mrb[0].mxu0 %v517
  %v1502 = vpop.f32.mrb[0].mxu0
  %v1503 = vadd.f32 %v285, %v1502
  %v1504 = vpop.f32.mrb[0].mxu0
  %1505 = vmatprep.mubr.f32.mxu0 0.0
  %1506 = vmatmul.mubr.f32.gmra.mrb[0].mxu0 %v520
  %v1507 = vpop.f32.mrb[0].mxu0
  %v1508 = vadd.f32 %v285, %v1507
  %v1509 = vpop.f32.mrb[0].mxu0
  %1510 = vmatprep.mubr.f32.mxu0 0.0
  %1511 = vmatmul.mubr.f32.gmra.mrb[0].mxu0 %v523
  %v1512 = vpop.f32.mrb[0].mxu0
  %v1513 = vadd.f32 %v285, %v1512
  %v1514 = vpop.f32.mrb[0].mxu0
  %1515 = vmatprep.mubr.f32.mxu0 0.0
  %1516 = vmatmul.mubr.f32.gmra.mrb[0].mxu0 %v526
  %v1517 = vpop.f32.mrb[0].mxu0
  %v1518 = vadd.f32 %v285, %v1517
  %v1519 = vpop.f32.mrb[0].mxu0
  %1520 = vmatprep.mubr.f32.mxu0 0.0
  %1521 = vmatmul.mubr.f32.gmra.mrb[0].mxu0 %v529
  %v1522 = vpop.f32.mrb[0].mxu0
  %v1523 = vadd.f32 %v285, %v1522
  %v1524 = vpop.f32.mrb[0].mxu0
  %1525 = vmatprep.mubr.f32.mxu0 0.0
  %1526 = vmatmul.mubr.f32.gmra.mrb[0].mxu0 %v532
  %v1527 = vpop.f32.mrb[0].mxu0
  %v1528 = vadd.f32 %v285, %v1527
  %v1529 = vpop.f32.mrb[0].mxu0
  %1530 = vmatprep.mubr.f32.mxu0 0.0
  %1531 = vmatmul.mubr.f32.gmra.mrb[0].mxu0 %v535
  %v1532 = vpop.f32.mrb[0].mxu0
  %v1533 = vadd.f32 %v285, %v1532
  %v1534 = vpop.f32.mrb[0].mxu0
  %1535 = vmatprep.mubr.f32.mxu0 0.0
  %1536 = vmatmul.mubr.f32.gmra.mrb[0].mxu0 %v538
  %v1537 = vpop.f32.mrb[0].mxu0
  %v1538 = vadd.f32 %v285, %v1537
  %v1539 = vpop.f32.mrb[0].mxu0
  %1540 = vmatprep.mubr.f32.mxu0 0.0
  %1541 = vmatmul.mubr.f32.gmra.mrb[0].mxu0 %v541
  %v1542 = vpop.f32.mrb[0].mxu0
  %v1543 = vadd.f32 %v285, %v1542
  %v1544 = vpop.f32.mrb[0].mxu0
  %1545 = vmatprep.mubr.f32.mxu0 0.0
  %1546 = vmatmul.mubr.f32.gmra.mrb[0].mxu0 %v544
  %v1547 = vpop.f32.mrb[0].mxu0
  %v1548 = vadd.f32 %v285, %v1547
  %v1549 = vpop.f32.mrb[0].mxu0
  %1550 = vmatprep.mubr.f32.mxu0 0.0
  %1551 = vmatmul.mubr.f32.gmra.mrb[0].mxu0 %v547
  %v1552 = vpop.f32.mrb[0].mxu0
  %v1553 = vadd.f32 %v285, %v1552
  %v1554 = vpop.f32.mrb[0].mxu0
  %1555 = vmatprep.mubr.f32.mxu0 0.0
  %1556 = vmatmul.mubr.f32.gmra.mrb[0].mxu0 %v550
  %v1557 = vpop.f32.mrb[0].mxu0
  %v1558 = vadd.f32 %v285, %v1557
  %v1559 = vpop.f32.mrb[0].mxu0
  %1560 = vmatprep.mubr.f32.mxu0 0.0
  %1561 = vmatmul.mubr.f32.gmra.mrb[0].mxu0 %v553
  %v1562 = vpop.f32.mrb[0].mxu0
  %v1563 = vadd.f32 %v285, %v1562
  %v1564 = vpop.f32.mrb[0].mxu0
  %1565 = vmatprep.mubr.f32.mxu0 0.0
  %1566 = vmatmul.mubr.f32.gmra.mrb[0].mxu0 %v556
  %v1567 = vpop.f32.mrb[0].mxu0
  %v1568 = vadd.f32 %v285, %v1567
  %v1569 = vpop.f32.mrb[0].mxu0
  %1570 = vmatprep.mubr.f32.mxu0 0.0
  %1571 = vmatmul.mubr.f32.gmra.mrb[0].mxu0 %v559
  %v1572 = vpop.f32.mrb[0].mxu0
  %v1573 = vadd.f32 %v285, %v1572
  %v1574 = vpop.f32.mrb[0].mxu0
  %1575 = vmatprep.mubr.f32.mxu0 0.0
  %1576 = vmatmul.mubr.f32.gmra.mrb[0].mxu0 %v562
  %v1577 = vpop.f32.mrb[0].mxu0
  %v1578 = vadd.f32 %v285, %v1577
  %v1579 = vpop.f32.mrb[0].mxu0
  %1580 = vmatprep.mubr.f32.mxu0 0.0
  %1581 = vmatmul.mubr.f32.gmra.mrb[0].mxu0 %v565
  %v1582 = vpop.f32.mrb[0].mxu0
  %v1583 = vadd.f32 %v285, %v1582
  %v1584 = vpop.f32.mrb[0].mxu0
  %1585 = vmatprep.mubr.f32.mxu0 0.0
  %1586 = vmatmul.mubr.f32.gmra.mrb[0].mxu0 %v568
  %v1587 = vpop.f32.mrb[0].mxu0
  %v1588 = vadd.f32 %v285, %v1587
  %v1589 = vpop.f32.mrb[0].mxu0
  %1590 = vmatprep.mubr.f32.mxu0 0.0
  %1591 = vmatmul.mubr.f32.gmra.mrb[0].mxu0 %v571
  %v1592 = vpop.f32.mrb[0].mxu0
  %v1593 = vadd.f32 %v285, %v1592
  %v1594 = vpop.f32.mrb[0].mxu0
  %1595 = vmatprep.mubr.f32.mxu0 0.0
  %1596 = vmatmul.mubr.f32.gmra.mrb[0].mxu0 %v574
  %v1597 = vpop.f32.mrb[0].mxu0
  %v1598 = vadd.f32 %v285, %v1597
  %v1599 = vpop.f32.mrb[0].mxu0
  %1600 = vmatprep.mubr.f32.mxu0 0.0
  %1601 = vmatmul.mubr.f32.gmra.mrb[0].mxu0 %v577
  %v1602 = vpop.f32.mrb[0].mxu0
  %v1603 = vadd.f32 %v285, %v1602
  %v1604 = vpop.f32.mrb[0].mxu0
  %1605 = vmatprep.mubr.f32.mxu0 0.0
  %1606 = vmatmul.mubr.f32.gmra.mrb[0].mxu0 %v580
  %v1607 = vpop.f32.mrb[0].mxu0
  %v1608 = vadd.f32 %v285, %v1607
  %v1609 = vpop.f32.mrb[0].mxu0
  %1610 = vmatprep.mubr.f32.mxu0 0.0
  %1611 = vmatmul.mubr.f32.gmra.mrb[0].mxu0 %v583
  %v1612 = vpop.f32.mrb[0].mxu0
  %v1613 = vadd.f32 %v285, %v1612
  %v1614 = vpop.f32.mrb[0].mxu0
  %1615 = vmatprep.mubr.f32.mxu0 0.0
  %1616 = vmatmul.mubr.f32.gmra.mrb[0].mxu0 %v586
  %v1617 = vpop.f32.mrb[0].mxu0
  %v1618 = vadd.f32 %v285, %v1617
  %v1619 = vpop.f32.mrb[0].mxu0
  %1620 = vmatprep.mubr.f32.mxu0 0.0
  %1621 = vmatmul.mubr.f32.gmra.mrb[0].mxu0 %v589
  %v1622 = vpop.f32.mrb[0].mxu0
  %v1623 = vadd.f32 %v285, %v1622
  %v1624 = vpop.f32.mrb[0].mxu0
  %1625 = vmatprep.mubr.f32.mxu0 0.0
  %1626 = vmatmul.mubr.f32.gmra.mrb[0].mxu0 %v592
  %v1627 = vpop.f32.mrb[0].mxu0
  %v1628 = vadd.f32 %v285, %v1627
  %v1629 = vpop.f32.mrb[0].mxu0
  %1630 = vmatprep.mubr.f32.mxu0 0.0
  %1631 = vmatmul.mubr.f32.gmra.mrb[0].mxu0 %v595
  %v1632 = vpop.f32.mrb[0].mxu0
  %v1633 = vadd.f32 %v285, %v1632
  %v1634 = vpop.f32.mrb[0].mxu0
  %1635 = vmatprep.mubr.f32.mxu0 0.0
  %1636 = vmatmul.mubr.f32.gmra.mrb[0].mxu0 %v598
  %v1637 = vpop.f32.mrb[0].mxu0
  %v1638 = vadd.f32 %v285, %v1637
  %v1639 = vpop.f32.mrb[0].mxu0
  %1640 = vmatprep.mubr.f32.mxu0 0.0
  %1641 = vmatmul.mubr.f32.gmra.mrb[0].mxu0 %v601
  %v1642 = vpop.f32.mrb[0].mxu0
  %v1643 = vadd.f32 %v285, %v1642
  %v1644 = vpop.f32.mrb[0].mxu0
  %1645 = vmatprep.mubr.f32.mxu0 0.0
  %1646 = vmatmul.mubr.f32.gmra.mrb[0].mxu0 %v604
  %v1647 = vpop.f32.mrb[0].mxu0
  %v1648 = vadd.f32 %v285, %v1647
  %v1649 = vpop.f32.mrb[0].mxu0
  %1650 = vmatprep.mubr.f32.mxu0 0.0
  %1651 = vmatmul.mubr.f32.gmra.mrb[0].mxu0 %v607
  %v1652 = vpop.f32.mrb[0].mxu0
  %v1653 = vadd.f32 %v285, %v1652
  %v1654 = vpop.f32.mrb[0].mxu0
  %1655 = vmatprep.mubr.f32.mxu0 0.0
  %1656 = vmatmul.mubr.f32.gmra.mrb[0].mxu0 %v610
  %v1657 = vpop.f32.mrb[0].mxu0
  %v1658 = vadd.f32 %v285, %v1657
  %v1659 = vpop.f32.mrb[0].mxu0
  %1660 = vmatprep.mubr.f32.mxu0 0.0
  %1661 = vmatmul.mubr.f32.gmra.mrb[0].mxu0 %v613
  %v1662 = vpop.f32.mrb[0].mxu0
  %v1663 = vadd.f32 %v285, %v1662
  %v1664 = vpop.f32.mrb[0].mxu0
  %1665 = vmatprep.mubr.f32.mxu0 0.0
  %1666 = vmatmul.mubr.f32.gmra.mrb[0].mxu0 %v616
  %v1667 = vpop.f32.mrb[0].mxu0
  %v1668 = vadd.f32 %v285, %v1667
  %v1669 = vpop.f32.mrb[0].mxu0
  %1670 = vmatprep.mubr.f32.mxu0 0.0
  %1671 = vmatmul.mubr.f32.gmra.mrb[0].mxu0 %v619
  %v1672 = vpop.f32.mrb[0].mxu0
  %v1673 = vadd.f32 %v285, %v1672
  %v1674 = vpop.f32.mrb[0].mxu0
  %1675 = vmatprep.mubr.f32.mxu0 0.0
  %1676 = vmatmul.mubr.f32.gmra.mrb[0].mxu0 %v622
  %v1677 = vpop.f32.mrb[0].mxu0
  %v1678 = vadd.f32 %v285, %v1677
  %v1679 = vpop.f32.mrb[0].mxu0
  %1680 = vmatprep.mubr.f32.mxu0 0.0
  %1681 = vmatmul.mubr.f32.gmra.mrb[0].mxu0 %v625
  %v1682 = vpop.f32.mrb[0].mxu0
  %v1683 = vadd.f32 %v285, %v1682
  %v1684 = vpop.f32.mrb[0].mxu0
  %1685 = vmatprep.mubr.f32.mxu0 0.0
  %1686 = vmatmul.mubr.f32.gmra.mrb[0].mxu0 %v628
  %v1687 = vpop.f32.mrb[0].mxu0
  %v1688 = vadd.f32 %v285, %v1687
  %v1689 = vpop.f32.mrb[0].mxu0
  %1690 = vmatprep.mubr.f32.mxu0 0.0
  %1691 = vmatmul.mubr.f32.gmra.mrb[0].mxu0 %v631
  %v1692 = vpop.f32.mrb[0].mxu0
  %v1693 = vadd.f32 %v285, %v1692
  %v1694 = vpop.f32.mrb[0].mxu0
  %1695 = vmatprep.mubr.f32.mxu0 0.0
  %1696 = vmatmul.mubr.f32.gmra.mrb[0].mxu0 %v634
  %v1697 = vpop.f32.mrb[0].mxu0
  %v1698 = vadd.f32 %v285, %v1697
  %v1699 = vpop.f32.mrb[0].mxu0
  %1700 = vmatprep.mubr.f32.mxu0 0.0
  %1701 = vmatmul.mubr.f32.gmra.mrb[0].mxu0 %v637
  %v1702 = vpop.f32.mrb[0].mxu0
  %v1703 = vadd.f32 %v285, %v1702
  %v1704 = vpop.f32.mrb[0].mxu0
  %1705 = vmatprep.mubr.f32.mxu0 0.0
  %1706 = vmatmul.mubr.f32.gmra.mrb[0].mxu0 %v640
  %v1707 = vpop.f32.mrb[0].mxu0
  %v1708 = vadd.f32 %v285, %v1707
  %v1709 = vpop.f32.mrb[0].mxu0
  %1710 = vmatprep.mubr.f32.mxu0 0.0
  %1711 = vmatmul.mubr.f32.gmra.mrb[0].mxu0 %v643
  %v1712 = vpop.f32.mrb[0].mxu0
  %v1713 = vadd.f32 %v285, %v1712
  %v1714 = vpop.f32.mrb[0].mxu0
  %1715 = vmatprep.mubr.f32.mxu0 0.0
  %1716 = vmatmul.mubr.f32.gmra.mrb[0].mxu0 %v646
  %v1717 = vpop.f32.mrb[0].mxu0
  %v1718 = vadd.f32 %v285, %v1717
  %v1719 = vpop.f32.mrb[0].mxu0
  %1720 = vmatprep.mubr.f32.mxu0 0.0
  %1721 = vmatmul.mubr.f32.gmra.mrb[0].mxu0 %v649
  %v1722 = vpop.f32.mrb[0].mxu0
  %v1723 = vadd.f32 %v285, %v1722
  %v1724 = vpop.f32.mrb[0].mxu0
  %1725 = vmatprep.mubr.f32.mxu0 0.0
  %1726 = vmatmul.mubr.f32.gmra.mrb[0].mxu0 %v652
  %v1727 = vpop.f32.mrb[0].mxu0
  %v1728 = vadd.f32 %v285, %v1727
  %v1729 = vpop.f32.mrb[0].mxu0
  %1730 = vmatprep.mubr.f32.mxu0 0.0
  %1731 = vmatmul.mubr.f32.gmra.mrb[0].mxu0 %v655
  %v1732 = vpop.f32.mrb[0].mxu0
  %v1733 = vadd.f32 %v285, %v1732
  %v1734 = vpop.f32.mrb[0].mxu0
  %1735 = vmatprep.mubr.f32.mxu0 0.0
  %1736 = vmatmul.mubr.f32.gmra.mrb[0].mxu0 %v658
  %v1737 = vpop.f32.mrb[0].mxu0
  %v1738 = vadd.f32 %v285, %v1737
  %v1739 = vpop.f32.mrb[0].mxu0
  %1740 = vmatprep.mubr.f32.mxu0 0.0
  %1741 = vmatmul.mubr.f32.gmra.mrb[0].mxu0 %v661
  %v1742 = vpop.f32.mrb[0].mxu0
  %v1743 = vadd.f32 %v285, %v1742
  %v1744 = vpop.f32.mrb[0].mxu0
  %1745 = vmatprep.mubr.f32.mxu0 0.0
  %1746 = vmatmul.mubr.f32.gmra.mrb[0].mxu0 %v664
  %v1747 = vpop.f32.mrb[0].mxu0
  %v1748 = vadd.f32 %v285, %v1747
  %v1749 = vpop.f32.mrb[0].mxu0
  %1750 = vmatprep.mubr.f32.mxu0 0.0
  %1751 = vmatmul.mubr.f32.gmra.mrb[0].mxu0 %v667
  %v1752 = vpop.f32.mrb[0].mxu0
  %v1753 = vadd.f32 %v285, %v1752
  %v1754 = vpop.f32.mrb[0].mxu0
  %1755 = vmatprep.mubr.f32.mxu0 0.0
  %1756 = vmatmul.mubr.f32.gmra.mrb[0].mxu0 %v670
  %v1757 = vpop.f32.mrb[0].mxu0
  %v1758 = vadd.f32 %v285, %v1757
  %v1759 = vpop.f32.mrb[0].mxu0
  %1760 = vmatprep.mubr.f32.mxu0 0.0
  %1761 = vmatmul.mubr.f32.gmra.mrb[0].mxu0 %v673
  %v1762 = vpop.f32.mrb[0].mxu0
  %v1763 = vadd.f32 %v285, %v1762
  %v1764 = vpop.f32.mrb[0].mxu0
  %1765 = vmatprep.mubr.f32.mxu0 0.0
  %1766 = vmatmul.mubr.f32.gmra.mrb[0].mxu0 %v676
  %v1767 = vpop.f32.mrb[0].mxu0
  %v1768 = vadd.f32 %v285, %v1767
  %v1769 = vpop.f32.mrb[0].mxu0
  %1770 = vmatprep.mubr.f32.mxu0 0.0
  %1771 = vmatmul.mubr.f32.gmra.mrb[0].mxu0 %v679
  %v1772 = vpop.f32.mrb[0].mxu0
  %v1773 = vadd.f32 %v285, %v1772
  %v1774 = vpop.f32.mrb[0].mxu0
  %1775 = vmatprep.mubr.f32.mxu0 0.0
  %1776 = vmatmul.mubr.f32.gmra.mrb[0].mxu0 %v682
  %v1777 = vpop.f32.mrb[0].mxu0
  %v1778 = vadd.f32 %v285, %v1777
  %v1779 = vpop.f32.mrb[0].mxu0
  %1780 = vmatprep.mubr.f32.mxu0 0.0
  %1781 = vmatmul.mubr.f32.gmra.mrb[0].mxu0 %v685
  %v1782 = vpop.f32.mrb[0].mxu0
  %v1783 = vadd.f32 %v285, %v1782
  %v1784 = vpop.f32.mrb[0].mxu0
  %1785 = vmatprep.mubr.f32.mxu0 0.0
  %1786 = vmatmul.mubr.f32.gmra.mrb[0].mxu0 %v688
  %v1787 = vpop.f32.mrb[0].mxu0
  %v1788 = vadd.f32 %v285, %v1787
  %v1789 = vpop.f32.mrb[0].mxu0
  %1790 = vmatprep.mubr.f32.mxu0 0.0
  %1791 = vmatmul.mubr.f32.gmra.mrb[0].mxu0 %v691
  %v1792 = vpop.f32.mrb[0].mxu0
  %v1793 = vadd.f32 %v285, %v1792
  %v1794 = vpop.f32.mrb[0].mxu0
  %1795 = vmatprep.mubr.f32.mxu0 0.0
  %1796 = vmatmul.mubr.f32.gmra.mrb[0].mxu0 %v694
  %v1797 = vpop.f32.mrb[0].mxu0
  %v1798 = vadd.f32 %v285, %v1797
  %v1799 = vpop.f32.mrb[0].mxu0
  %1800 = vmatprep.mubr.f32.mxu0 0.0
  %1801 = vmatmul.mubr.f32.gmra.mrb[0].mxu0 %v697
  %v1802 = vpop.f32.mrb[0].mxu0
  %v1803 = vadd.f32 %v285, %v1802
  %v1804 = vpop.f32.mrb[0].mxu0
  %1805 = vmatprep.mubr.f32.mxu0 0.0
  %1806 = vmatmul.mubr.f32.gmra.mrb[0].mxu0 %v700
  %v1807 = vpop.f32.mrb[0].mxu0
  %v1808 = vadd.f32 %v285, %v1807
  %v1809 = vpop.f32.mrb[0].mxu0
  %1810 = vmatprep.mubr.f32.mxu0 0.0
  %1811 = vmatmul.mubr.f32.gmra.mrb[0].mxu0 %v703
  %v1812 = vpop.f32.mrb[0].mxu0
  %v1813 = vadd.f32 %v285, %v1812
  %v1814 = vpop.f32.mrb[0].mxu0
  %1815 = vmatprep.mubr.f32.mxu0 0.0
  %1816 = vmatmul.mubr.f32.gmra.mrb[0].mxu0 %v706
  %v1817 = vpop.f32.mrb[0].mxu0
  %v1818 = vadd.f32 %v285, %v1817
  %v1819 = vpop.f32.mrb[0].mxu0
  %1820 = vmatprep.mubr.f32.mxu0 0.0
  %1821 = vmatmul.mubr.f32.gmra.mrb[0].mxu0 %v709
  %v1822 = vpop.f32.mrb[0].mxu0
  %v1823 = vadd.f32 %v285, %v1822
  %v1824 = vpop.f32.mrb[0].mxu0
  %1825 = vmatprep.mubr.f32.mxu0 0.0
  %1826 = vmatmul.mubr.f32.gmra.mrb[0].mxu0 %v712
  %v1827 = vpop.f32.mrb[0].mxu0
  %v1828 = vadd.f32 %v285, %v1827
  %v1829 = vpop.f32.mrb[0].mxu0
  %1830 = vmatprep.mubr.f32.mxu0 0.0
  %1831 = vmatmul.mubr.f32.gmra.mrb[0].mxu0 %v715
  %v1832 = vpop.f32.mrb[0].mxu0
  %v1833 = vadd.f32 %v285, %v1832
  %v1834 = vpop.f32.mrb[0].mxu0
  %1835 = vmatprep.mubr.f32.mxu0 0.0
  %1836 = vmatmul.mubr.f32.gmra.mrb[0].mxu0 %v718
  %v1837 = vpop.f32.mrb[0].mxu0
  %v1838 = vadd.f32 %v285, %v1837
  %v1839 = vpop.f32.mrb[0].mxu0
  %1840 = vmatprep.mubr.f32.mxu0 0.0
  %1841 = vmatmul.mubr.f32.gmra.mrb[0].mxu0 %v721
  %v1842 = vpop.f32.mrb[0].mxu0
  %v1843 = vadd.f32 %v285, %v1842
  %v1844 = vpop.f32.mrb[0].mxu0
  %1845 = vmatprep.mubr.f32.mxu0 0.0
  %1846 = vmatmul.mubr.f32.gmra.mrb[0].mxu0 %v724
  %v1847 = vpop.f32.mrb[0].mxu0
  %v1848 = vadd.f32 %v285, %v1847
  %v1849 = vpop.f32.mrb[0].mxu0
  %1850 = vmatprep.mubr.f32.mxu0 0.0
  %1851 = vmatmul.mubr.f32.gmra.mrb[0].mxu0 %v727
  %v1852 = vpop.f32.mrb[0].mxu0
  %v1853 = vadd.f32 %v285, %v1852
  %v1854 = vpop.f32.mrb[0].mxu0
  %1855 = vmatprep.mubr.f32.mxu0 0.0
  %1856 = vmatmul.mubr.f32.gmra.mrb[0].mxu0 %v730
  %v1857 = vpop.f32.mrb[0].mxu0
  %v1858 = vadd.f32 %v285, %v1857
  %v1859 = vpop.f32.mrb[0].mxu0
  %1860 = vmatprep.mubr.f32.mxu0 0.0
  %1861 = vmatmul.mubr.f32.gmra.mrb[0].mxu0 %v733
  %v1862 = vpop.f32.mrb[0].mxu0
  %v1863 = vadd.f32 %v285, %v1862
  %v1864 = vpop.f32.mrb[0].mxu0
  %1865 = vmatprep.mubr.f32.mxu0 0.0
  %1866 = vmatmul.mubr.f32.gmra.mrb[0].mxu0 %v736
  %v1867 = vpop.f32.mrb[0].mxu0
  %v1868 = vadd.f32 %v285, %v1867
  %v1869 = vpop.f32.mrb[0].mxu0
  %1870 = vmatprep.mubr.f32.mxu0 0.0
  %1871 = vmatmul.mubr.f32.gmra.mrb[0].mxu0 %v739
  %v1872 = vpop.f32.mrb[0].mxu0
  %v1873 = vadd.f32 %v285, %v1872
  %v1874 = vpop.f32.mrb[0].mxu0
  %1875 = vmatprep.mubr.f32.mxu0 0.0
  %1876 = vmatmul.mubr.f32.gmra.mrb[0].mxu0 %v742
  %v1877 = vpop.f32.mrb[0].mxu0
  %v1878 = vadd.f32 %v285, %v1877
  %v1879 = vpop.f32.mrb[0].mxu0
  %1880 = vmatprep.mubr.f32.mxu0 0.0
  %1881 = vmatmul.mubr.f32.gmra.mrb[0].mxu0 %v745
  %v1882 = vpop.f32.mrb[0].mxu0
  %v1883 = vadd.f32 %v285, %v1882
  %v1884 = vpop.f32.mrb[0].mxu0
  %1885 = vmatprep.mubr.f32.mxu0 0.0
  %1886 = vmatmul.mubr.f32.gmra.mrb[0].mxu0 %v748
  %v1887 = vpop.f32.mrb[0].mxu0
  %v1888 = vadd.f32 %v285, %v1887
  %v1889 = vpop.f32.mrb[0].mxu0
  %1890 = vmatprep.mubr.f32.mxu0 0.0
  %1891 = vmatmul.mubr.f32.gmra.mrb[0].mxu0 %v751
  %v1892 = vpop.f32.mrb[0].mxu0
  %v1893 = vadd.f32 %v285, %v1892
  %v1894 = vpop.f32.mrb[0].mxu0
  %1895 = vmatprep.mubr.f32.mxu0 0.0
  %1896 = vmatmul.mubr.f32.gmra.mrb[0].mxu0 %v754
  %v1897 = vpop.f32.mrb[0].mxu0
  %v1898 = vadd.f32 %v285, %v1897
  %v1899 = vpop.f32.mrb[0].mxu0
  %1900 = vmatprep.mubr.f32.mxu0 0.0
  %1901 = vmatmul.mubr.f32.gmra.mrb[0].mxu0 %v757
  %v1902 = vpop.f32.mrb[0].mxu0
  %v1903 = vadd.f32 %v285, %v1902
  %v1904 = vpop.f32.mrb[0].mxu0
  %1905 = vmatprep.mubr.f32.mxu0 0.0
  %1906 = vmatmul.mubr.f32.gmra.mrb[0].mxu0 %v760
  %v1907 = vpop.f32.mrb[0].mxu0
  %v1908 = vadd.f32 %v285, %v1907
  %v1909 = vpop.f32.mrb[0].mxu0
  %1910 = vmatprep.mubr.f32.mxu0 0.0
  %1911 = vmatmul.mubr.f32.gmra.mrb[0].mxu0 %v763
  %v1912 = vpop.f32.mrb[0].mxu0
  %v1913 = vadd.f32 %v285, %v1912
  %v1914 = vpop.f32.mrb[0].mxu0
  %1915 = vmatprep.mubr.f32.mxu0 0.0
  %1916 = vmatmul.mubr.f32.gmra.mrb[0].mxu0 %v766
  %v1917 = vpop.f32.mrb[0].mxu0
  %v1918 = vadd.f32 %v285, %v1917
  %v1919 = vpop.f32.mrb[0].mxu0
  %1920 = vmatprep.mubr.f32.mxu0 0.0
  %1921 = vmatmul.mubr.f32.gmra.mrb[0].mxu0 %v769
  %v1922 = vpop.f32.mrb[0].mxu0
  %v1923 = vadd.f32 %v285, %v1922
  %v1924 = vpop.f32.mrb[0].mxu0
  %1925 = vmatprep.mubr.f32.mxu0 0.0
  %1926 = vmatmul.mubr.f32.gmra.mrb[0].mxu0 %v772
  %v1927 = vpop.f32.mrb[0].mxu0
  %v1928 = vadd.f32 %v285, %v1927
  %v1929 = vpop.f32.mrb[0].mxu0
  %1930 = vmatprep.mubr.f32.mxu0 0.0
  %1931 = vmatmul.mubr.f32.gmra.mrb[0].mxu0 %v775
  %v1932 = vpop.f32.mrb[0].mxu0
  %v1933 = vadd.f32 %v285, %v1932
  %v1934 = vpop.f32.mrb[0].mxu0
  %1935 = vmatprep.mubr.f32.mxu0 0.0
  %1936 = vmatmul.mubr.f32.gmra.mrb[0].mxu0 %v778
  %v1937 = vpop.f32.mrb[0].mxu0
  %v1938 = vadd.f32 %v285, %v1937
  %v1939 = vpop.f32.mrb[0].mxu0
  %1940 = vmatprep.mubr.f32.mxu0 0.0
  %1941 = vmatmul.mubr.f32.gmra.mrb[0].mxu0 %v781
  %v1942 = vpop.f32.mrb[0].mxu0
  %v1943 = vadd.f32 %v285, %v1942
  %v1944 = vpop.f32.mrb[0].mxu0
  %1945 = vmatprep.mubr.f32.mxu0 0.0
  %1946 = vmatmul.mubr.f32.gmra.mrb[0].mxu0 %v784
  %v1947 = vpop.f32.mrb[0].mxu0
  %v1948 = vadd.f32 %v285, %v1947
  %v1949 = vpop.f32.mrb[0].mxu0
  %1950 = vmatprep.mubr.f32.mxu0 0.0
  %1951 = vmatmul.mubr.f32.gmra.mrb[0].mxu0 %v787
  %v1952 = vpop.f32.mrb[0].mxu0
  %v1953 = vadd.f32 %v285, %v1952
  %v1954 = vpop.f32.mrb[0].mxu0
  %1955 = vmatprep.mubr.f32.mxu0 0.0
  %1956 = vmatmul.mubr.f32.gmra.mrb[0].mxu0 %v790
  %v1957 = vpop.f32.mrb[0].mxu0
  %v1958 = vadd.f32 %v285, %v1957
  %v1959 = vpop.f32.mrb[0].mxu0
  %1960 = vmatprep.mubr.f32.mxu0 0.0
  %1961 = vmatmul.mubr.f32.gmra.mrb[0].mxu0 %v793
  %v1962 = vpop.f32.mrb[0].mxu0
  %v1963 = vadd.f32 %v285, %v1962
  %v1964 = vpop.f32.mrb[0].mxu0
  %1965 = vmatprep.mubr.f32.mxu0 0.0
  %1966 = vmatmul.mubr.f32.gmra.mrb[0].mxu0 %v796
  %v1967 = vpop.f32.mrb[0].mxu0
  %v1968 = vadd.f32 %v285, %v1967
  %v1969 = vpop.f32.mrb[0].mxu0
  %1970 = vmatprep.mubr.f32.mxu0 0.0
  %1971 = vmatmul.mubr.f32.gmra.mrb[0].mxu0 %v799
  %v1972 = vpop.f32.mrb[0].mxu0
  %v1973 = vadd.f32 %v285, %v1972
  %v1974 = vpop.f32.mrb[0].mxu0
  %1975 = vmatprep.mubr.f32.mxu0 0.0
  %1976 = vmatmul.mubr.f32.gmra.mrb[0].mxu0 %v802
  %v1977 = vpop.f32.mrb[0].mxu0
  %v1978 = vadd.f32 %v285, %v1977
  %v1979 = vpop.f32.mrb[0].mxu0
  %1980 = vmatprep.mubr.f32.mxu0 0.0
  %1981 = vmatmul.mubr.f32.gmra.mrb[0].mxu0 %v805
  %v1982 = vpop.f32.mrb[0].mxu0
  %v1983 = vadd.f32 %v285, %v1982
  %v1984 = vpop.f32.mrb[0].mxu0
  %1985 = vmatprep.mubr.f32.mxu0 0.0
  %1986 = vmatmul.mubr.f32.gmra.mrb[0].mxu0 %v808
  %v1987 = vpop.f32.mrb[0].mxu0
  %v1988 = vadd.f32 %v285, %v1987
  %v1989 = vpop.f32.mrb[0].mxu0
  %1990 = vmatprep.mubr.f32.mxu0 0.0
  %1991 = vmatmul.mubr.f32.gmra.mrb[0].mxu0 %v811
  %v1992 = vpop.f32.mrb[0].mxu0
  %v1993 = vadd.f32 %v285, %v1992
  %v1994 = vpop.f32.mrb[0].mxu0
  %1995 = vmatprep.mubr.f32.mxu0 0.0
  %1996 = vmatmul.mubr.f32.gmra.mrb[0].mxu0 %v814
  %v1997 = vpop.f32.mrb[0].mxu0
  %v1998 = vadd.f32 %v285, %v1997
  %v1999 = vpop.f32.mrb[0].mxu0
  %2000 = vmatprep.mubr.f32.mxu0 0.0
  %2001 = vmatmul.mubr.f32.gmra.mrb[0].mxu0 %v817
  %v2002 = vpop.f32.mrb[0].mxu0
  %v2003 = vadd.f32 %v285, %v2002
  %v2004 = vpop.f32.mrb[0].mxu0
  %2005 = vmatprep.mubr.f32.mxu0 0.0
  %2006 = vmatmul.mubr.f32.gmra.mrb[0].mxu0 %v820
  %v2007 = vpop.f32.mrb[0].mxu0
  %v2008 = vadd.f32 %v285, %v2007
  %v2009 = vpop.f32.mrb[0].mxu0
  %2010 = vmatprep.mubr.f32.mxu0 0.0
  %2011 = vmatmul.mubr.f32.gmra.mrb[0].mxu0 %v823
  %v2012 = vpop.f32.mrb[0].mxu0
  %v2013 = vadd.f32 %v285, %v2012
  %v2014 = vpop.f32.mrb[0].mxu0
  %2015 = vmatprep.mubr.f32.mxu0 0.0
  %2016 = vmatmul.mubr.f32.gmra.mrb[0].mxu0 %v826
  %v2017 = vpop.f32.mrb[0].mxu0
  %v2018 = vadd.f32 %v285, %v2017
  %v2019 = vpop.f32.mrb[0].mxu0
  %2020 = vmatprep.mubr.f32.mxu0 0.0
  %2021 = vmatmul.mubr.f32.gmra.mrb[0].mxu0 %v829
  %v2022 = vpop.f32.mrb[0].mxu0
  %v2023 = vadd.f32 %v285, %v2022
  %v2024 = vpop.f32.mrb[0].mxu0
  %2025 = vmatprep.mubr.f32.mxu0 0.0
  %2026 = vmatmul.mubr.f32.gmra.mrb[0].mxu0 %v832
  %v2027 = vpop.f32.mrb[0].mxu0
  %v2028 = vadd.f32 %v285, %v2027
  %v2029 = vpop.f32.mrb[0].mxu0
  %2030 = vmatprep.mubr.f32.mxu0 0.0
  %2031 = vmatmul.mubr.f32.gmra.mrb[0].mxu0 %v835
  %v2032 = vpop.f32.mrb[0].mxu0
  %v2033 = vadd.f32 %v285, %v2032
  %v2034 = vpop.f32.mrb[0].mxu0
  %2035 = vmatprep.mubr.f32.mxu0 0.0
  %2036 = vmatmul.mubr.f32.gmra.mrb[0].mxu0 %v838
  %v2037 = vpop.f32.mrb[0].mxu0
  %v2038 = vadd.f32 %v285, %v2037
  %v2039 = vpop.f32.mrb[0].mxu0
  %2040 = vmatprep.mubr.f32.mxu0 0.0
  %2041 = vmatmul.mubr.f32.gmra.mrb[0].mxu0 %v841
  %v2042 = vpop.f32.mrb[0].mxu0
  %v2043 = vadd.f32 %v285, %v2042
  %v2044 = vpop.f32.mrb[0].mxu0
  %2045 = vmatprep.mubr.f32.mxu0 0.0
  %2046 = vmatmul.mubr.f32.gmra.mrb[0].mxu0 %v844
  %v2047 = vpop.f32.mrb[0].mxu0
  %v2048 = vadd.f32 %v285, %v2047
  %v2049 = vpop.f32.mrb[0].mxu0
  %2050 = vmatprep.mubr.f32.mxu0 0.0
  %2051 = vmatmul.mubr.f32.gmra.mrb[0].mxu0 %v847
  %v2052 = vpop.f32.mrb[0].mxu0
  %v2053 = vadd.f32 %v285, %v2052
  %v2054 = vpop.f32.mrb[0].mxu0
  %2055 = vmatprep.mubr.f32.mxu0 0.0
  %2056 = vmatmul.mubr.f32.gmra.mrb[0].mxu0 %v850
  %v2057 = vpop.f32.mrb[0].mxu0
  %v2058 = vadd.f32 %v285, %v2057
  %v2059 = vpop.f32.mrb[0].mxu0
  %2060 = vmatprep.mubr.f32.mxu0 0.0
  %2061 = vmatmul.mubr.f32.gmra.mrb[0].mxu0 %v853
  %v2062 = vpop.f32.mrb[0].mxu0
  %v2063 = vadd.f32 %v285, %v2062
  %v2064 = vpop.f32.mrb[0].mxu0
  %2065 = vmatprep.mubr.f32.mxu0 0.0
  %2066 = vmatmul.mubr.f32.gmra.mrb[0].mxu0 %v856
  %v2067 = vpop.f32.mrb[0].mxu0
  %v2068 = vadd.f32 %v285, %v2067
  %v2069 = vpop.f32.mrb[0].mxu0
  %2070 = vmatprep.mubr.f32.mxu0 0.0
  %2071 = vmatmul.mubr.f32.gmra.mrb[0].mxu0 %v859
  %v2072 = vpop.f32.mrb[0].mxu0
  %v2073 = vadd.f32 %v285, %v2072
  %v2074 = vpop.f32.mrb[0].mxu0
  %2075 = vmatprep.mubr.f32.mxu0 0.0
  %2076 = vmatmul.mubr.f32.gmra.mrb[0].mxu0 %v862
  %v2077 = vpop.f32.mrb[0].mxu0
  %v2078 = vadd.f32 %v285, %v2077
  %v2079 = vpop.f32.mrb[0].mxu0
  %2080 = vmatprep.mubr.f32.mxu0 0.0
  %2081 = vmatmul.mubr.f32.gmra.mrb[0].mxu0 %v865
  %v2082 = vpop.f32.mrb[0].mxu0
  %v2083 = vadd.f32 %v285, %v2082
  %v2084 = vpop.f32.mrb[0].mxu0
  %2085 = vmatprep.mubr.f32.mxu0 0.0
  %2086 = vmatmul.mubr.f32.gmra.mrb[0].mxu0 %v868
  %v2087 = vpop.f32.mrb[0].mxu0
  %v2088 = vadd.f32 %v285, %v2087
  %v2089 = vpop.f32.mrb[0].mxu0
  %2090 = vmatprep.mubr.f32.mxu0 0.0
  %2091 = vmatmul.mubr.f32.gmra.mrb[0].mxu0 %v871
  %v2092 = vpop.f32.mrb[0].mxu0
  %v2093 = vadd.f32 %v285, %v2092
  %v2094 = vpop.f32.mrb[0].mxu0
  %2095 = vmatprep.mubr.f32.mxu0 0.0
  %2096 = vmatmul.mubr.f32.gmra.mrb[0].mxu0 %v874
  %v2097 = vpop.f32.mrb[0].mxu0
  %v2098 = vadd.f32 %v285, %v2097
  %v2099 = vpop.f32.mrb[0].mxu0
  %2100 = vmatprep.mubr.f32.mxu0 0.0
  %2101 = vmatmul.mubr.f32.gmra.mrb[0].mxu0 %v877
  %v2102 = vpop.f32.mrb[0].mxu0
  %v2103 = vadd.f32 %v285, %v2102
  %v2104 = vpop.f32.mrb[0].mxu0
  %2105 = vmatprep.mubr.f32.mxu0 0.0
  %2106 = vmatmul.mubr.f32.gmra.mrb[0].mxu0 %v880
  %v2107 = vpop.f32.mrb[0].mxu0
  %v2108 = vadd.f32 %v285, %v2107
  %v2109 = vpop.f32.mrb[0].mxu0
  %2110 = vmatprep.mubr.f32.mxu0 0.0
  %2111 = vmatmul.mubr.f32.gmra.mrb[0].mxu0 %v883
  %v2112 = vpop.f32.mrb[0].mxu0
  %v2113 = vadd.f32 %v285, %v2112
  %v2114 = vpop.f32.mrb[0].mxu0
  %2115 = vmatprep.mubr.f32.mxu0 0.0
  %2116 = vmatmul.mubr.f32.gmra.mrb[0].mxu0 %v886
  %v2117 = vpop.f32.mrb[0].mxu0
  %v2118 = vadd.f32 %v285, %v2117
  %v2119 = vpop.f32.mrb[0].mxu0
  %2120 = vmatprep.mubr.f32.mxu0 0.0
  %2121 = vmatmul.mubr.f32.gmra.mrb[0].mxu0 %v889
  %v2122 = vpop.f32.mrb[0].mxu0
  %v2123 = vadd.f32 %v285, %v2122
  %v2124 = vpop.f32.mrb[0].mxu0
  %2125 = vmatprep.mubr.f32.mxu0 0.0
  %2126 = vmatmul.mubr.f32.gmra.mrb[0].mxu0 %v892
  %v2127 = vpop.f32.mrb[0].mxu0
  %v2128 = vadd.f32 %v285, %v2127
  %v2129 = vpop.f32.mrb[0].mxu0
  %2130 = vmatprep.mubr.f32.mxu0 0.0
  %2131 = vmatmul.mubr.f32.gmra.mrb[0].mxu0 %v895
  %v2132 = vpop.f32.mrb[0].mxu0
  %v2133 = vadd.f32 %v285, %v2132
  %v2134 = vpop.f32.mrb[0].mxu0
  %2135 = vmatprep.mubr.f32.mxu0 0.0
  %2136 = vmatmul.mubr.f32.gmra.mrb[0].mxu0 %v898
  %v2137 = vpop.f32.mrb[0].mxu0
  %v2138 = vadd.f32 %v285, %v2137
  %v2139 = vpop.f32.mrb[0].mxu0
  %2140 = vmatprep.mubr.f32.mxu0 0.0
  %2141 = vmatmul.mubr.f32.gmra.mrb[0].mxu0 %v901
  %v2142 = vpop.f32.mrb[0].mxu0
  %v2143 = vadd.f32 %v285, %v2142
  %v2144 = vpop.f32.mrb[0].mxu0
  %2145 = vmatprep.mubr.f32.mxu0 0.0
  %2146 = vmatmul.mubr.f32.gmra.mrb[0].mxu0 %v904
  %v2147 = vpop.f32.mrb[0].mxu0
  %v2148 = vadd.f32 %v285, %v2147
  %v2149 = vpop.f32.mrb[0].mxu0
  %2150 = vmatprep.mubr.f32.mxu0 0.0
  %2151 = vmatmul.mubr.f32.gmra.mrb[0].mxu0 %v907
  %v2152 = vpop.f32.mrb[0].mxu0
  %v2153 = vadd.f32 %v285, %v2152
  %v2154 = vpop.f32.mrb[0].mxu0
  %2155 = vmatprep.mubr.f32.mxu0 0.0
  %2156 = vmatmul.mubr.f32.gmra.mrb[0].mxu0 %v910
  %v2157 = vpop.f32.mrb[0].mxu0
  %v2158 = vadd.f32 %v285, %v2157
  %v2159 = vpop.f32.mrb[0].mxu0
  %2160 = vmatprep.mubr.f32.mxu0 0.0
  %2161 = vmatmul.mubr.f32.gmra.mrb[0].mxu0 %v913
  %v2162 = vpop.f32.mrb[0].mxu0
  %v2163 = vadd.f32 %v285, %v2162
  %v2164 = vpop.f32.mrb[0].mxu0
  %2165 = vmatprep.mubr.f32.mxu0 0.0
  %2166 = vmatmul.mubr.f32.gmra.mrb[0].mxu0 %v916
  %v2167 = vpop.f32.mrb[0].mxu0
  %v2168 = vadd.f32 %v285, %v2167
  %v2169 = vpop.f32.mrb[0].mxu0
  %2170 = vmatprep.mubr.f32.mxu0 0.0
  %2171 = vmatmul.mubr.f32.gmra.mrb[0].mxu0 %v919
  %v2172 = vpop.f32.mrb[0].mxu0
  %v2173 = vadd.f32 %v285, %v2172
  %v2174 = vpop.f32.mrb[0].mxu0
  %2175 = vmatprep.mubr.f32.mxu0 0.0
  %2176 = vmatmul.mubr.f32.gmra.mrb[0].mxu0 %v922
  %v2177 = vpop.f32.mrb[0].mxu0
  %v2178 = vadd.f32 %v285, %v2177
  %v2179 = vpop.f32.mrb[0].mxu0
  %2180 = vmatprep.mubr.f32.mxu0 0.0
  %2181 = vmatmul.mubr.f32.gmra.mrb[0].mxu0 %v925
  %v2182 = vpop.f32.mrb[0].mxu0
  %v2183 = vadd.f32 %v285, %v2182
  %v2184 = vpop.f32.mrb[0].mxu0
  %2185 = vmatprep.mubr.f32.mxu0 0.0
  %2186 = vmatmul.mubr.f32.gmra.mrb[0].mxu0 %v928
  %v2187 = vpop.f32.mrb[0].mxu0
  %v2188 = vadd.f32 %v285, %v2187
  %v2189 = vpop.f32.mrb[0].mxu0
  %2190 = vmatprep.mubr.f32.mxu0 0.0
  %2191 = vmatmul.mubr.f32.gmra.mrb[0].mxu0 %v931
  %v2192 = vpop.f32.mrb[0].mxu0
  %v2193 = vadd.f32 %v285, %v2192
  %v2194 = vpop.f32.mrb[0].mxu0
  %2195 = vmatprep.mubr.f32.mxu0 0.0
  %2196 = vmatmul.mubr.f32.gmra.mrb[0].mxu0 %v934
  %v2197 = vpop.f32.mrb[0].mxu0
  %v2198 = vadd.f32 %v285, %v2197
  %v2199 = vpop.f32.mrb[0].mxu0
  %2200 = vmatprep.mubr.f32.mxu0 0.0
  %2201 = vmatmul.mubr.f32.gmra.mrb[0].mxu0 %v937
  %v2202 = vpop.f32.mrb[0].mxu0
  %v2203 = vadd.f32 %v285, %v2202
  %v2204 = vpop.f32.mrb[0].mxu0
  %2205 = vmatprep.mubr.f32.mxu0 0.0
  %2206 = vmatmul.mubr.f32.gmra.mrb[0].mxu0 %v940
  %v2207 = vpop.f32.mrb[0].mxu0
  %v2208 = vadd.f32 %v285, %v2207
  %v2209 = vpop.f32.mrb[0].mxu0
  %2210 = vmatprep.mubr.f32.mxu0 0.0
  %2211 = vmatmul.mubr.f32.gmra.mrb[0].mxu0 %v943
  %v2212 = vpop.f32.mrb[0].mxu0
  %v2213 = vadd.f32 %v285, %v2212
  %v2214 = vpop.f32.mrb[0].mxu0
  %2215 = vmatprep.mubr.f32.mxu0 0.0
  %2216 = vmatmul.mubr.f32.gmra.mrb[0].mxu0 %v946
  %v2217 = vpop.f32.mrb[0].mxu0
  %v2218 = vadd.f32 %v285, %v2217
  %v2219 = vpop.f32.mrb[0].mxu0
  %2220 = vmatprep.mubr.f32.mxu0 0.0
  %2221 = vmatmul.mubr.f32.gmra.mrb[0].mxu0 %v949
  %v2222 = vpop.f32.mrb[0].mxu0
  %v2223 = vadd.f32 %v285, %v2222
  %v2224 = vpop.f32.mrb[0].mxu0
  %2225 = vmatprep.mubr.f32.mxu0 0.0
  %2226 = vmatmul.mubr.f32.gmra.mrb[0].mxu0 %v952
  %v2227 = vpop.f32.mrb[0].mxu0
  %v2228 = vadd.f32 %v285, %v2227
  %v2229 = vpop.f32.mrb[0].mxu0
  %2230 = vmatprep.mubr.f32.mxu0 0.0
  %2231 = vmatmul.mubr.f32.gmra.mrb[0].mxu0 %v955
  %v2232 = vpop.f32.mrb[0].mxu0
  %v2233 = vadd.f32 %v285, %v2232
  %v2234 = vpop.f32.mrb[0].mxu0
  %2235 = vmatprep.mubr.f32.mxu0 0.0
  %2236 = vmatmul.mubr.f32.gmra.mrb[0].mxu0 %v958
  %v2237 = vpop.f32.mrb[0].mxu0
  %v2238 = vadd.f32 %v285, %v2237
  %v2239 = vpop.f32.mrb[0].mxu0
  %2240 = vmatprep.mubr.f32.mxu0 0.0
  %2241 = vmatmul.mubr.f32.gmra.mrb[0].mxu0 %v961
  %v2242 = vpop.f32.mrb[0].mxu0
  %v2243 = vadd.f32 %v285, %v2242
  %v2244 = vpop.f32.mrb[0].mxu0
  %2245 = vmatprep.mubr.f32.mxu0 0.0
  %2246 = vmatmul.mubr.f32.gmra.mrb[0].mxu0 %v964
  %v2247 = vpop.f32.mrb[0].mxu0
  %v2248 = vadd.f32 %v285, %v2247
  %v2249 = vpop.f32.mrb[0].mxu0
  %2250 = vmatprep.mubr.f32.mxu0 0.0
  %2251 = vmatmul.mubr.f32.gmra.mrb[0].mxu0 %v967
  %v2252 = vpop.f32.mrb[0].mxu0
  %v2253 = vadd.f32 %v285, %v2252
  %v2254 = vpop.f32.mrb[0].mxu0
  %2255 = vmatprep.mubr.f32.mxu0 0.0
  %2256 = vmatmul.mubr.f32.gmra.mrb[0].mxu0 %v970
  %v2257 = vpop.f32.mrb[0].mxu0
  %v2258 = vadd.f32 %v285, %v2257
  %v2259 = vpop.f32.mrb[0].mxu0
  %2260 = vmatprep.mubr.f32.mxu0 0.0
  %2261 = vmatmul.mubr.f32.gmra.mrb[0].mxu0 %v973
  %v2262 = vpop.f32.mrb[0].mxu0
  %v2263 = vadd.f32 %v285, %v2262
  %v2264 = vpop.f32.mrb[0].mxu0
  %2265 = vmatprep.mubr.f32.mxu0 0.0
  %2266 = vmatmul.mubr.f32.gmra.mrb[0].mxu0 %v976
  %v2267 = vpop.f32.mrb[0].mxu0
  %v2268 = vadd.f32 %v285, %v2267
  %v2269 = vpop.f32.mrb[0].mxu0
  %2270 = vmatprep.mubr.f32.mxu0 0.0
  %2271 = vmatmul.mubr.f32.gmra.mrb[0].mxu0 %v979
  %v2272 = vpop.f32.mrb[0].mxu0
  %v2273 = vadd.f32 %v285, %v2272
  %v2274 = vpop.f32.mrb[0].mxu0
  %2275 = vmatprep.mubr.f32.mxu0 0.0
  %2276 = vmatmul.mubr.f32.gmra.mrb[0].mxu0 %v982
  %v2277 = vpop.f32.mrb[0].mxu0
  %v2278 = vadd.f32 %v285, %v2277
  %v2279 = vpop.f32.mrb[0].mxu0
  %2280 = vmatprep.mubr.f32.mxu0 0.0
  %2281 = vmatmul.mubr.f32.gmra.mrb[0].mxu0 %v985
  %v2282 = vpop.f32.mrb[0].mxu0
  %v2283 = vadd.f32 %v285, %v2282
  %v2284 = vpop.f32.mrb[0].mxu0
  %2285 = vmatprep.mubr.f32.mxu0 0.0
  %2286 = vmatmul.mubr.f32.gmra.mrb[0].mxu0 %v988
  %v2287 = vpop.f32.mrb[0].mxu0
  %v2288 = vadd.f32 %v285, %v2287
  %v2289 = vpop.f32.mrb[0].mxu0
  %2290 = vmatprep.mubr.f32.mxu0 0.0
  %2291 = vmatmul.mubr.f32.gmra.mrb[0].mxu0 %v991
  %v2292 = vpop.f32.mrb[0].mxu0
  %v2293 = vadd.f32 %v285, %v2292
  %v2294 = vpop.f32.mrb[0].mxu0
  %2295 = vmatprep.mubr.f32.mxu0 0.0
  %2296 = vmatmul.mubr.f32.gmra.mrb[0].mxu0 %v994
  %v2297 = vpop.f32.mrb[0].mxu0
  %v2298 = vadd.f32 %v285, %v2297
  %v2299 = vpop.f32.mrb[0].mxu0
  %2300 = vmatprep.mubr.f32.mxu0 0.0
  %2301 = vmatmul.mubr.f32.gmra.mrb[0].mxu0 %v997
  %v2302 = vpop.f32.mrb[0].mxu0
  %v2303 = vadd.f32 %v285, %v2302
  %v2304 = vpop.f32.mrb[0].mxu0
  %2305 = vmatprep.mubr.f32.mxu0 0.0
  %2306 = vmatmul.mubr.f32.gmra.mrb[0].mxu0 %v1000
  %v2307 = vpop.f32.mrb[0].mxu0
  %v2308 = vadd.f32 %v285, %v2307
  %v2309 = vpop.f32.mrb[0].mxu0
  %2310 = vmatprep.mubr.f32.mxu0 0.0
  %2311 = vmatmul.mubr.f32.gmra.mrb[0].mxu0 %v1003
  %v2312 = vpop.f32.mrb[0].mxu0
  %v2313 = vadd.f32 %v285, %v2312
  %v2314 = vpop.f32.mrb[0].mxu0
  %2315 = vmatprep.mubr.f32.mxu0 0.0
  %2316 = vmatmul.mubr.f32.gmra.mrb[0].mxu0 %v1006
  %v2317 = vpop.f32.mrb[0].mxu0
  %v2318 = vadd.f32 %v285, %v2317
  %v2319 = vpop.f32.mrb[0].mxu0
  %2320 = vmatprep.mubr.f32.mxu0 0.0
  %2321 = vmatmul.mubr.f32.gmra.mrb[0].mxu0 %v1009
  %v2322 = vpop.f32.mrb[0].mxu0
  %v2323 = vadd.f32 %v285, %v2322
  %v2324 = vpop.f32.mrb[0].mxu0
  %2325 = vmatprep.mubr.f32.mxu0 0.0
  %2326 = vmatmul.mubr.f32.gmra.mrb[0].mxu0 %v1012
  %v2327 = vpop.f32.mrb[0].mxu0
  %v2328 = vadd.f32 %v285, %v2327
  %v2329 = vpop.f32.mrb[0].mxu0
  %2330 = vmatprep.mubr.f32.mxu0 0.0
  %2331 = vmatmul.mubr.f32.gmra.mrb[0].mxu0 %v1015
  %v2332 = vpop.f32.mrb[0].mxu0
  %v2333 = vadd.f32 %v285, %v2332
  %v2334 = vpop.f32.mrb[0].mxu0
  %2335 = vmatprep.mubr.f32.mxu0 0.0
  %2336 = vmatmul.mubr.f32.gmra.mrb[0].mxu0 %v1018
  %v2337 = vpop.f32.mrb[0].mxu0
  %v2338 = vadd.f32 %v285, %v2337
  %v2339 = vpop.f32.mrb[0].mxu0
  %2340 = vmatprep.mubr.f32.mxu0 0.0
  %2341 = vmatmul.mubr.f32.gmra.mrb[0].mxu0 %v1021
  %v2342 = vpop.f32.mrb[0].mxu0
  %v2343 = vadd.f32 %v285, %v2342
  %v2344 = vpop.f32.mrb[0].mxu0
  %2345 = vmatprep.mubr.f32.mxu0 0.0
  %2346 = vmatmul.mubr.f32.gmra.mrb[0].mxu0 %v1024
  %v2347 = vpop.f32.mrb[0].mxu0
  %v2348 = vadd.f32 %v285, %v2347
  %v2349 = vpop.f32.mrb[0].mxu0
  %2350 = vmatprep.mubr.f32.mxu0 0.0
  %2351 = vmatmul.mubr.f32.gmra.mrb[0].mxu0 %v1027
  %v2352 = vpop.f32.mrb[0].mxu0
  %v2353 = vadd.f32 %v285, %v2352
  %v2354 = vpop.f32.mrb[0].mxu0
  %2355 = vmatprep.mubr.f32.mxu0 0.0
  %2356 = vmatmul.mubr.f32.gmra.mrb[0].mxu0 %v1030
  %v2357 = vpop.f32.mrb[0].mxu0
  %v2358 = vadd.f32 %v285, %v2357
  %v2359 = vpop.f32.mrb[0].mxu0
  %2360 = vmatprep.mubr.f32.mxu0 0.0
  %2361 = vmatmul.mubr.f32.gmra.mrb[0].mxu0 %v1033
  %v2362 = vpop.f32.mrb[0].mxu0
  %v2363 = vadd.f32 %v285, %v2362
  %v2364 = vpop.f32.mrb[0].mxu0
  %2365 = vmatprep.mubr.f32.mxu0 0.0
  %2366 = vmatmul.mubr.f32.gmra.mrb[0].mxu0 %v1036
  %v2367 = vpop.f32.mrb[0].mxu0
  %v2368 = vadd.f32 %v285, %v2367
  %v2369 = vpop.f32.mrb[0].mxu0
  %2370 = vmatprep.mubr.f32.mxu0 0.0
  %2371 = vmatmul.mubr.f32.gmra.mrb[0].mxu0 %v1039
  %v2372 = vpop.f32.mrb[0].mxu0
  %v2373 = vadd.f32 %v285, %v2372
  %v2374 = vpop.f32.mrb[0].mxu0
  %2375 = vmatprep.mubr.f32.mxu0 0.0
  %2376 = vmatmul.mubr.f32.gmra.mrb[0].mxu0 %v1042
  %v2377 = vpop.f32.mrb[0].mxu0
  %v2378 = vadd.f32 %v285, %v2377
  %v2379 = vpop.f32.mrb[0].mxu0
  %2380 = vmatprep.mubr.f32.mxu0 0.0
  %2381 = vmatmul.mubr.f32.gmra.mrb[0].mxu0 %v1045
  %v2382 = vpop.f32.mrb[0].mxu0
  %v2383 = vadd.f32 %v285, %v2382
  %v2384 = vpop.f32.mrb[0].mxu0
  %2385 = vmatprep.mubr.f32.mxu0 0.0
  %2386 = vmatmul.mubr.f32.gmra.mrb[0].mxu0 %v1048
  %v2387 = vpop.f32.mrb[0].mxu0
  %v2388 = vadd.f32 %v285, %v2387
  %v2389 = vpop.f32.mrb[0].mxu0
  %2390 = vmatprep.mubr.f32.mxu0 0.0
  %2391 = vmatmul.mubr.f32.gmra.mrb[0].mxu0 %v1051
  %v2392 = vpop.f32.mrb[0].mxu0
  %v2393 = vadd.f32 %v285, %v2392
  %v2394 = vpop.f32.mrb[0].mxu0
  %2395 = vmatprep.mubr.f32.mxu0 0.0
  %2396 = vmatmul.mubr.f32.gmra.mrb[0].mxu0 %v1054
  %v2397 = vpop.f32.mrb[0].mxu0
  %v2398 = vadd.f32 %v285, %v2397
  %v2399 = vpop.f32.mrb[0].mxu0
  %2400 = vdwg.mxu0
  %v2401 = vmul.f32 %v1123, 0.2
  %v2402 = vmul.f32 %v1128, 0.2
  %v2403 = vmul.f32 %v1133, 0.2
  %v2404 = vmul.f32 %v1138, 0.2
  %v2405 = vmul.f32 %v1143, 0.2
  %v2406 = vmul.f32 %v1148, 0.2
  %v2407 = vmul.f32 %v1153, 0.2
  %v2408 = vmul.f32 %v1158, 0.2
  %v2409 = vmul.f32 %v1163, 0.2
  %v2410 = vmul.f32 %v1168, 0.2
  %v2411 = vmul.f32 %v1173, 0.2
  %v2412 = vmul.f32 %v1178, 0.2
  %v2413 = vmul.f32 %v1183, 0.2
  %v2414 = vmul.f32 %v1188, 0.2
  %v2415 = vmul.f32 %v1193, 0.2
  %v2416 = vmul.f32 %v1198, 0.2
  %v2417 = vmul.f32 %v1203, 0.2
  %v2418 = vmul.f32 %v1208, 0.2
  %v2419 = vmul.f32 %v1213, 0.2
  %v2420 = vmul.f32 %v1218, 0.2
  %v2421 = vmul.f32 %v1223, 0.2
  %v2422 = vmul.f32 %v1228, 0.2
  %v2423 = vmul.f32 %v1233, 0.2
  %v2424 = vmul.f32 %v1238, 0.2
  %v2425 = vmul.f32 %v1243, 0.2
  %v2426 = vmul.f32 %v1248, 0.2
  %v2427 = vmul.f32 %v1253, 0.2
  %v2428 = vmul.f32 %v1258, 0.2
  %v2429 = vmul.f32 %v1263, 0.2
  %v2430 = vmul.f32 %v1268, 0.2
  %v2431 = vmul.f32 %v1273, 0.2
  %v2432 = vmul.f32 %v1278, 0.2
  %v2433 = vmul.f32 %v1283, 0.2
  %v2434 = vmul.f32 %v1288, 0.2
  %v2435 = vmul.f32 %v1293, 0.2
  %v2436 = vmul.f32 %v1298, 0.2
  %v2437 = vmul.f32 %v1303, 0.2
  %v2438 = vmul.f32 %v1308, 0.2
  %v2439 = vmul.f32 %v1313, 0.2
  %v2440 = vmul.f32 %v1318, 0.2
  %v2441 = vmul.f32 %v1323, 0.2
  %v2442 = vmul.f32 %v1328, 0.2
  %v2443 = vmul.f32 %v1333, 0.2
  %v2444 = vmul.f32 %v1338, 0.2
  %v2445 = vmul.f32 %v1343, 0.2
  %v2446 = vmul.f32 %v1348, 0.2
  %v2447 = vmul.f32 %v1353, 0.2
  %v2448 = vmul.f32 %v1358, 0.2
  %v2449 = vmul.f32 %v1363, 0.2
  %v2450 = vmul.f32 %v1368, 0.2
  %v2451 = vmul.f32 %v1373, 0.2
  %v2452 = vmul.f32 %v1378, 0.2
  %v2453 = vmul.f32 %v1383, 0.2
  %v2454 = vmul.f32 %v1388, 0.2
  %v2455 = vmul.f32 %v1393, 0.2
  %v2456 = vmul.f32 %v1398, 0.2
  %v2457 = vmul.f32 %v1403, 0.2
  %v2458 = vmul.f32 %v1408, 0.2
  %v2459 = vmul.f32 %v1413, 0.2
  %v2460 = vmul.f32 %v1418, 0.2
  %v2461 = vmul.f32 %v1423, 0.2
  %v2462 = vmul.f32 %v1428, 0.2
  %v2463 = vmul.f32 %v1433, 0.2
  %v2464 = vmul.f32 %v1438, 0.2
  %v2465 = vmul.f32 %v1443, 0.2
  %v2466 = vmul.f32 %v1448, 0.2
  %v2467 = vmul.f32 %v1453, 0.2
  %v2468 = vmul.f32 %v1458, 0.2
  %v2469 = vmul.f32 %v1463, 0.2
  %v2470 = vmul.f32 %v1468, 0.2
  %v2471 = vmul.f32 %v1473, 0.2
  %v2472 = vmul.f32 %v1478, 0.2
  %v2473 = vmul.f32 %v1483, 0.2
  %v2474 = vmul.f32 %v1488, 0.2
  %v2475 = vmul.f32 %v1493, 0.2
  %v2476 = vmul.f32 %v1498, 0.2
  %v2477 = vmul.f32 %v1503, 0.2
  %v2478 = vmul.f32 %v1508, 0.2
  %v2479 = vmul.f32 %v1513, 0.2
  %v2480 = vmul.f32 %v1518, 0.2
  %v2481 = vmul.f32 %v1523, 0.2
  %v2482 = vmul.f32 %v1528, 0.2
  %v2483 = vmul.f32 %v1533, 0.2
  %v2484 = vmul.f32 %v1538, 0.2
  %v2485 = vmul.f32 %v1543, 0.2
  %v2486 = vmul.f32 %v1548, 0.2
  %v2487 = vmul.f32 %v1553, 0.2
  %v2488 = vmul.f32 %v1558, 0.2
  %v2489 = vmul.f32 %v1563, 0.2
  %v2490 = vmul.f32 %v1568, 0.2
  %v2491 = vmul.f32 %v1573, 0.2
  %v2492 = vmul.f32 %v1578, 0.2
  %v2493 = vmul.f32 %v1583, 0.2
  %v2494 = vmul.f32 %v1588, 0.2
  %v2495 = vmul.f32 %v1593, 0.2
  %v2496 = vmul.f32 %v1598, 0.2
  %v2497 = vmul.f32 %v1603, 0.2
  %v2498 = vmul.f32 %v1608, 0.2
  %v2499 = vmul.f32 %v1613, 0.2
  %v2500 = vmul.f32 %v1618, 0.2
  %v2501 = vmul.f32 %v1623, 0.2
  %v2502 = vmul.f32 %v1628, 0.2
  %v2503 = vmul.f32 %v1633, 0.2
  %v2504 = vmul.f32 %v1638, 0.2
  %v2505 = vmul.f32 %v1643, 0.2
  %v2506 = vmul.f32 %v1648, 0.2
  %v2507 = vmul.f32 %v1653, 0.2
  %v2508 = vmul.f32 %v1658, 0.2
  %v2509 = vmul.f32 %v1663, 0.2
  %v2510 = vmul.f32 %v1668, 0.2
  %v2511 = vmul.f32 %v1673, 0.2
  %v2512 = vmul.f32 %v1678, 0.2
  %v2513 = vmul.f32 %v1683, 0.2
  %v2514 = vmul.f32 %v1688, 0.2
  %v2515 = vmul.f32 %v1693, 0.2
  %v2516 = vmul.f32 %v1698, 0.2
  %v2517 = vmul.f32 %v1703, 0.2
  %v2518 = vmul.f32 %v1708, 0.2
  %v2519 = vmul.f32 %v1713, 0.2
  %v2520 = vmul.f32 %v1718, 0.2
  %v2521 = vmul.f32 %v1723, 0.2
  %v2522 = vmul.f32 %v1728, 0.2
  %v2523 = vmul.f32 %v1733, 0.2
  %v2524 = vmul.f32 %v1738, 0.2
  %v2525 = vmul.f32 %v1743, 0.2
  %v2526 = vmul.f32 %v1748, 0.2
  %v2527 = vmul.f32 %v1753, 0.2
  %v2528 = vmul.f32 %v1758, 0.2
  %v2529 = vmul.f32 %v1763, 0.2
  %v2530 = vmul.f32 %v1768, 0.2
  %v2531 = vmul.f32 %v1773, 0.2
  %v2532 = vmul.f32 %v1778, 0.2
  %v2533 = vmul.f32 %v1783, 0.2
  %v2534 = vmul.f32 %v1788, 0.2
  %v2535 = vmul.f32 %v1793, 0.2
  %v2536 = vmul.f32 %v1798, 0.2
  %v2537 = vmul.f32 %v1803, 0.2
  %v2538 = vmul.f32 %v1808, 0.2
  %v2539 = vmul.f32 %v1813, 0.2
  %v2540 = vmul.f32 %v1818, 0.2
  %v2541 = vmul.f32 %v1823, 0.2
  %v2542 = vmul.f32 %v1828, 0.2
  %v2543 = vmul.f32 %v1833, 0.2
  %v2544 = vmul.f32 %v1838, 0.2
  %v2545 = vmul.f32 %v1843, 0.2
  %v2546 = vmul.f32 %v1848, 0.2
  %v2547 = vmul.f32 %v1853, 0.2
  %v2548 = vmul.f32 %v1858, 0.2
  %v2549 = vmul.f32 %v1863, 0.2
  %v2550 = vmul.f32 %v1868, 0.2
  %v2551 = vmul.f32 %v1873, 0.2
  %v2552 = vmul.f32 %v1878, 0.2
  %v2553 = vmul.f32 %v1883, 0.2
  %v2554 = vmul.f32 %v1888, 0.2
  %v2555 = vmul.f32 %v1893, 0.2
  %v2556 = vmul.f32 %v1898, 0.2
  %v2557 = vmul.f32 %v1903, 0.2
  %v2558 = vmul.f32 %v1908, 0.2
  %v2559 = vmul.f32 %v1913, 0.2
  %v2560 = vmul.f32 %v1918, 0.2
  %v2561 = vmul.f32 %v1923, 0.2
  %v2562 = vmul.f32 %v1928, 0.2
  %v2563 = vmul.f32 %v1933, 0.2
  %v2564 = vmul.f32 %v1938, 0.2
  %v2565 = vmul.f32 %v1943, 0.2
  %v2566 = vmul.f32 %v1948, 0.2
  %v2567 = vmul.f32 %v1953, 0.2
  %v2568 = vmul.f32 %v1958, 0.2
  %v2569 = vmul.f32 %v1963, 0.2
  %v2570 = vmul.f32 %v1968, 0.2
  %v2571 = vmul.f32 %v1973, 0.2
  %v2572 = vmul.f32 %v1978, 0.2
  %v2573 = vmul.f32 %v1983, 0.2
  %v2574 = vmul.f32 %v1988, 0.2
  %v2575 = vmul.f32 %v1993, 0.2
  %v2576 = vmul.f32 %v1998, 0.2
  %v2577 = vmul.f32 %v2003, 0.2
  %v2578 = vmul.f32 %v2008, 0.2
  %v2579 = vmul.f32 %v2013, 0.2
  %v2580 = vmul.f32 %v2018, 0.2
  %v2581 = vmul.f32 %v2023, 0.2
  %v2582 = vmul.f32 %v2028, 0.2
  %v2583 = vmul.f32 %v2033, 0.2
  %v2584 = vmul.f32 %v2038, 0.2
  %v2585 = vmul.f32 %v2043, 0.2
  %v2586 = vmul.f32 %v2048, 0.2
  %v2587 = vmul.f32 %v2053, 0.2
  %v2588 = vmul.f32 %v2058, 0.2
  %v2589 = vmul.f32 %v2063, 0.2
  %v2590 = vmul.f32 %v2068, 0.2
  %v2591 = vmul.f32 %v2073, 0.2
  %v2592 = vmul.f32 %v2078, 0.2
  %v2593 = vmul.f32 %v2083, 0.2
  %v2594 = vmul.f32 %v2088, 0.2
  %v2595 = vmul.f32 %v2093, 0.2
  %v2596 = vmul.f32 %v2098, 0.2
  %v2597 = vmul.f32 %v2103, 0.2
  %v2598 = vmul.f32 %v2108, 0.2
  %v2599 = vmul.f32 %v2113, 0.2
  %v2600 = vmul.f32 %v2118, 0.2
  %v2601 = vmul.f32 %v2123, 0.2
  %v2602 = vmul.f32 %v2128, 0.2
  %v2603 = vmul.f32 %v2133, 0.2
  %v2604 = vmul.f32 %v2138, 0.2
  %v2605 = vmul.f32 %v2143, 0.2
  %v2606 = vmul.f32 %v2148, 0.2
  %v2607 = vmul.f32 %v2153, 0.2
  %v2608 = vmul.f32 %v2158, 0.2
  %v2609 = vmul.f32 %v2163, 0.2
  %v2610 = vmul.f32 %v2168, 0.2
  %v2611 = vmul.f32 %v2173, 0.2
  %v2612 = vmul.f32 %v2178, 0.2
  %v2613 = vmul.f32 %v2183, 0.2
  %v2614 = vmul.f32 %v2188, 0.2
  %v2615 = vmul.f32 %v2193, 0.2
  %v2616 = vmul.f32 %v2198, 0.2
  %v2617 = vmul.f32 %v2203, 0.2
  %v2618 = vmul.f32 %v2208, 0.2
  %v2619 = vmul.f32 %v2213, 0.2
  %v2620 = vmul.f32 %v2218, 0.2
  %v2621 = vmul.f32 %v2223, 0.2
  %v2622 = vmul.f32 %v2228, 0.2
  %v2623 = vmul.f32 %v2233, 0.2
  %v2624 = vmul.f32 %v2238, 0.2
  %v2625 = vmul.f32 %v2243, 0.2
  %v2626 = vmul.f32 %v2248, 0.2
  %v2627 = vmul.f32 %v2253, 0.2
  %v2628 = vmul.f32 %v2258, 0.2
  %v2629 = vmul.f32 %v2263, 0.2
  %v2630 = vmul.f32 %v2268, 0.2
  %v2631 = vmul.f32 %v2273, 0.2
  %v2632 = vmul.f32 %v2278, 0.2
  %v2633 = vmul.f32 %v2283, 0.2
  %v2634 = vmul.f32 %v2288, 0.2
  %v2635 = vmul.f32 %v2293, 0.2
  %v2636 = vmul.f32 %v2298, 0.2
  %v2637 = vmul.f32 %v2303, 0.2
  %v2638 = vmul.f32 %v2308, 0.2
  %v2639 = vmul.f32 %v2313, 0.2
  %v2640 = vmul.f32 %v2318, 0.2
  %v2641 = vmul.f32 %v2323, 0.2
  %v2642 = vmul.f32 %v2328, 0.2
  %v2643 = vmul.f32 %v2333, 0.2
  %v2644 = vmul.f32 %v2338, 0.2
  %v2645 = vmul.f32 %v2343, 0.2
  %v2646 = vmul.f32 %v2348, 0.2
  %v2647 = vmul.f32 %v2353, 0.2
  %v2648 = vmul.f32 %v2358, 0.2
  %v2649 = vmul.f32 %v2363, 0.2
  %v2650 = vmul.f32 %v2368, 0.2
  %v2651 = vmul.f32 %v2373, 0.2
  %v2652 = vmul.f32 %v2378, 0.2
  %v2653 = vmul.f32 %v2383, 0.2
  %v2654 = vmul.f32 %v2388, 0.2
  %v2655 = vmul.f32 %v2393, 0.2
  %v2656 = vmul.f32 %v2398, 0.2
  %v2657 = vmax.f32 %v1123, %v2401
  %v2658 = vmax.f32 %v1128, %v2402
  %v2659 = vmax.f32 %v1133, %v2403
  %v2660 = vmax.f32 %v1138, %v2404
  %v2661 = vmax.f32 %v1143, %v2405
  %v2662 = vmax.f32 %v1148, %v2406
  %v2663 = vmax.f32 %v1153, %v2407
  %v2664 = vmax.f32 %v1158, %v2408
  %v2665 = vmax.f32 %v1163, %v2409
  %v2666 = vmax.f32 %v1168, %v2410
  %v2667 = vmax.f32 %v1173, %v2411
  %v2668 = vmax.f32 %v1178, %v2412
  %v2669 = vmax.f32 %v1183, %v2413
  %v2670 = vmax.f32 %v1188, %v2414
  %v2671 = vmax.f32 %v1193, %v2415
  %v2672 = vmax.f32 %v1198, %v2416
  %v2673 = vmax.f32 %v1203, %v2417
  %v2674 = vmax.f32 %v1208, %v2418
  %v2675 = vmax.f32 %v1213, %v2419
  %v2676 = vmax.f32 %v1218, %v2420
  %v2677 = vmax.f32 %v1223, %v2421
  %v2678 = vmax.f32 %v1228, %v2422
  %v2679 = vmax.f32 %v1233, %v2423
  %v2680 = vmax.f32 %v1238, %v2424
  %v2681 = vmax.f32 %v1243, %v2425
  %v2682 = vmax.f32 %v1248, %v2426
  %v2683 = vmax.f32 %v1253, %v2427
  %v2684 = vmax.f32 %v1258, %v2428
  %v2685 = vmax.f32 %v1263, %v2429
  %v2686 = vmax.f32 %v1268, %v2430
  %v2687 = vmax.f32 %v1273, %v2431
  %v2688 = vmax.f32 %v1278, %v2432
  %v2689 = vmax.f32 %v1283, %v2433
  %v2690 = vmax.f32 %v1288, %v2434
  %v2691 = vmax.f32 %v1293, %v2435
  %v2692 = vmax.f32 %v1298, %v2436
  %v2693 = vmax.f32 %v1303, %v2437
  %v2694 = vmax.f32 %v1308, %v2438
  %v2695 = vmax.f32 %v1313, %v2439
  %v2696 = vmax.f32 %v1318, %v2440
  %v2697 = vmax.f32 %v1323, %v2441
  %v2698 = vmax.f32 %v1328, %v2442
  %v2699 = vmax.f32 %v1333, %v2443
  %v2700 = vmax.f32 %v1338, %v2444
  %v2701 = vmax.f32 %v1343, %v2445
  %v2702 = vmax.f32 %v1348, %v2446
  %v2703 = vmax.f32 %v1353, %v2447
  %v2704 = vmax.f32 %v1358, %v2448
  %v2705 = vmax.f32 %v1363, %v2449
  %v2706 = vmax.f32 %v1368, %v2450
  %v2707 = vmax.f32 %v1373, %v2451
  %v2708 = vmax.f32 %v1378, %v2452
  %v2709 = vmax.f32 %v1383, %v2453
  %v2710 = vmax.f32 %v1388, %v2454
  %v2711 = vmax.f32 %v1393, %v2455
  %v2712 = vmax.f32 %v1398, %v2456
  %v2713 = vmax.f32 %v1403, %v2457
  %v2714 = vmax.f32 %v1408, %v2458
  %v2715 = vmax.f32 %v1413, %v2459
  %v2716 = vmax.f32 %v1418, %v2460
  %v2717 = vmax.f32 %v1423, %v2461
  %v2718 = vmax.f32 %v1428, %v2462
  %v2719 = vmax.f32 %v1433, %v2463
  %v2720 = vmax.f32 %v1438, %v2464
  %v2721 = vmax.f32 %v1443, %v2465
  %v2722 = vmax.f32 %v1448, %v2466
  %v2723 = vmax.f32 %v1453, %v2467
  %v2724 = vmax.f32 %v1458, %v2468
  %v2725 = vmax.f32 %v1463, %v2469
  %v2726 = vmax.f32 %v1468, %v2470
  %v2727 = vmax.f32 %v1473, %v2471
  %v2728 = vmax.f32 %v1478, %v2472
  %v2729 = vmax.f32 %v1483, %v2473
  %v2730 = vmax.f32 %v1488, %v2474
  %v2731 = vmax.f32 %v1493, %v2475
  %v2732 = vmax.f32 %v1498, %v2476
  %v2733 = vmax.f32 %v1503, %v2477
  %v2734 = vmax.f32 %v1508, %v2478
  %v2735 = vmax.f32 %v1513, %v2479
  %v2736 = vmax.f32 %v1518, %v2480
  %v2737 = vmax.f32 %v1523, %v2481
  %v2738 = vmax.f32 %v1528, %v2482
  %v2739 = vmax.f32 %v1533, %v2483
  %v2740 = vmax.f32 %v1538, %v2484
  %v2741 = vmax.f32 %v1543, %v2485
  %v2742 = vmax.f32 %v1548, %v2486
  %v2743 = vmax.f32 %v1553, %v2487
  %v2744 = vmax.f32 %v1558, %v2488
  %v2745 = vmax.f32 %v1563, %v2489
  %v2746 = vmax.f32 %v1568, %v2490
  %v2747 = vmax.f32 %v1573, %v2491
  %v2748 = vmax.f32 %v1578, %v2492
  %v2749 = vmax.f32 %v1583, %v2493
  %v2750 = vmax.f32 %v1588, %v2494
  %v2751 = vmax.f32 %v1593, %v2495
  %v2752 = vmax.f32 %v1598, %v2496
  %v2753 = vmax.f32 %v1603, %v2497
  %v2754 = vmax.f32 %v1608, %v2498
  %v2755 = vmax.f32 %v1613, %v2499
  %v2756 = vmax.f32 %v1618, %v2500
  %v2757 = vmax.f32 %v1623, %v2501
  %v2758 = vmax.f32 %v1628, %v2502
  %v2759 = vmax.f32 %v1633, %v2503
  %v2760 = vmax.f32 %v1638, %v2504
  %v2761 = vmax.f32 %v1643, %v2505
  %v2762 = vmax.f32 %v1648, %v2506
  %v2763 = vmax.f32 %v1653, %v2507
  %v2764 = vmax.f32 %v1658, %v2508
  %v2765 = vmax.f32 %v1663, %v2509
  %v2766 = vmax.f32 %v1668, %v2510
  %v2767 = vmax.f32 %v1673, %v2511
  %v2768 = vmax.f32 %v1678, %v2512
  %v2769 = vmax.f32 %v1683, %v2513
  %v2770 = vmax.f32 %v1688, %v2514
  %v2771 = vmax.f32 %v1693, %v2515
  %v2772 = vmax.f32 %v1698, %v2516
  %v2773 = vmax.f32 %v1703, %v2517
  %v2774 = vmax.f32 %v1708, %v2518
  %v2775 = vmax.f32 %v1713, %v2519
  %v2776 = vmax.f32 %v1718, %v2520
  %v2777 = vmax.f32 %v1723, %v2521
  %v2778 = vmax.f32 %v1728, %v2522
  %v2779 = vmax.f32 %v1733, %v2523
  %v2780 = vmax.f32 %v1738, %v2524
  %v2781 = vmax.f32 %v1743, %v2525
  %v2782 = vmax.f32 %v1748, %v2526
  %v2783 = vmax.f32 %v1753, %v2527
  %v2784 = vmax.f32 %v1758, %v2528
  %v2785 = vmax.f32 %v1763, %v2529
  %v2786 = vmax.f32 %v1768, %v2530
  %v2787 = vmax.f32 %v1773, %v2531
  %v2788 = vmax.f32 %v1778, %v2532
  %v2789 = vmax.f32 %v1783, %v2533
  %v2790 = vmax.f32 %v1788, %v2534
  %v2791 = vmax.f32 %v1793, %v2535
  %v2792 = vmax.f32 %v1798, %v2536
  %v2793 = vmax.f32 %v1803, %v2537
  %v2794 = vmax.f32 %v1808, %v2538
  %v2795 = vmax.f32 %v1813, %v2539
  %v2796 = vmax.f32 %v1818, %v2540
  %v2797 = vmax.f32 %v1823, %v2541
  %v2798 = vmax.f32 %v1828, %v2542
  %v2799 = vmax.f32 %v1833, %v2543
  %v2800 = vmax.f32 %v1838, %v2544
  %v2801 = vmax.f32 %v1843, %v2545
  %v2802 = vmax.f32 %v1848, %v2546
  %v2803 = vmax.f32 %v1853, %v2547
  %v2804 = vmax.f32 %v1858, %v2548
  %v2805 = vmax.f32 %v1863, %v2549
  %v2806 = vmax.f32 %v1868, %v2550
  %v2807 = vmax.f32 %v1873, %v2551
  %v2808 = vmax.f32 %v1878, %v2552
  %v2809 = vmax.f32 %v1883, %v2553
  %v2810 = vmax.f32 %v1888, %v2554
  %v2811 = vmax.f32 %v1893, %v2555
  %v2812 = vmax.f32 %v1898, %v2556
  %v2813 = vmax.f32 %v1903, %v2557
  %v2814 = vmax.f32 %v1908, %v2558
  %v2815 = vmax.f32 %v1913, %v2559
  %v2816 = vmax.f32 %v1918, %v2560
  %v2817 = vmax.f32 %v1923, %v2561
  %v2818 = vmax.f32 %v1928, %v2562
  %v2819 = vmax.f32 %v1933, %v2563
  %v2820 = vmax.f32 %v1938, %v2564
  %v2821 = vmax.f32 %v1943, %v2565
  %v2822 = vmax.f32 %v1948, %v2566
  %v2823 = vmax.f32 %v1953, %v2567
  %v2824 = vmax.f32 %v1958, %v2568
  %v2825 = vmax.f32 %v1963, %v2569
  %v2826 = vmax.f32 %v1968, %v2570
  %v2827 = vmax.f32 %v1973, %v2571
  %v2828 = vmax.f32 %v1978, %v2572
  %v2829 = vmax.f32 %v1983, %v2573
  %v2830 = vmax.f32 %v1988, %v2574
  %v2831 = vmax.f32 %v1993, %v2575
  %v2832 = vmax.f32 %v1998, %v2576
  %v2833 = vmax.f32 %v2003, %v2577
  %v2834 = vmax.f32 %v2008, %v2578
  %v2835 = vmax.f32 %v2013, %v2579
  %v2836 = vmax.f32 %v2018, %v2580
  %v2837 = vmax.f32 %v2023, %v2581
  %v2838 = vmax.f32 %v2028, %v2582
  %v2839 = vmax.f32 %v2033, %v2583
  %v2840 = vmax.f32 %v2038, %v2584
  %v2841 = vmax.f32 %v2043, %v2585
  %v2842 = vmax.f32 %v2048, %v2586
  %v2843 = vmax.f32 %v2053, %v2587
  %v2844 = vmax.f32 %v2058, %v2588
  %v2845 = vmax.f32 %v2063, %v2589
  %v2846 = vmax.f32 %v2068, %v2590
  %v2847 = vmax.f32 %v2073, %v2591
  %v2848 = vmax.f32 %v2078, %v2592
  %v2849 = vmax.f32 %v2083, %v2593
  %v2850 = vmax.f32 %v2088, %v2594
  %v2851 = vmax.f32 %v2093, %v2595
  %v2852 = vmax.f32 %v2098, %v2596
  %v2853 = vmax.f32 %v2103, %v2597
  %v2854 = vmax.f32 %v2108, %v2598
  %v2855 = vmax.f32 %v2113, %v2599
  %v2856 = vmax.f32 %v2118, %v2600
  %v2857 = vmax.f32 %v2123, %v2601
  %v2858 = vmax.f32 %v2128, %v2602
  %v2859 = vmax.f32 %v2133, %v2603
  %v2860 = vmax.f32 %v2138, %v2604
  %v2861 = vmax.f32 %v2143, %v2605
  %v2862 = vmax.f32 %v2148, %v2606
  %v2863 = vmax.f32 %v2153, %v2607
  %v2864 = vmax.f32 %v2158, %v2608
  %v2865 = vmax.f32 %v2163, %v2609
  %v2866 = vmax.f32 %v2168, %v2610
  %v2867 = vmax.f32 %v2173, %v2611
  %v2868 = vmax.f32 %v2178, %v2612
  %v2869 = vmax.f32 %v2183, %v2613
  %v2870 = vmax.f32 %v2188, %v2614
  %v2871 = vmax.f32 %v2193, %v2615
  %v2872 = vmax.f32 %v2198, %v2616
  %v2873 = vmax.f32 %v2203, %v2617
  %v2874 = vmax.f32 %v2208, %v2618
  %v2875 = vmax.f32 %v2213, %v2619
  %v2876 = vmax.f32 %v2218, %v2620
  %v2877 = vmax.f32 %v2223, %v2621
  %v2878 = vmax.f32 %v2228, %v2622
  %v2879 = vmax.f32 %v2233, %v2623
  %v2880 = vmax.f32 %v2238, %v2624
  %v2881 = vmax.f32 %v2243, %v2625
  %v2882 = vmax.f32 %v2248, %v2626
  %v2883 = vmax.f32 %v2253, %v2627
  %v2884 = vmax.f32 %v2258, %v2628
  %v2885 = vmax.f32 %v2263, %v2629
  %v2886 = vmax.f32 %v2268, %v2630
  %v2887 = vmax.f32 %v2273, %v2631
  %v2888 = vmax.f32 %v2278, %v2632
  %v2889 = vmax.f32 %v2283, %v2633
  %v2890 = vmax.f32 %v2288, %v2634
  %v2891 = vmax.f32 %v2293, %v2635
  %v2892 = vmax.f32 %v2298, %v2636
  %v2893 = vmax.f32 %v2303, %v2637
  %v2894 = vmax.f32 %v2308, %v2638
  %v2895 = vmax.f32 %v2313, %v2639
  %v2896 = vmax.f32 %v2318, %v2640
  %v2897 = vmax.f32 %v2323, %v2641
  %v2898 = vmax.f32 %v2328, %v2642
  %v2899 = vmax.f32 %v2333, %v2643
  %v2900 = vmax.f32 %v2338, %v2644
  %v2901 = vmax.f32 %v2343, %v2645
  %v2902 = vmax.f32 %v2348, %v2646
  %v2903 = vmax.f32 %v2353, %v2647
  %v2904 = vmax.f32 %v2358, %v2648
  %v2905 = vmax.f32 %v2363, %v2649
  %v2906 = vmax.f32 %v2368, %v2650
  %v2907 = vmax.f32 %v2373, %v2651
  %v2908 = vmax.f32 %v2378, %v2652
  %v2909 = vmax.f32 %v2383, %v2653
  %v2910 = vmax.f32 %v2388, %v2654
  %v2911 = vmax.f32 %v2393, %v2655
  %v2912 = vmax.f32 %v2398, %v2656
  %vm2913 = vcmask 130048
  %v2914 = vsel %vm2913, %v2657, -inf
  %v2915 = vsel %vm2913, %v2665, -inf
  %v2916 = vmax.f32 %v2914, %v2915
  %v2917 = vsel %vm2913, %v2673, -inf
  %v2918 = vmax.f32 %v2916, %v2917
  %v2919 = vsel %vm2913, %v2681, -inf
  %v2920 = vmax.f32 %v2918, %v2919
  %v2921 = vsel %vm2913, %v2658, -inf
  %v2922 = vsel %vm2913, %v2666, -inf
  %v2923 = vmax.f32 %v2921, %v2922
  %v2924 = vsel %vm2913, %v2674, -inf
  %v2925 = vmax.f32 %v2923, %v2924
  %v2926 = vsel %vm2913, %v2682, -inf
  %v2927 = vmax.f32 %v2925, %v2926
  %v2928 = vsel %vm2913, %v2659, -inf
  %v2929 = vsel %vm2913, %v2667, -inf
  %v2930 = vmax.f32 %v2928, %v2929
  %v2931 = vsel %vm2913, %v2675, -inf
  %v2932 = vmax.f32 %v2930, %v2931
  %v2933 = vsel %vm2913, %v2683, -inf
  %v2934 = vmax.f32 %v2932, %v2933
  %v2935 = vsel %vm2913, %v2660, -inf
  %v2936 = vsel %vm2913, %v2668, -inf
  %v2937 = vmax.f32 %v2935, %v2936
  %v2938 = vsel %vm2913, %v2676, -inf
  %v2939 = vmax.f32 %v2937, %v2938
  %v2940 = vsel %vm2913, %v2684, -inf
  %v2941 = vmax.f32 %v2939, %v2940
  %v2942 = vsel %vm2913, %v2661, -inf
  %v2943 = vsel %vm2913, %v2669, -inf
  %v2944 = vmax.f32 %v2942, %v2943
  %v2945 = vsel %vm2913, %v2677, -inf
  %v2946 = vmax.f32 %v2944, %v2945
  %v2947 = vsel %vm2913, %v2685, -inf
  %v2948 = vmax.f32 %v2946, %v2947
  %v2949 = vsel %vm2913, %v2662, -inf
  %v2950 = vsel %vm2913, %v2670, -inf
  %v2951 = vmax.f32 %v2949, %v2950
  %v2952 = vsel %vm2913, %v2678, -inf
  %v2953 = vmax.f32 %v2951, %v2952
  %v2954 = vsel %vm2913, %v2686, -inf
  %v2955 = vmax.f32 %v2953, %v2954
  %v2956 = vsel %vm2913, %v2663, -inf
  %v2957 = vsel %vm2913, %v2671, -inf
  %v2958 = vmax.f32 %v2956, %v2957
  %v2959 = vsel %vm2913, %v2679, -inf
  %v2960 = vmax.f32 %v2958, %v2959
  %v2961 = vsel %vm2913, %v2687, -inf
  %v2962 = vmax.f32 %v2960, %v2961
  %v2963 = vsel %vm2913, %v2664, -inf
  %v2964 = vsel %vm2913, %v2672, -inf
  %v2965 = vmax.f32 %v2963, %v2964
  %v2966 = vsel %vm2913, %v2680, -inf
  %v2967 = vmax.f32 %v2965, %v2966
  %v2968 = vsel %vm2913, %v2688, -inf
  %v2969 = vmax.f32 %v2967, %v2968
  %v2970 = vsel %vm2913, %v2689, -inf
  %v2971 = vsel %vm2913, %v2697, -inf
  %v2972 = vmax.f32 %v2970, %v2971
  %v2973 = vsel %vm2913, %v2705, -inf
  %v2974 = vmax.f32 %v2972, %v2973
  %v2975 = vsel %vm2913, %v2713, -inf
  %v2976 = vmax.f32 %v2974, %v2975
  %v2977 = vsel %vm2913, %v2690, -inf
  %v2978 = vsel %vm2913, %v2698, -inf
  %v2979 = vmax.f32 %v2977, %v2978
  %v2980 = vsel %vm2913, %v2706, -inf
  %v2981 = vmax.f32 %v2979, %v2980
  %v2982 = vsel %vm2913, %v2714, -inf
  %v2983 = vmax.f32 %v2981, %v2982
  %v2984 = vsel %vm2913, %v2691, -inf
  %v2985 = vsel %vm2913, %v2699, -inf
  %v2986 = vmax.f32 %v2984, %v2985
  %v2987 = vsel %vm2913, %v2707, -inf
  %v2988 = vmax.f32 %v2986, %v2987
  %v2989 = vsel %vm2913, %v2715, -inf
  %v2990 = vmax.f32 %v2988, %v2989
  %v2991 = vsel %vm2913, %v2692, -inf
  %v2992 = vsel %vm2913, %v2700, -inf
  %v2993 = vmax.f32 %v2991, %v2992
  %v2994 = vsel %vm2913, %v2708, -inf
  %v2995 = vmax.f32 %v2993, %v2994
  %v2996 = vsel %vm2913, %v2716, -inf
  %v2997 = vmax.f32 %v2995, %v2996
  %v2998 = vsel %vm2913, %v2693, -inf
  %v2999 = vsel %vm2913, %v2701, -inf
  %v3000 = vmax.f32 %v2998, %v2999
  %v3001 = vsel %vm2913, %v2709, -inf
  %v3002 = vmax.f32 %v3000, %v3001
  %v3003 = vsel %vm2913, %v2717, -inf
  %v3004 = vmax.f32 %v3002, %v3003
  %v3005 = vsel %vm2913, %v2694, -inf
  %v3006 = vsel %vm2913, %v2702, -inf
  %v3007 = vmax.f32 %v3005, %v3006
  %v3008 = vsel %vm2913, %v2710, -inf
  %v3009 = vmax.f32 %v3007, %v3008
  %v3010 = vsel %vm2913, %v2718, -inf
  %v3011 = vmax.f32 %v3009, %v3010
  %v3012 = vsel %vm2913, %v2695, -inf
  %v3013 = vsel %vm2913, %v2703, -inf
  %v3014 = vmax.f32 %v3012, %v3013
  %v3015 = vsel %vm2913, %v2711, -inf
  %v3016 = vmax.f32 %v3014, %v3015
  %v3017 = vsel %vm2913, %v2719, -inf
  %v3018 = vmax.f32 %v3016, %v3017
  %v3019 = vsel %vm2913, %v2696, -inf
  %v3020 = vsel %vm2913, %v2704, -inf
  %v3021 = vmax.f32 %v3019, %v3020
  %v3022 = vsel %vm2913, %v2712, -inf
  %v3023 = vmax.f32 %v3021, %v3022
  %v3024 = vsel %vm2913, %v2720, -inf
  %v3025 = vmax.f32 %v3023, %v3024
  %v3026 = vsel %vm2913, %v2721, -inf
  %v3027 = vsel %vm2913, %v2729, -inf
  %v3028 = vmax.f32 %v3026, %v3027
  %v3029 = vsel %vm2913, %v2737, -inf
  %v3030 = vmax.f32 %v3028, %v3029
  %v3031 = vsel %vm2913, %v2745, -inf
  %v3032 = vmax.f32 %v3030, %v3031
  %v3033 = vsel %vm2913, %v2722, -inf
  %v3034 = vsel %vm2913, %v2730, -inf
  %v3035 = vmax.f32 %v3033, %v3034
  %v3036 = vsel %vm2913, %v2738, -inf
  %v3037 = vmax.f32 %v3035, %v3036
  %v3038 = vsel %vm2913, %v2746, -inf
  %v3039 = vmax.f32 %v3037, %v3038
  %v3040 = vsel %vm2913, %v2723, -inf
  %v3041 = vsel %vm2913, %v2731, -inf
  %v3042 = vmax.f32 %v3040, %v3041
  %v3043 = vsel %vm2913, %v2739, -inf
  %v3044 = vmax.f32 %v3042, %v3043
  %v3045 = vsel %vm2913, %v2747, -inf
  %v3046 = vmax.f32 %v3044, %v3045
  %v3047 = vsel %vm2913, %v2724, -inf
  %v3048 = vsel %vm2913, %v2732, -inf
  %v3049 = vmax.f32 %v3047, %v3048
  %v3050 = vsel %vm2913, %v2740, -inf
  %v3051 = vmax.f32 %v3049, %v3050
  %v3052 = vsel %vm2913, %v2748, -inf
  %v3053 = vmax.f32 %v3051, %v3052
  %v3054 = vsel %vm2913, %v2725, -inf
  %v3055 = vsel %vm2913, %v2733, -inf
  %v3056 = vmax.f32 %v3054, %v3055
  %v3057 = vsel %vm2913, %v2741, -inf
  %v3058 = vmax.f32 %v3056, %v3057
  %v3059 = vsel %vm2913, %v2749, -inf
  %v3060 = vmax.f32 %v3058, %v3059
  %v3061 = vsel %vm2913, %v2726, -inf
  %v3062 = vsel %vm2913, %v2734, -inf
  %v3063 = vmax.f32 %v3061, %v3062
  %v3064 = vsel %vm2913, %v2742, -inf
  %v3065 = vmax.f32 %v3063, %v3064
  %v3066 = vsel %vm2913, %v2750, -inf
  %v3067 = vmax.f32 %v3065, %v3066
  %v3068 = vsel %vm2913, %v2727, -inf
  %v3069 = vsel %vm2913, %v2735, -inf
  %v3070 = vmax.f32 %v3068, %v3069
  %v3071 = vsel %vm2913, %v2743, -inf
  %v3072 = vmax.f32 %v3070, %v3071
  %v3073 = vsel %vm2913, %v2751, -inf
  %v3074 = vmax.f32 %v3072, %v3073
  %v3075 = vsel %vm2913, %v2728, -inf
  %v3076 = vsel %vm2913, %v2736, -inf
  %v3077 = vmax.f32 %v3075, %v3076
  %v3078 = vsel %vm2913, %v2744, -inf
  %v3079 = vmax.f32 %v3077, %v3078
  %v3080 = vsel %vm2913, %v2752, -inf
  %v3081 = vmax.f32 %v3079, %v3080
  %v3082 = vsel %vm2913, %v2753, -inf
  %v3083 = vsel %vm2913, %v2761, -inf
  %v3084 = vmax.f32 %v3082, %v3083
  %v3085 = vsel %vm2913, %v2769, -inf
  %v3086 = vmax.f32 %v3084, %v3085
  %v3087 = vsel %vm2913, %v2777, -inf
  %v3088 = vmax.f32 %v3086, %v3087
  %v3089 = vsel %vm2913, %v2754, -inf
  %v3090 = vsel %vm2913, %v2762, -inf
  %v3091 = vmax.f32 %v3089, %v3090
  %v3092 = vsel %vm2913, %v2770, -inf
  %v3093 = vmax.f32 %v3091, %v3092
  %v3094 = vsel %vm2913, %v2778, -inf
  %v3095 = vmax.f32 %v3093, %v3094
  %v3096 = vsel %vm2913, %v2755, -inf
  %v3097 = vsel %vm2913, %v2763, -inf
  %v3098 = vmax.f32 %v3096, %v3097
  %v3099 = vsel %vm2913, %v2771, -inf
  %v3100 = vmax.f32 %v3098, %v3099
  %v3101 = vsel %vm2913, %v2779, -inf
  %v3102 = vmax.f32 %v3100, %v3101
  %v3103 = vsel %vm2913, %v2756, -inf
  %v3104 = vsel %vm2913, %v2764, -inf
  %v3105 = vmax.f32 %v3103, %v3104
  %v3106 = vsel %vm2913, %v2772, -inf
  %v3107 = vmax.f32 %v3105, %v3106
  %v3108 = vsel %vm2913, %v2780, -inf
  %v3109 = vmax.f32 %v3107, %v3108
  %v3110 = vsel %vm2913, %v2757, -inf
  %v3111 = vsel %vm2913, %v2765, -inf
  %v3112 = vmax.f32 %v3110, %v3111
  %v3113 = vsel %vm2913, %v2773, -inf
  %v3114 = vmax.f32 %v3112, %v3113
  %v3115 = vsel %vm2913, %v2781, -inf
  %v3116 = vmax.f32 %v3114, %v3115
  %v3117 = vsel %vm2913, %v2758, -inf
  %v3118 = vsel %vm2913, %v2766, -inf
  %v3119 = vmax.f32 %v3117, %v3118
  %v3120 = vsel %vm2913, %v2774, -inf
  %v3121 = vmax.f32 %v3119, %v3120
  %v3122 = vsel %vm2913, %v2782, -inf
  %v3123 = vmax.f32 %v3121, %v3122
  %v3124 = vsel %vm2913, %v2759, -inf
  %v3125 = vsel %vm2913, %v2767, -inf
  %v3126 = vmax.f32 %v3124, %v3125
  %v3127 = vsel %vm2913, %v2775, -inf
  %v3128 = vmax.f32 %v3126, %v3127
  %v3129 = vsel %vm2913, %v2783, -inf
  %v3130 = vmax.f32 %v3128, %v3129
  %v3131 = vsel %vm2913, %v2760, -inf
  %v3132 = vsel %vm2913, %v2768, -inf
  %v3133 = vmax.f32 %v3131, %v3132
  %v3134 = vsel %vm2913, %v2776, -inf
  %v3135 = vmax.f32 %v3133, %v3134
  %v3136 = vsel %vm2913, %v2784, -inf
  %v3137 = vmax.f32 %v3135, %v3136
  %v3138 = vsel %vm2913, %v2785, -inf
  %v3139 = vsel %vm2913, %v2793, -inf
  %v3140 = vmax.f32 %v3138, %v3139
  %v3141 = vsel %vm2913, %v2801, -inf
  %v3142 = vmax.f32 %v3140, %v3141
  %v3143 = vsel %vm2913, %v2809, -inf
  %v3144 = vmax.f32 %v3142, %v3143
  %v3145 = vsel %vm2913, %v2786, -inf
  %v3146 = vsel %vm2913, %v2794, -inf
  %v3147 = vmax.f32 %v3145, %v3146
  %v3148 = vsel %vm2913, %v2802, -inf
  %v3149 = vmax.f32 %v3147, %v3148
  %v3150 = vsel %vm2913, %v2810, -inf
  %v3151 = vmax.f32 %v3149, %v3150
  %v3152 = vsel %vm2913, %v2787, -inf
  %v3153 = vsel %vm2913, %v2795, -inf
  %v3154 = vmax.f32 %v3152, %v3153
  %v3155 = vsel %vm2913, %v2803, -inf
  %v3156 = vmax.f32 %v3154, %v3155
  %v3157 = vsel %vm2913, %v2811, -inf
  %v3158 = vmax.f32 %v3156, %v3157
  %v3159 = vsel %vm2913, %v2788, -inf
  %v3160 = vsel %vm2913, %v2796, -inf
  %v3161 = vmax.f32 %v3159, %v3160
  %v3162 = vsel %vm2913, %v2804, -inf
  %v3163 = vmax.f32 %v3161, %v3162
  %v3164 = vsel %vm2913, %v2812, -inf
  %v3165 = vmax.f32 %v3163, %v3164
  %v3166 = vsel %vm2913, %v2789, -inf
  %v3167 = vsel %vm2913, %v2797, -inf
  %v3168 = vmax.f32 %v3166, %v3167
  %v3169 = vsel %vm2913, %v2805, -inf
  %v3170 = vmax.f32 %v3168, %v3169
  %v3171 = vsel %vm2913, %v2813, -inf
  %v3172 = vmax.f32 %v3170, %v3171
  %v3173 = vsel %vm2913, %v2790, -inf
  %v3174 = vsel %vm2913, %v2798, -inf
  %v3175 = vmax.f32 %v3173, %v3174
  %v3176 = vsel %vm2913, %v2806, -inf
  %v3177 = vmax.f32 %v3175, %v3176
  %v3178 = vsel %vm2913, %v2814, -inf
  %v3179 = vmax.f32 %v3177, %v3178
  %v3180 = vsel %vm2913, %v2791, -inf
  %v3181 = vsel %vm2913, %v2799, -inf
  %v3182 = vmax.f32 %v3180, %v3181
  %v3183 = vsel %vm2913, %v2807, -inf
  %v3184 = vmax.f32 %v3182, %v3183
  %v3185 = vsel %vm2913, %v2815, -inf
  %v3186 = vmax.f32 %v3184, %v3185
  %v3187 = vsel %vm2913, %v2792, -inf
  %v3188 = vsel %vm2913, %v2800, -inf
  %v3189 = vmax.f32 %v3187, %v3188
  %v3190 = vsel %vm2913, %v2808, -inf
  %v3191 = vmax.f32 %v3189, %v3190
  %v3192 = vsel %vm2913, %v2816, -inf
  %v3193 = vmax.f32 %v3191, %v3192
  %v3194 = vsel %vm2913, %v2817, -inf
  %v3195 = vsel %vm2913, %v2825, -inf
  %v3196 = vmax.f32 %v3194, %v3195
  %v3197 = vsel %vm2913, %v2833, -inf
  %v3198 = vmax.f32 %v3196, %v3197
  %v3199 = vsel %vm2913, %v2841, -inf
  %v3200 = vmax.f32 %v3198, %v3199
  %v3201 = vsel %vm2913, %v2818, -inf
  %v3202 = vsel %vm2913, %v2826, -inf
  %v3203 = vmax.f32 %v3201, %v3202
  %v3204 = vsel %vm2913, %v2834, -inf
  %v3205 = vmax.f32 %v3203, %v3204
  %v3206 = vsel %vm2913, %v2842, -inf
  %v3207 = vmax.f32 %v3205, %v3206
  %v3208 = vsel %vm2913, %v2819, -inf
  %v3209 = vsel %vm2913, %v2827, -inf
  %v3210 = vmax.f32 %v3208, %v3209
  %v3211 = vsel %vm2913, %v2835, -inf
  %v3212 = vmax.f32 %v3210, %v3211
  %v3213 = vsel %vm2913, %v2843, -inf
  %v3214 = vmax.f32 %v3212, %v3213
  %v3215 = vsel %vm2913, %v2820, -inf
  %v3216 = vsel %vm2913, %v2828, -inf
  %v3217 = vmax.f32 %v3215, %v3216
  %v3218 = vsel %vm2913, %v2836, -inf
  %v3219 = vmax.f32 %v3217, %v3218
  %v3220 = vsel %vm2913, %v2844, -inf
  %v3221 = vmax.f32 %v3219, %v3220
  %v3222 = vsel %vm2913, %v2821, -inf
  %v3223 = vsel %vm2913, %v2829, -inf
  %v3224 = vmax.f32 %v3222, %v3223
  %v3225 = vsel %vm2913, %v2837, -inf
  %v3226 = vmax.f32 %v3224, %v3225
  %v3227 = vsel %vm2913, %v2845, -inf
  %v3228 = vmax.f32 %v3226, %v3227
  %v3229 = vsel %vm2913, %v2822, -inf
  %v3230 = vsel %vm2913, %v2830, -inf
  %v3231 = vmax.f32 %v3229, %v3230
  %v3232 = vsel %vm2913, %v2838, -inf
  %v3233 = vmax.f32 %v3231, %v3232
  %v3234 = vsel %vm2913, %v2846, -inf
  %v3235 = vmax.f32 %v3233, %v3234
  %v3236 = vsel %vm2913, %v2823, -inf
  %v3237 = vsel %vm2913, %v2831, -inf
  %v3238 = vmax.f32 %v3236, %v3237
  %v3239 = vsel %vm2913, %v2839, -inf
  %v3240 = vmax.f32 %v3238, %v3239
  %v3241 = vsel %vm2913, %v2847, -inf
  %v3242 = vmax.f32 %v3240, %v3241
  %v3243 = vsel %vm2913, %v2824, -inf
  %v3244 = vsel %vm2913, %v2832, -inf
  %v3245 = vmax.f32 %v3243, %v3244
  %v3246 = vsel %vm2913, %v2840, -inf
  %v3247 = vmax.f32 %v3245, %v3246
  %v3248 = vsel %vm2913, %v2848, -inf
  %v3249 = vmax.f32 %v3247, %v3248
  %v3250 = vsel %vm2913, %v2849, -inf
  %v3251 = vsel %vm2913, %v2857, -inf
  %v3252 = vmax.f32 %v3250, %v3251
  %v3253 = vsel %vm2913, %v2865, -inf
  %v3254 = vmax.f32 %v3252, %v3253
  %v3255 = vsel %vm2913, %v2873, -inf
  %v3256 = vmax.f32 %v3254, %v3255
  %v3257 = vsel %vm2913, %v2850, -inf
  %v3258 = vsel %vm2913, %v2858, -inf
  %v3259 = vmax.f32 %v3257, %v3258
  %v3260 = vsel %vm2913, %v2866, -inf
  %v3261 = vmax.f32 %v3259, %v3260
  %v3262 = vsel %vm2913, %v2874, -inf
  %v3263 = vmax.f32 %v3261, %v3262
  %v3264 = vsel %vm2913, %v2851, -inf
  %v3265 = vsel %vm2913, %v2859, -inf
  %v3266 = vmax.f32 %v3264, %v3265
  %v3267 = vsel %vm2913, %v2867, -inf
  %v3268 = vmax.f32 %v3266, %v3267
  %v3269 = vsel %vm2913, %v2875, -inf
  %v3270 = vmax.f32 %v3268, %v3269
  %v3271 = vsel %vm2913, %v2852, -inf
  %v3272 = vsel %vm2913, %v2860, -inf
  %v3273 = vmax.f32 %v3271, %v3272
  %v3274 = vsel %vm2913, %v2868, -inf
  %v3275 = vmax.f32 %v3273, %v3274
  %v3276 = vsel %vm2913, %v2876, -inf
  %v3277 = vmax.f32 %v3275, %v3276
  %v3278 = vsel %vm2913, %v2853, -inf
  %v3279 = vsel %vm2913, %v2861, -inf
  %v3280 = vmax.f32 %v3278, %v3279
  %v3281 = vsel %vm2913, %v2869, -inf
  %v3282 = vmax.f32 %v3280, %v3281
  %v3283 = vsel %vm2913, %v2877, -inf
  %v3284 = vmax.f32 %v3282, %v3283
  %v3285 = vsel %vm2913, %v2854, -inf
  %v3286 = vsel %vm2913, %v2862, -inf
  %v3287 = vmax.f32 %v3285, %v3286
  %v3288 = vsel %vm2913, %v2870, -inf
  %v3289 = vmax.f32 %v3287, %v3288
  %v3290 = vsel %vm2913, %v2878, -inf
  %v3291 = vmax.f32 %v3289, %v3290
  %v3292 = vsel %vm2913, %v2855, -inf
  %v3293 = vsel %vm2913, %v2863, -inf
  %v3294 = vmax.f32 %v3292, %v3293
  %v3295 = vsel %vm2913, %v2871, -inf
  %v3296 = vmax.f32 %v3294, %v3295
  %v3297 = vsel %vm2913, %v2879, -inf
  %v3298 = vmax.f32 %v3296, %v3297
  %v3299 = vsel %vm2913, %v2856, -inf
  %v3300 = vsel %vm2913, %v2864, -inf
  %v3301 = vmax.f32 %v3299, %v3300
  %v3302 = vsel %vm2913, %v2872, -inf
  %v3303 = vmax.f32 %v3301, %v3302
  %v3304 = vsel %vm2913, %v2880, -inf
  %v3305 = vmax.f32 %v3303, %v3304
  %v3306 = vsel %vm2913, %v2881, -inf
  %v3307 = vsel %vm2913, %v2889, -inf
  %v3308 = vmax.f32 %v3306, %v3307
  %v3309 = vsel %vm2913, %v2897, -inf
  %v3310 = vmax.f32 %v3308, %v3309
  %v3311 = vsel %vm2913, %v2905, -inf
  %v3312 = vmax.f32 %v3310, %v3311
  %v3313 = vsel %vm2913, %v2882, -inf
  %v3314 = vsel %vm2913, %v2890, -inf
  %v3315 = vmax.f32 %v3313, %v3314
  %v3316 = vsel %vm2913, %v2898, -inf
  %v3317 = vmax.f32 %v3315, %v3316
  %v3318 = vsel %vm2913, %v2906, -inf
  %v3319 = vmax.f32 %v3317, %v3318
  %v3320 = vsel %vm2913, %v2883, -inf
  %v3321 = vsel %vm2913, %v2891, -inf
  %v3322 = vmax.f32 %v3320, %v3321
  %v3323 = vsel %vm2913, %v2899, -inf
  %v3324 = vmax.f32 %v3322, %v3323
  %v3325 = vsel %vm2913, %v2907, -inf
  %v3326 = vmax.f32 %v3324, %v3325
  %v3327 = vsel %vm2913, %v2884, -inf
  %v3328 = vsel %vm2913, %v2892, -inf
  %v3329 = vmax.f32 %v3327, %v3328
  %v3330 = vsel %vm2913, %v2900, -inf
  %v3331 = vmax.f32 %v3329, %v3330
  %v3332 = vsel %vm2913, %v2908, -inf
  %v3333 = vmax.f32 %v3331, %v3332
  %v3334 = vsel %vm2913, %v2885, -inf
  %v3335 = vsel %vm2913, %v2893, -inf
  %v3336 = vmax.f32 %v3334, %v3335
  %v3337 = vsel %vm2913, %v2901, -inf
  %v3338 = vmax.f32 %v3336, %v3337
  %v3339 = vsel %vm2913, %v2909, -inf
  %v3340 = vmax.f32 %v3338, %v3339
  %v3341 = vsel %vm2913, %v2886, -inf
  %v3342 = vsel %vm2913, %v2894, -inf
  %v3343 = vmax.f32 %v3341, %v3342
  %v3344 = vsel %vm2913, %v2902, -inf
  %v3345 = vmax.f32 %v3343, %v3344
  %v3346 = vsel %vm2913, %v2910, -inf
  %v3347 = vmax.f32 %v3345, %v3346
  %v3348 = vsel %vm2913, %v2887, -inf
  %v3349 = vsel %vm2913, %v2895, -inf
  %v3350 = vmax.f32 %v3348, %v3349
  %v3351 = vsel %vm2913, %v2903, -inf
  %v3352 = vmax.f32 %v3350, %v3351
  %v3353 = vsel %vm2913, %v2911, -inf
  %v3354 = vmax.f32 %v3352, %v3353
  %v3355 = vsel %vm2913, %v2888, -inf
  %v3356 = vsel %vm2913, %v2896, -inf
  %v3357 = vmax.f32 %v3355, %v3356
  %v3358 = vsel %vm2913, %v2904, -inf
  %v3359 = vmax.f32 %v3357, %v3358
  %v3360 = vsel %vm2913, %v2912, -inf
  %v3361 = vmax.f32 %v3359, %v3360
  %v3362 = vcombine.low %v2920, %v3032
  %v3363 = vcombine.high %v2920, %v3032
  %v3365 = vunpack.c.l.s4 1983009808
  %v3366 = vunpack.c.0.s8 %v3365
  %v3367 = vlaneseq
  %v3368 = vshrl.u32 %v3367, 7
  %v3369 = vsub.s32 %v3366, %v3368
  %v3370 = vrot.slane %v3362, %v3369
  %v3372 = vunpack.c.l.s4 1983009808
  %v3373 = vunpack.c.0.s8 %v3372
  %v3374 = vlaneseq
  %v3375 = vshrl.u32 %v3374, 7
  %v3376 = vsub.s32 %v3373, %v3375
  %v3377 = vrot.slane %v3363, %v3376
  %v3378 = vcombine.low %v2976, %v3088
  %v3379 = vcombine.high %v2976, %v3088
  %v3381 = vunpack.c.l.s4 1983009808
  %v3382 = vunpack.c.0.s8 %v3381
  %v3383 = vlaneseq
  %v3384 = vshrl.u32 %v3383, 7
  %v3385 = vsub.s32 %v3382, %v3384
  %v3386 = vrot.slane %v3378, %v3385
  %v3388 = vunpack.c.l.s4 1983009808
  %v3389 = vunpack.c.0.s8 %v3388
  %v3390 = vlaneseq
  %v3391 = vshrl.u32 %v3390, 7
  %v3392 = vsub.s32 %v3389, %v3391
  %v3393 = vrot.slane %v3379, %v3392
  %v3394 = vcombine.low %v3144, %v3256
  %v3395 = vcombine.high %v3144, %v3256
  %v3397 = vunpack.c.l.s4 1983009808
  %v3398 = vunpack.c.0.s8 %v3397
  %v3399 = vlaneseq
  %v3400 = vshrl.u32 %v3399, 7
  %v3401 = vsub.s32 %v3398, %v3400
  %v3402 = vrot.slane %v3394, %v3401
  %v3404 = vunpack.c.l.s4 1983009808
  %v3405 = vunpack.c.0.s8 %v3404
  %v3406 = vlaneseq
  %v3407 = vshrl.u32 %v3406, 7
  %v3408 = vsub.s32 %v3405, %v3407
  %v3409 = vrot.slane %v3395, %v3408
  %v3410 = vcombine.low %v3200, %v3312
  %v3411 = vcombine.high %v3200, %v3312
  %v3413 = vunpack.c.l.s4 1983009808
  %v3414 = vunpack.c.0.s8 %v3413
  %v3415 = vlaneseq
  %v3416 = vshrl.u32 %v3415, 7
  %v3417 = vsub.s32 %v3414, %v3416
  %v3418 = vrot.slane %v3410, %v3417
  %v3420 = vunpack.c.l.s4 1983009808
  %v3421 = vunpack.c.0.s8 %v3420
  %v3422 = vlaneseq
  %v3423 = vshrl.u32 %v3422, 7
  %v3424 = vsub.s32 %v3421, %v3423
  %v3425 = vrot.slane %v3411, %v3424
  %v3426 = vcombine.low %v3370, %v3386
  %v3427 = vcombine.high %v3370, %v3386
  %v3429 = vunpack.c.l.s4 1934713408
  %v3430 = vunpack.c.0.s8 %v3429
  %v3431 = vlaneseq
  %v3432 = vshrl.u32 %v3431, 7
  %v3433 = vsub.s32 %v3430, %v3432
  %v3434 = vrot.slane %v3426, %v3433
  %v3436 = vunpack.c.l.s4 1934713408
  %v3437 = vunpack.c.0.s8 %v3436
  %v3438 = vlaneseq
  %v3439 = vshrl.u32 %v3438, 7
  %v3440 = vsub.s32 %v3437, %v3439
  %v3441 = vrot.slane %v3427, %v3440
  %v3442 = vcombine.low %v3377, %v3393
  %v3443 = vcombine.high %v3377, %v3393
  %v3445 = vunpack.c.l.s4 1934713408
  %v3446 = vunpack.c.0.s8 %v3445
  %v3447 = vlaneseq
  %v3448 = vshrl.u32 %v3447, 7
  %v3449 = vsub.s32 %v3446, %v3448
  %v3450 = vrot.slane %v3442, %v3449
  %v3452 = vunpack.c.l.s4 1934713408
  %v3453 = vunpack.c.0.s8 %v3452
  %v3454 = vlaneseq
  %v3455 = vshrl.u32 %v3454, 7
  %v3456 = vsub.s32 %v3453, %v3455
  %v3457 = vrot.slane %v3443, %v3456
  %v3458 = vcombine.low %v3402, %v3418
  %v3459 = vcombine.high %v3402, %v3418
  %v3461 = vunpack.c.l.s4 1934713408
  %v3462 = vunpack.c.0.s8 %v3461
  %v3463 = vlaneseq
  %v3464 = vshrl.u32 %v3463, 7
  %v3465 = vsub.s32 %v3462, %v3464
  %v3466 = vrot.slane %v3458, %v3465
  %v3468 = vunpack.c.l.s4 1934713408
  %v3469 = vunpack.c.0.s8 %v3468
  %v3470 = vlaneseq
  %v3471 = vshrl.u32 %v3470, 7
  %v3472 = vsub.s32 %v3469, %v3471
  %v3473 = vrot.slane %v3459, %v3472
  %v3474 = vcombine.low %v3409, %v3425
  %v3475 = vcombine.high %v3409, %v3425
  %v3477 = vunpack.c.l.s4 1934713408
  %v3478 = vunpack.c.0.s8 %v3477
  %v3479 = vlaneseq
  %v3480 = vshrl.u32 %v3479, 7
  %v3481 = vsub.s32 %v3478, %v3480
  %v3482 = vrot.slane %v3474, %v3481
  %v3484 = vunpack.c.l.s4 1934713408
  %v3485 = vunpack.c.0.s8 %v3484
  %v3486 = vlaneseq
  %v3487 = vshrl.u32 %v3486, 7
  %v3488 = vsub.s32 %v3485, %v3487
  %v3489 = vrot.slane %v3475, %v3488
  %v3490 = vcombine.low %v3434, %v3466
  %v3491 = vcombine.high %v3434, %v3466
  %v3492 = vcombine.low %v3441, %v3473
  %v3493 = vcombine.high %v3441, %v3473
  %v3494 = vcombine.low %v3450, %v3482
  %v3495 = vcombine.high %v3450, %v3482
  %v3496 = vcombine.low %v3457, %v3489
  %v3497 = vcombine.high %v3457, %v3489
  %v3498 = vcombine.low %v2927, %v3039
  %v3499 = vcombine.high %v2927, %v3039
  %v3501 = vunpack.c.l.s4 1983009808
  %v3502 = vunpack.c.0.s8 %v3501
  %v3503 = vlaneseq
  %v3504 = vshrl.u32 %v3503, 7
  %v3505 = vsub.s32 %v3502, %v3504
  %v3506 = vrot.slane %v3498, %v3505
  %v3508 = vunpack.c.l.s4 1983009808
  %v3509 = vunpack.c.0.s8 %v3508
  %v3510 = vlaneseq
  %v3511 = vshrl.u32 %v3510, 7
  %v3512 = vsub.s32 %v3509, %v3511
  %v3513 = vrot.slane %v3499, %v3512
  %v3514 = vcombine.low %v2983, %v3095
  %v3515 = vcombine.high %v2983, %v3095
  %v3517 = vunpack.c.l.s4 1983009808
  %v3518 = vunpack.c.0.s8 %v3517
  %v3519 = vlaneseq
  %v3520 = vshrl.u32 %v3519, 7
  %v3521 = vsub.s32 %v3518, %v3520
  %v3522 = vrot.slane %v3514, %v3521
  %v3524 = vunpack.c.l.s4 1983009808
  %v3525 = vunpack.c.0.s8 %v3524
  %v3526 = vlaneseq
  %v3527 = vshrl.u32 %v3526, 7
  %v3528 = vsub.s32 %v3525, %v3527
  %v3529 = vrot.slane %v3515, %v3528
  %v3530 = vcombine.low %v3151, %v3263
  %v3531 = vcombine.high %v3151, %v3263
  %v3533 = vunpack.c.l.s4 1983009808
  %v3534 = vunpack.c.0.s8 %v3533
  %v3535 = vlaneseq
  %v3536 = vshrl.u32 %v3535, 7
  %v3537 = vsub.s32 %v3534, %v3536
  %v3538 = vrot.slane %v3530, %v3537
  %v3540 = vunpack.c.l.s4 1983009808
  %v3541 = vunpack.c.0.s8 %v3540
  %v3542 = vlaneseq
  %v3543 = vshrl.u32 %v3542, 7
  %v3544 = vsub.s32 %v3541, %v3543
  %v3545 = vrot.slane %v3531, %v3544
  %v3546 = vcombine.low %v3207, %v3319
  %v3547 = vcombine.high %v3207, %v3319
  %v3549 = vunpack.c.l.s4 1983009808
  %v3550 = vunpack.c.0.s8 %v3549
  %v3551 = vlaneseq
  %v3552 = vshrl.u32 %v3551, 7
  %v3553 = vsub.s32 %v3550, %v3552
  %v3554 = vrot.slane %v3546, %v3553
  %v3556 = vunpack.c.l.s4 1983009808
  %v3557 = vunpack.c.0.s8 %v3556
  %v3558 = vlaneseq
  %v3559 = vshrl.u32 %v3558, 7
  %v3560 = vsub.s32 %v3557, %v3559
  %v3561 = vrot.slane %v3547, %v3560
  %v3562 = vcombine.low %v3506, %v3522
  %v3563 = vcombine.high %v3506, %v3522
  %v3565 = vunpack.c.l.s4 1934713408
  %v3566 = vunpack.c.0.s8 %v3565
  %v3567 = vlaneseq
  %v3568 = vshrl.u32 %v3567, 7
  %v3569 = vsub.s32 %v3566, %v3568
  %v3570 = vrot.slane %v3562, %v3569
  %v3572 = vunpack.c.l.s4 1934713408
  %v3573 = vunpack.c.0.s8 %v3572
  %v3574 = vlaneseq
  %v3575 = vshrl.u32 %v3574, 7
  %v3576 = vsub.s32 %v3573, %v3575
  %v3577 = vrot.slane %v3563, %v3576
  %v3578 = vcombine.low %v3513, %v3529
  %v3579 = vcombine.high %v3513, %v3529
  %v3581 = vunpack.c.l.s4 1934713408
  %v3582 = vunpack.c.0.s8 %v3581
  %v3583 = vlaneseq
  %v3584 = vshrl.u32 %v3583, 7
  %v3585 = vsub.s32 %v3582, %v3584
  %v3586 = vrot.slane %v3578, %v3585
  %v3588 = vunpack.c.l.s4 1934713408
  %v3589 = vunpack.c.0.s8 %v3588
  %v3590 = vlaneseq
  %v3591 = vshrl.u32 %v3590, 7
  %v3592 = vsub.s32 %v3589, %v3591
  %v3593 = vrot.slane %v3579, %v3592
  %v3594 = vcombine.low %v3538, %v3554
  %v3595 = vcombine.high %v3538, %v3554
  %v3597 = vunpack.c.l.s4 1934713408
  %v3598 = vunpack.c.0.s8 %v3597
  %v3599 = vlaneseq
  %v3600 = vshrl.u32 %v3599, 7
  %v3601 = vsub.s32 %v3598, %v3600
  %v3602 = vrot.slane %v3594, %v3601
  %v3604 = vunpack.c.l.s4 1934713408
  %v3605 = vunpack.c.0.s8 %v3604
  %v3606 = vlaneseq
  %v3607 = vshrl.u32 %v3606, 7
  %v3608 = vsub.s32 %v3605, %v3607
  %v3609 = vrot.slane %v3595, %v3608
  %v3610 = vcombine.low %v3545, %v3561
  %v3611 = vcombine.high %v3545, %v3561
  %v3613 = vunpack.c.l.s4 1934713408
  %v3614 = vunpack.c.0.s8 %v3613
  %v3615 = vlaneseq
  %v3616 = vshrl.u32 %v3615, 7
  %v3617 = vsub.s32 %v3614, %v3616
  %v3618 = vrot.slane %v3610, %v3617
  %v3620 = vunpack.c.l.s4 1934713408
  %v3621 = vunpack.c.0.s8 %v3620
  %v3622 = vlaneseq
  %v3623 = vshrl.u32 %v3622, 7
  %v3624 = vsub.s32 %v3621, %v3623
  %v3625 = vrot.slane %v3611, %v3624
  %v3626 = vcombine.low %v3570, %v3602
  %v3627 = vcombine.high %v3570, %v3602
  %v3628 = vcombine.low %v3577, %v3609
  %v3629 = vcombine.high %v3577, %v3609
  %v3630 = vcombine.low %v3586, %v3618
  %v3631 = vcombine.high %v3586, %v3618
  %v3632 = vcombine.low %v3593, %v3625
  %v3633 = vcombine.high %v3593, %v3625
  %v3634 = vcombine.low %v2934, %v3046
  %v3635 = vcombine.high %v2934, %v3046
  %v3637 = vunpack.c.l.s4 1983009808
  %v3638 = vunpack.c.0.s8 %v3637
  %v3639 = vlaneseq
  %v3640 = vshrl.u32 %v3639, 7
  %v3641 = vsub.s32 %v3638, %v3640
  %v3642 = vrot.slane %v3634, %v3641
  %v3644 = vunpack.c.l.s4 1983009808
  %v3645 = vunpack.c.0.s8 %v3644
  %v3646 = vlaneseq
  %v3647 = vshrl.u32 %v3646, 7
  %v3648 = vsub.s32 %v3645, %v3647
  %v3649 = vrot.slane %v3635, %v3648
  %v3650 = vcombine.low %v2990, %v3102
  %v3651 = vcombine.high %v2990, %v3102
  %v3653 = vunpack.c.l.s4 1983009808
  %v3654 = vunpack.c.0.s8 %v3653
  %v3655 = vlaneseq
  %v3656 = vshrl.u32 %v3655, 7
  %v3657 = vsub.s32 %v3654, %v3656
  %v3658 = vrot.slane %v3650, %v3657
  %v3660 = vunpack.c.l.s4 1983009808
  %v3661 = vunpack.c.0.s8 %v3660
  %v3662 = vlaneseq
  %v3663 = vshrl.u32 %v3662, 7
  %v3664 = vsub.s32 %v3661, %v3663
  %v3665 = vrot.slane %v3651, %v3664
  %v3666 = vcombine.low %v3158, %v3270
  %v3667 = vcombine.high %v3158, %v3270
  %v3669 = vunpack.c.l.s4 1983009808
  %v3670 = vunpack.c.0.s8 %v3669
  %v3671 = vlaneseq
  %v3672 = vshrl.u32 %v3671, 7
  %v3673 = vsub.s32 %v3670, %v3672
  %v3674 = vrot.slane %v3666, %v3673
  %v3676 = vunpack.c.l.s4 1983009808
  %v3677 = vunpack.c.0.s8 %v3676
  %v3678 = vlaneseq
  %v3679 = vshrl.u32 %v3678, 7
  %v3680 = vsub.s32 %v3677, %v3679
  %v3681 = vrot.slane %v3667, %v3680
  %v3682 = vcombine.low %v3214, %v3326
  %v3683 = vcombine.high %v3214, %v3326
  %v3685 = vunpack.c.l.s4 1983009808
  %v3686 = vunpack.c.0.s8 %v3685
  %v3687 = vlaneseq
  %v3688 = vshrl.u32 %v3687, 7
  %v3689 = vsub.s32 %v3686, %v3688
  %v3690 = vrot.slane %v3682, %v3689
  %v3692 = vunpack.c.l.s4 1983009808
  %v3693 = vunpack.c.0.s8 %v3692
  %v3694 = vlaneseq
  %v3695 = vshrl.u32 %v3694, 7
  %v3696 = vsub.s32 %v3693, %v3695
  %v3697 = vrot.slane %v3683, %v3696
  %v3698 = vcombine.low %v3642, %v3658
  %v3699 = vcombine.high %v3642, %v3658
  %v3701 = vunpack.c.l.s4 1934713408
  %v3702 = vunpack.c.0.s8 %v3701
  %v3703 = vlaneseq
  %v3704 = vshrl.u32 %v3703, 7
  %v3705 = vsub.s32 %v3702, %v3704
  %v3706 = vrot.slane %v3698, %v3705
  %v3708 = vunpack.c.l.s4 1934713408
  %v3709 = vunpack.c.0.s8 %v3708
  %v3710 = vlaneseq
  %v3711 = vshrl.u32 %v3710, 7
  %v3712 = vsub.s32 %v3709, %v3711
  %v3713 = vrot.slane %v3699, %v3712
  %v3714 = vcombine.low %v3649, %v3665
  %v3715 = vcombine.high %v3649, %v3665
  %v3717 = vunpack.c.l.s4 1934713408
  %v3718 = vunpack.c.0.s8 %v3717
  %v3719 = vlaneseq
  %v3720 = vshrl.u32 %v3719, 7
  %v3721 = vsub.s32 %v3718, %v3720
  %v3722 = vrot.slane %v3714, %v3721
  %v3724 = vunpack.c.l.s4 1934713408
  %v3725 = vunpack.c.0.s8 %v3724
  %v3726 = vlaneseq
  %v3727 = vshrl.u32 %v3726, 7
  %v3728 = vsub.s32 %v3725, %v3727
  %v3729 = vrot.slane %v3715, %v3728
  %v3730 = vcombine.low %v3674, %v3690
  %v3731 = vcombine.high %v3674, %v3690
  %v3733 = vunpack.c.l.s4 1934713408
  %v3734 = vunpack.c.0.s8 %v3733
  %v3735 = vlaneseq
  %v3736 = vshrl.u32 %v3735, 7
  %v3737 = vsub.s32 %v3734, %v3736
  %v3738 = vrot.slane %v3730, %v3737
  %v3740 = vunpack.c.l.s4 1934713408
  %v3741 = vunpack.c.0.s8 %v3740
  %v3742 = vlaneseq
  %v3743 = vshrl.u32 %v3742, 7
  %v3744 = vsub.s32 %v3741, %v3743
  %v3745 = vrot.slane %v3731, %v3744
  %v3746 = vcombine.low %v3681, %v3697
  %v3747 = vcombine.high %v3681, %v3697
  %v3749 = vunpack.c.l.s4 1934713408
  %v3750 = vunpack.c.0.s8 %v3749
  %v3751 = vlaneseq
  %v3752 = vshrl.u32 %v3751, 7
  %v3753 = vsub.s32 %v3750, %v3752
  %v3754 = vrot.slane %v3746, %v3753
  %v3756 = vunpack.c.l.s4 1934713408
  %v3757 = vunpack.c.0.s8 %v3756
  %v3758 = vlaneseq
  %v3759 = vshrl.u32 %v3758, 7
  %v3760 = vsub.s32 %v3757, %v3759
  %v3761 = vrot.slane %v3747, %v3760
  %v3762 = vcombine.low %v3706, %v3738
  %v3763 = vcombine.high %v3706, %v3738
  %v3764 = vcombine.low %v3713, %v3745
  %v3765 = vcombine.high %v3713, %v3745
  %v3766 = vcombine.low %v3722, %v3754
  %v3767 = vcombine.high %v3722, %v3754
  %v3768 = vcombine.low %v3729, %v3761
  %v3769 = vcombine.high %v3729, %v3761
  %v3770 = vcombine.low %v2941, %v3053
  %v3771 = vcombine.high %v2941, %v3053
  %v3773 = vunpack.c.l.s4 1983009808
  %v3774 = vunpack.c.0.s8 %v3773
  %v3775 = vlaneseq
  %v3776 = vshrl.u32 %v3775, 7
  %v3777 = vsub.s32 %v3774, %v3776
  %v3778 = vrot.slane %v3770, %v3777
  %v3780 = vunpack.c.l.s4 1983009808
  %v3781 = vunpack.c.0.s8 %v3780
  %v3782 = vlaneseq
  %v3783 = vshrl.u32 %v3782, 7
  %v3784 = vsub.s32 %v3781, %v3783
  %v3785 = vrot.slane %v3771, %v3784
  %v3786 = vcombine.low %v2997, %v3109
  %v3787 = vcombine.high %v2997, %v3109
  %v3789 = vunpack.c.l.s4 1983009808
  %v3790 = vunpack.c.0.s8 %v3789
  %v3791 = vlaneseq
  %v3792 = vshrl.u32 %v3791, 7
  %v3793 = vsub.s32 %v3790, %v3792
  %v3794 = vrot.slane %v3786, %v3793
  %v3796 = vunpack.c.l.s4 1983009808
  %v3797 = vunpack.c.0.s8 %v3796
  %v3798 = vlaneseq
  %v3799 = vshrl.u32 %v3798, 7
  %v3800 = vsub.s32 %v3797, %v3799
  %v3801 = vrot.slane %v3787, %v3800
  %v3802 = vcombine.low %v3165, %v3277
  %v3803 = vcombine.high %v3165, %v3277
  %v3805 = vunpack.c.l.s4 1983009808
  %v3806 = vunpack.c.0.s8 %v3805
  %v3807 = vlaneseq
  %v3808 = vshrl.u32 %v3807, 7
  %v3809 = vsub.s32 %v3806, %v3808
  %v3810 = vrot.slane %v3802, %v3809
  %v3812 = vunpack.c.l.s4 1983009808
  %v3813 = vunpack.c.0.s8 %v3812
  %v3814 = vlaneseq
  %v3815 = vshrl.u32 %v3814, 7
  %v3816 = vsub.s32 %v3813, %v3815
  %v3817 = vrot.slane %v3803, %v3816
  %v3818 = vcombine.low %v3221, %v3333
  %v3819 = vcombine.high %v3221, %v3333
  %v3821 = vunpack.c.l.s4 1983009808
  %v3822 = vunpack.c.0.s8 %v3821
  %v3823 = vlaneseq
  %v3824 = vshrl.u32 %v3823, 7
  %v3825 = vsub.s32 %v3822, %v3824
  %v3826 = vrot.slane %v3818, %v3825
  %v3828 = vunpack.c.l.s4 1983009808
  %v3829 = vunpack.c.0.s8 %v3828
  %v3830 = vlaneseq
  %v3831 = vshrl.u32 %v3830, 7
  %v3832 = vsub.s32 %v3829, %v3831
  %v3833 = vrot.slane %v3819, %v3832
  %v3834 = vcombine.low %v3778, %v3794
  %v3835 = vcombine.high %v3778, %v3794
  %v3837 = vunpack.c.l.s4 1934713408
  %v3838 = vunpack.c.0.s8 %v3837
  %v3839 = vlaneseq
  %v3840 = vshrl.u32 %v3839, 7
  %v3841 = vsub.s32 %v3838, %v3840
  %v3842 = vrot.slane %v3834, %v3841
  %v3844 = vunpack.c.l.s4 1934713408
  %v3845 = vunpack.c.0.s8 %v3844
  %v3846 = vlaneseq
  %v3847 = vshrl.u32 %v3846, 7
  %v3848 = vsub.s32 %v3845, %v3847
  %v3849 = vrot.slane %v3835, %v3848
  %v3850 = vcombine.low %v3785, %v3801
  %v3851 = vcombine.high %v3785, %v3801
  %v3853 = vunpack.c.l.s4 1934713408
  %v3854 = vunpack.c.0.s8 %v3853
  %v3855 = vlaneseq
  %v3856 = vshrl.u32 %v3855, 7
  %v3857 = vsub.s32 %v3854, %v3856
  %v3858 = vrot.slane %v3850, %v3857
  %v3860 = vunpack.c.l.s4 1934713408
  %v3861 = vunpack.c.0.s8 %v3860
  %v3862 = vlaneseq
  %v3863 = vshrl.u32 %v3862, 7
  %v3864 = vsub.s32 %v3861, %v3863
  %v3865 = vrot.slane %v3851, %v3864
  %v3866 = vcombine.low %v3810, %v3826
  %v3867 = vcombine.high %v3810, %v3826
  %v3869 = vunpack.c.l.s4 1934713408
  %v3870 = vunpack.c.0.s8 %v3869
  %v3871 = vlaneseq
  %v3872 = vshrl.u32 %v3871, 7
  %v3873 = vsub.s32 %v3870, %v3872
  %v3874 = vrot.slane %v3866, %v3873
  %v3876 = vunpack.c.l.s4 1934713408
  %v3877 = vunpack.c.0.s8 %v3876
  %v3878 = vlaneseq
  %v3879 = vshrl.u32 %v3878, 7
  %v3880 = vsub.s32 %v3877, %v3879
  %v3881 = vrot.slane %v3867, %v3880
  %v3882 = vcombine.low %v3817, %v3833
  %v3883 = vcombine.high %v3817, %v3833
  %v3885 = vunpack.c.l.s4 1934713408
  %v3886 = vunpack.c.0.s8 %v3885
  %v3887 = vlaneseq
  %v3888 = vshrl.u32 %v3887, 7
  %v3889 = vsub.s32 %v3886, %v3888
  %v3890 = vrot.slane %v3882, %v3889
  %v3892 = vunpack.c.l.s4 1934713408
  %v3893 = vunpack.c.0.s8 %v3892
  %v3894 = vlaneseq
  %v3895 = vshrl.u32 %v3894, 7
  %v3896 = vsub.s32 %v3893, %v3895
  %v3897 = vrot.slane %v3883, %v3896
  %v3898 = vcombine.low %v3842, %v3874
  %v3899 = vcombine.high %v3842, %v3874
  %v3900 = vcombine.low %v3849, %v3881
  %v3901 = vcombine.high %v3849, %v3881
  %v3902 = vcombine.low %v3858, %v3890
  %v3903 = vcombine.high %v3858, %v3890
  %v3904 = vcombine.low %v3865, %v3897
  %v3905 = vcombine.high %v3865, %v3897
  %v3906 = vcombine.low %v2948, %v3060
  %v3907 = vcombine.high %v2948, %v3060
  %v3909 = vunpack.c.l.s4 1983009808
  %v3910 = vunpack.c.0.s8 %v3909
  %v3911 = vlaneseq
  %v3912 = vshrl.u32 %v3911, 7
  %v3913 = vsub.s32 %v3910, %v3912
  %v3914 = vrot.slane %v3906, %v3913
  %v3916 = vunpack.c.l.s4 1983009808
  %v3917 = vunpack.c.0.s8 %v3916
  %v3918 = vlaneseq
  %v3919 = vshrl.u32 %v3918, 7
  %v3920 = vsub.s32 %v3917, %v3919
  %v3921 = vrot.slane %v3907, %v3920
  %v3922 = vcombine.low %v3004, %v3116
  %v3923 = vcombine.high %v3004, %v3116
  %v3925 = vunpack.c.l.s4 1983009808
  %v3926 = vunpack.c.0.s8 %v3925
  %v3927 = vlaneseq
  %v3928 = vshrl.u32 %v3927, 7
  %v3929 = vsub.s32 %v3926, %v3928
  %v3930 = vrot.slane %v3922, %v3929
  %v3932 = vunpack.c.l.s4 1983009808
  %v3933 = vunpack.c.0.s8 %v3932
  %v3934 = vlaneseq
  %v3935 = vshrl.u32 %v3934, 7
  %v3936 = vsub.s32 %v3933, %v3935
  %v3937 = vrot.slane %v3923, %v3936
  %v3938 = vcombine.low %v3172, %v3284
  %v3939 = vcombine.high %v3172, %v3284
  %v3941 = vunpack.c.l.s4 1983009808
  %v3942 = vunpack.c.0.s8 %v3941
  %v3943 = vlaneseq
  %v3944 = vshrl.u32 %v3943, 7
  %v3945 = vsub.s32 %v3942, %v3944
  %v3946 = vrot.slane %v3938, %v3945
  %v3948 = vunpack.c.l.s4 1983009808
  %v3949 = vunpack.c.0.s8 %v3948
  %v3950 = vlaneseq
  %v3951 = vshrl.u32 %v3950, 7
  %v3952 = vsub.s32 %v3949, %v3951
  %v3953 = vrot.slane %v3939, %v3952
  %v3954 = vcombine.low %v3228, %v3340
  %v3955 = vcombine.high %v3228, %v3340
  %v3957 = vunpack.c.l.s4 1983009808
  %v3958 = vunpack.c.0.s8 %v3957
  %v3959 = vlaneseq
  %v3960 = vshrl.u32 %v3959, 7
  %v3961 = vsub.s32 %v3958, %v3960
  %v3962 = vrot.slane %v3954, %v3961
  %v3964 = vunpack.c.l.s4 1983009808
  %v3965 = vunpack.c.0.s8 %v3964
  %v3966 = vlaneseq
  %v3967 = vshrl.u32 %v3966, 7
  %v3968 = vsub.s32 %v3965, %v3967
  %v3969 = vrot.slane %v3955, %v3968
  %v3970 = vcombine.low %v3914, %v3930
  %v3971 = vcombine.high %v3914, %v3930
  %v3973 = vunpack.c.l.s4 1934713408
  %v3974 = vunpack.c.0.s8 %v3973
  %v3975 = vlaneseq
  %v3976 = vshrl.u32 %v3975, 7
  %v3977 = vsub.s32 %v3974, %v3976
  %v3978 = vrot.slane %v3970, %v3977
  %v3980 = vunpack.c.l.s4 1934713408
  %v3981 = vunpack.c.0.s8 %v3980
  %v3982 = vlaneseq
  %v3983 = vshrl.u32 %v3982, 7
  %v3984 = vsub.s32 %v3981, %v3983
  %v3985 = vrot.slane %v3971, %v3984
  %v3986 = vcombine.low %v3921, %v3937
  %v3987 = vcombine.high %v3921, %v3937
  %v3989 = vunpack.c.l.s4 1934713408
  %v3990 = vunpack.c.0.s8 %v3989
  %v3991 = vlaneseq
  %v3992 = vshrl.u32 %v3991, 7
  %v3993 = vsub.s32 %v3990, %v3992
  %v3994 = vrot.slane %v3986, %v3993
  %v3996 = vunpack.c.l.s4 1934713408
  %v3997 = vunpack.c.0.s8 %v3996
  %v3998 = vlaneseq
  %v3999 = vshrl.u32 %v3998, 7
  %v4000 = vsub.s32 %v3997, %v3999
  %v4001 = vrot.slane %v3987, %v4000
  %v4002 = vcombine.low %v3946, %v3962
  %v4003 = vcombine.high %v3946, %v3962
  %v4005 = vunpack.c.l.s4 1934713408
  %v4006 = vunpack.c.0.s8 %v4005
  %v4007 = vlaneseq
  %v4008 = vshrl.u32 %v4007, 7
  %v4009 = vsub.s32 %v4006, %v4008
  %v4010 = vrot.slane %v4002, %v4009
  %v4012 = vunpack.c.l.s4 1934713408
  %v4013 = vunpack.c.0.s8 %v4012
  %v4014 = vlaneseq
  %v4015 = vshrl.u32 %v4014, 7
  %v4016 = vsub.s32 %v4013, %v4015
  %v4017 = vrot.slane %v4003, %v4016
  %v4018 = vcombine.low %v3953, %v3969
  %v4019 = vcombine.high %v3953, %v3969
  %v4021 = vunpack.c.l.s4 1934713408
  %v4022 = vunpack.c.0.s8 %v4021
  %v4023 = vlaneseq
  %v4024 = vshrl.u32 %v4023, 7
  %v4025 = vsub.s32 %v4022, %v4024
  %v4026 = vrot.slane %v4018, %v4025
  %v4028 = vunpack.c.l.s4 1934713408
  %v4029 = vunpack.c.0.s8 %v4028
  %v4030 = vlaneseq
  %v4031 = vshrl.u32 %v4030, 7
  %v4032 = vsub.s32 %v4029, %v4031
  %v4033 = vrot.slane %v4019, %v4032
  %v4034 = vcombine.low %v3978, %v4010
  %v4035 = vcombine.high %v3978, %v4010
  %v4036 = vcombine.low %v3985, %v4017
  %v4037 = vcombine.high %v3985, %v4017
  %v4038 = vcombine.low %v3994, %v4026
  %v4039 = vcombine.high %v3994, %v4026
  %v4040 = vcombine.low %v4001, %v4033
  %v4041 = vcombine.high %v4001, %v4033
  %v4042 = vcombine.low %v2955, %v3067
  %v4043 = vcombine.high %v2955, %v3067
  %v4045 = vunpack.c.l.s4 1983009808
  %v4046 = vunpack.c.0.s8 %v4045
  %v4047 = vlaneseq
  %v4048 = vshrl.u32 %v4047, 7
  %v4049 = vsub.s32 %v4046, %v4048
  %v4050 = vrot.slane %v4042, %v4049
  %v4052 = vunpack.c.l.s4 1983009808
  %v4053 = vunpack.c.0.s8 %v4052
  %v4054 = vlaneseq
  %v4055 = vshrl.u32 %v4054, 7
  %v4056 = vsub.s32 %v4053, %v4055
  %v4057 = vrot.slane %v4043, %v4056
  %v4058 = vcombine.low %v3011, %v3123
  %v4059 = vcombine.high %v3011, %v3123
  %v4061 = vunpack.c.l.s4 1983009808
  %v4062 = vunpack.c.0.s8 %v4061
  %v4063 = vlaneseq
  %v4064 = vshrl.u32 %v4063, 7
  %v4065 = vsub.s32 %v4062, %v4064
  %v4066 = vrot.slane %v4058, %v4065
  %v4068 = vunpack.c.l.s4 1983009808
  %v4069 = vunpack.c.0.s8 %v4068
  %v4070 = vlaneseq
  %v4071 = vshrl.u32 %v4070, 7
  %v4072 = vsub.s32 %v4069, %v4071
  %v4073 = vrot.slane %v4059, %v4072
  %v4074 = vcombine.low %v3179, %v3291
  %v4075 = vcombine.high %v3179, %v3291
  %v4077 = vunpack.c.l.s4 1983009808
  %v4078 = vunpack.c.0.s8 %v4077
  %v4079 = vlaneseq
  %v4080 = vshrl.u32 %v4079, 7
  %v4081 = vsub.s32 %v4078, %v4080
  %v4082 = vrot.slane %v4074, %v4081
  %v4084 = vunpack.c.l.s4 1983009808
  %v4085 = vunpack.c.0.s8 %v4084
  %v4086 = vlaneseq
  %v4087 = vshrl.u32 %v4086, 7
  %v4088 = vsub.s32 %v4085, %v4087
  %v4089 = vrot.slane %v4075, %v4088
  %v4090 = vcombine.low %v3235, %v3347
  %v4091 = vcombine.high %v3235, %v3347
  %v4093 = vunpack.c.l.s4 1983009808
  %v4094 = vunpack.c.0.s8 %v4093
  %v4095 = vlaneseq
  %v4096 = vshrl.u32 %v4095, 7
  %v4097 = vsub.s32 %v4094, %v4096
  %v4098 = vrot.slane %v4090, %v4097
  %v4100 = vunpack.c.l.s4 1983009808
  %v4101 = vunpack.c.0.s8 %v4100
  %v4102 = vlaneseq
  %v4103 = vshrl.u32 %v4102, 7
  %v4104 = vsub.s32 %v4101, %v4103
  %v4105 = vrot.slane %v4091, %v4104
  %v4106 = vcombine.low %v4050, %v4066
  %v4107 = vcombine.high %v4050, %v4066
  %v4109 = vunpack.c.l.s4 1934713408
  %v4110 = vunpack.c.0.s8 %v4109
  %v4111 = vlaneseq
  %v4112 = vshrl.u32 %v4111, 7
  %v4113 = vsub.s32 %v4110, %v4112
  %v4114 = vrot.slane %v4106, %v4113
  %v4116 = vunpack.c.l.s4 1934713408
  %v4117 = vunpack.c.0.s8 %v4116
  %v4118 = vlaneseq
  %v4119 = vshrl.u32 %v4118, 7
  %v4120 = vsub.s32 %v4117, %v4119
  %v4121 = vrot.slane %v4107, %v4120
  %v4122 = vcombine.low %v4057, %v4073
  %v4123 = vcombine.high %v4057, %v4073
  %v4125 = vunpack.c.l.s4 1934713408
  %v4126 = vunpack.c.0.s8 %v4125
  %v4127 = vlaneseq
  %v4128 = vshrl.u32 %v4127, 7
  %v4129 = vsub.s32 %v4126, %v4128
  %v4130 = vrot.slane %v4122, %v4129
  %v4132 = vunpack.c.l.s4 1934713408
  %v4133 = vunpack.c.0.s8 %v4132
  %v4134 = vlaneseq
  %v4135 = vshrl.u32 %v4134, 7
  %v4136 = vsub.s32 %v4133, %v4135
  %v4137 = vrot.slane %v4123, %v4136
  %v4138 = vcombine.low %v4082, %v4098
  %v4139 = vcombine.high %v4082, %v4098
  %v4141 = vunpack.c.l.s4 1934713408
  %v4142 = vunpack.c.0.s8 %v4141
  %v4143 = vlaneseq
  %v4144 = vshrl.u32 %v4143, 7
  %v4145 = vsub.s32 %v4142, %v4144
  %v4146 = vrot.slane %v4138, %v4145
  %v4148 = vunpack.c.l.s4 1934713408
  %v4149 = vunpack.c.0.s8 %v4148
  %v4150 = vlaneseq
  %v4151 = vshrl.u32 %v4150, 7
  %v4152 = vsub.s32 %v4149, %v4151
  %v4153 = vrot.slane %v4139, %v4152
  %v4154 = vcombine.low %v4089, %v4105
  %v4155 = vcombine.high %v4089, %v4105
  %v4157 = vunpack.c.l.s4 1934713408
  %v4158 = vunpack.c.0.s8 %v4157
  %v4159 = vlaneseq
  %v4160 = vshrl.u32 %v4159, 7
  %v4161 = vsub.s32 %v4158, %v4160
  %v4162 = vrot.slane %v4154, %v4161
  %v4164 = vunpack.c.l.s4 1934713408
  %v4165 = vunpack.c.0.s8 %v4164
  %v4166 = vlaneseq
  %v4167 = vshrl.u32 %v4166, 7
  %v4168 = vsub.s32 %v4165, %v4167
  %v4169 = vrot.slane %v4155, %v4168
  %v4170 = vcombine.low %v4114, %v4146
  %v4171 = vcombine.high %v4114, %v4146
  %v4172 = vcombine.low %v4121, %v4153
  %v4173 = vcombine.high %v4121, %v4153
  %v4174 = vcombine.low %v4130, %v4162
  %v4175 = vcombine.high %v4130, %v4162
  %v4176 = vcombine.low %v4137, %v4169
  %v4177 = vcombine.high %v4137, %v4169
  %v4178 = vcombine.low %v2962, %v3074
  %v4179 = vcombine.high %v2962, %v3074
  %v4181 = vunpack.c.l.s4 1983009808
  %v4182 = vunpack.c.0.s8 %v4181
  %v4183 = vlaneseq
  %v4184 = vshrl.u32 %v4183, 7
  %v4185 = vsub.s32 %v4182, %v4184
  %v4186 = vrot.slane %v4178, %v4185
  %v4188 = vunpack.c.l.s4 1983009808
  %v4189 = vunpack.c.0.s8 %v4188
  %v4190 = vlaneseq
  %v4191 = vshrl.u32 %v4190, 7
  %v4192 = vsub.s32 %v4189, %v4191
  %v4193 = vrot.slane %v4179, %v4192
  %v4194 = vcombine.low %v3018, %v3130
  %v4195 = vcombine.high %v3018, %v3130
  %v4197 = vunpack.c.l.s4 1983009808
  %v4198 = vunpack.c.0.s8 %v4197
  %v4199 = vlaneseq
  %v4200 = vshrl.u32 %v4199, 7
  %v4201 = vsub.s32 %v4198, %v4200
  %v4202 = vrot.slane %v4194, %v4201
  %v4204 = vunpack.c.l.s4 1983009808
  %v4205 = vunpack.c.0.s8 %v4204
  %v4206 = vlaneseq
  %v4207 = vshrl.u32 %v4206, 7
  %v4208 = vsub.s32 %v4205, %v4207
  %v4209 = vrot.slane %v4195, %v4208
  %v4210 = vcombine.low %v3186, %v3298
  %v4211 = vcombine.high %v3186, %v3298
  %v4213 = vunpack.c.l.s4 1983009808
  %v4214 = vunpack.c.0.s8 %v4213
  %v4215 = vlaneseq
  %v4216 = vshrl.u32 %v4215, 7
  %v4217 = vsub.s32 %v4214, %v4216
  %v4218 = vrot.slane %v4210, %v4217
  %v4220 = vunpack.c.l.s4 1983009808
  %v4221 = vunpack.c.0.s8 %v4220
  %v4222 = vlaneseq
  %v4223 = vshrl.u32 %v4222, 7
  %v4224 = vsub.s32 %v4221, %v4223
  %v4225 = vrot.slane %v4211, %v4224
  %v4226 = vcombine.low %v3242, %v3354
  %v4227 = vcombine.high %v3242, %v3354
  %v4229 = vunpack.c.l.s4 1983009808
  %v4230 = vunpack.c.0.s8 %v4229
  %v4231 = vlaneseq
  %v4232 = vshrl.u32 %v4231, 7
  %v4233 = vsub.s32 %v4230, %v4232
  %v4234 = vrot.slane %v4226, %v4233
  %v4236 = vunpack.c.l.s4 1983009808
  %v4237 = vunpack.c.0.s8 %v4236
  %v4238 = vlaneseq
  %v4239 = vshrl.u32 %v4238, 7
  %v4240 = vsub.s32 %v4237, %v4239
  %v4241 = vrot.slane %v4227, %v4240
  %v4242 = vcombine.low %v4186, %v4202
  %v4243 = vcombine.high %v4186, %v4202
  %v4245 = vunpack.c.l.s4 1934713408
  %v4246 = vunpack.c.0.s8 %v4245
  %v4247 = vlaneseq
  %v4248 = vshrl.u32 %v4247, 7
  %v4249 = vsub.s32 %v4246, %v4248
  %v4250 = vrot.slane %v4242, %v4249
  %v4252 = vunpack.c.l.s4 1934713408
  %v4253 = vunpack.c.0.s8 %v4252
  %v4254 = vlaneseq
  %v4255 = vshrl.u32 %v4254, 7
  %v4256 = vsub.s32 %v4253, %v4255
  %v4257 = vrot.slane %v4243, %v4256
  %v4258 = vcombine.low %v4193, %v4209
  %v4259 = vcombine.high %v4193, %v4209
  %v4261 = vunpack.c.l.s4 1934713408
  %v4262 = vunpack.c.0.s8 %v4261
  %v4263 = vlaneseq
  %v4264 = vshrl.u32 %v4263, 7
  %v4265 = vsub.s32 %v4262, %v4264
  %v4266 = vrot.slane %v4258, %v4265
  %v4268 = vunpack.c.l.s4 1934713408
  %v4269 = vunpack.c.0.s8 %v4268
  %v4270 = vlaneseq
  %v4271 = vshrl.u32 %v4270, 7
  %v4272 = vsub.s32 %v4269, %v4271
  %v4273 = vrot.slane %v4259, %v4272
  %v4274 = vcombine.low %v4218, %v4234
  %v4275 = vcombine.high %v4218, %v4234
  %v4277 = vunpack.c.l.s4 1934713408
  %v4278 = vunpack.c.0.s8 %v4277
  %v4279 = vlaneseq
  %v4280 = vshrl.u32 %v4279, 7
  %v4281 = vsub.s32 %v4278, %v4280
  %v4282 = vrot.slane %v4274, %v4281
  %v4284 = vunpack.c.l.s4 1934713408
  %v4285 = vunpack.c.0.s8 %v4284
  %v4286 = vlaneseq
  %v4287 = vshrl.u32 %v4286, 7
  %v4288 = vsub.s32 %v4285, %v4287
  %v4289 = vrot.slane %v4275, %v4288
  %v4290 = vcombine.low %v4225, %v4241
  %v4291 = vcombine.high %v4225, %v4241
  %v4293 = vunpack.c.l.s4 1934713408
  %v4294 = vunpack.c.0.s8 %v4293
  %v4295 = vlaneseq
  %v4296 = vshrl.u32 %v4295, 7
  %v4297 = vsub.s32 %v4294, %v4296
  %v4298 = vrot.slane %v4290, %v4297
  %v4300 = vunpack.c.l.s4 1934713408
  %v4301 = vunpack.c.0.s8 %v4300
  %v4302 = vlaneseq
  %v4303 = vshrl.u32 %v4302, 7
  %v4304 = vsub.s32 %v4301, %v4303
  %v4305 = vrot.slane %v4291, %v4304
  %v4306 = vcombine.low %v4250, %v4282
  %v4307 = vcombine.high %v4250, %v4282
  %v4308 = vcombine.low %v4257, %v4289
  %v4309 = vcombine.high %v4257, %v4289
  %v4310 = vcombine.low %v4266, %v4298
  %v4311 = vcombine.high %v4266, %v4298
  %v4312 = vcombine.low %v4273, %v4305
  %v4313 = vcombine.high %v4273, %v4305
  %v4314 = vcombine.low %v2969, %v3081
  %v4315 = vcombine.high %v2969, %v3081
  %v4317 = vunpack.c.l.s4 1983009808
  %v4318 = vunpack.c.0.s8 %v4317
  %v4319 = vlaneseq
  %v4320 = vshrl.u32 %v4319, 7
  %v4321 = vsub.s32 %v4318, %v4320
  %v4322 = vrot.slane %v4314, %v4321
  %v4324 = vunpack.c.l.s4 1983009808
  %v4325 = vunpack.c.0.s8 %v4324
  %v4326 = vlaneseq
  %v4327 = vshrl.u32 %v4326, 7
  %v4328 = vsub.s32 %v4325, %v4327
  %v4329 = vrot.slane %v4315, %v4328
  %v4330 = vcombine.low %v3025, %v3137
  %v4331 = vcombine.high %v3025, %v3137
  %v4333 = vunpack.c.l.s4 1983009808
  %v4334 = vunpack.c.0.s8 %v4333
  %v4335 = vlaneseq
  %v4336 = vshrl.u32 %v4335, 7
  %v4337 = vsub.s32 %v4334, %v4336
  %v4338 = vrot.slane %v4330, %v4337
  %v4340 = vunpack.c.l.s4 1983009808
  %v4341 = vunpack.c.0.s8 %v4340
  %v4342 = vlaneseq
  %v4343 = vshrl.u32 %v4342, 7
  %v4344 = vsub.s32 %v4341, %v4343
  %v4345 = vrot.slane %v4331, %v4344
  %v4346 = vcombine.low %v3193, %v3305
  %v4347 = vcombine.high %v3193, %v3305
  %v4349 = vunpack.c.l.s4 1983009808
  %v4350 = vunpack.c.0.s8 %v4349
  %v4351 = vlaneseq
  %v4352 = vshrl.u32 %v4351, 7
  %v4353 = vsub.s32 %v4350, %v4352
  %v4354 = vrot.slane %v4346, %v4353
  %v4356 = vunpack.c.l.s4 1983009808
  %v4357 = vunpack.c.0.s8 %v4356
  %v4358 = vlaneseq
  %v4359 = vshrl.u32 %v4358, 7
  %v4360 = vsub.s32 %v4357, %v4359
  %v4361 = vrot.slane %v4347, %v4360
  %v4362 = vcombine.low %v3249, %v3361
  %v4363 = vcombine.high %v3249, %v3361
  %v4365 = vunpack.c.l.s4 1983009808
  %v4366 = vunpack.c.0.s8 %v4365
  %v4367 = vlaneseq
  %v4368 = vshrl.u32 %v4367, 7
  %v4369 = vsub.s32 %v4366, %v4368
  %v4370 = vrot.slane %v4362, %v4369
  %v4372 = vunpack.c.l.s4 1983009808
  %v4373 = vunpack.c.0.s8 %v4372
  %v4374 = vlaneseq
  %v4375 = vshrl.u32 %v4374, 7
  %v4376 = vsub.s32 %v4373, %v4375
  %v4377 = vrot.slane %v4363, %v4376
  %v4378 = vcombine.low %v4322, %v4338
  %v4379 = vcombine.high %v4322, %v4338
  %v4381 = vunpack.c.l.s4 1934713408
  %v4382 = vunpack.c.0.s8 %v4381
  %v4383 = vlaneseq
  %v4384 = vshrl.u32 %v4383, 7
  %v4385 = vsub.s32 %v4382, %v4384
  %v4386 = vrot.slane %v4378, %v4385
  %v4388 = vunpack.c.l.s4 1934713408
  %v4389 = vunpack.c.0.s8 %v4388
  %v4390 = vlaneseq
  %v4391 = vshrl.u32 %v4390, 7
  %v4392 = vsub.s32 %v4389, %v4391
  %v4393 = vrot.slane %v4379, %v4392
  %v4394 = vcombine.low %v4329, %v4345
  %v4395 = vcombine.high %v4329, %v4345
  %v4397 = vunpack.c.l.s4 1934713408
  %v4398 = vunpack.c.0.s8 %v4397
  %v4399 = vlaneseq
  %v4400 = vshrl.u32 %v4399, 7
  %v4401 = vsub.s32 %v4398, %v4400
  %v4402 = vrot.slane %v4394, %v4401
  %v4404 = vunpack.c.l.s4 1934713408
  %v4405 = vunpack.c.0.s8 %v4404
  %v4406 = vlaneseq
  %v4407 = vshrl.u32 %v4406, 7
  %v4408 = vsub.s32 %v4405, %v4407
  %v4409 = vrot.slane %v4395, %v4408
  %v4410 = vcombine.low %v4354, %v4370
  %v4411 = vcombine.high %v4354, %v4370
  %v4413 = vunpack.c.l.s4 1934713408
  %v4414 = vunpack.c.0.s8 %v4413
  %v4415 = vlaneseq
  %v4416 = vshrl.u32 %v4415, 7
  %v4417 = vsub.s32 %v4414, %v4416
  %v4418 = vrot.slane %v4410, %v4417
  %v4420 = vunpack.c.l.s4 1934713408
  %v4421 = vunpack.c.0.s8 %v4420
  %v4422 = vlaneseq
  %v4423 = vshrl.u32 %v4422, 7
  %v4424 = vsub.s32 %v4421, %v4423
  %v4425 = vrot.slane %v4411, %v4424
  %v4426 = vcombine.low %v4361, %v4377
  %v4427 = vcombine.high %v4361, %v4377
  %v4429 = vunpack.c.l.s4 1934713408
  %v4430 = vunpack.c.0.s8 %v4429
  %v4431 = vlaneseq
  %v4432 = vshrl.u32 %v4431, 7
  %v4433 = vsub.s32 %v4430, %v4432
  %v4434 = vrot.slane %v4426, %v4433
  %v4436 = vunpack.c.l.s4 1934713408
  %v4437 = vunpack.c.0.s8 %v4436
  %v4438 = vlaneseq
  %v4439 = vshrl.u32 %v4438, 7
  %v4440 = vsub.s32 %v4437, %v4439
  %v4441 = vrot.slane %v4427, %v4440
  %v4442 = vcombine.low %v4386, %v4418
  %v4443 = vcombine.high %v4386, %v4418
  %v4444 = vcombine.low %v4393, %v4425
  %v4445 = vcombine.high %v4393, %v4425
  %v4446 = vcombine.low %v4402, %v4434
  %v4447 = vcombine.high %v4402, %v4434
  %v4448 = vcombine.low %v4409, %v4441
  %v4449 = vcombine.high %v4409, %v4441
  %4451 = vrot.lane.b32.xlu0 %v3491, 16
  %v4452 = vpop.permute.xlu0 %4451
  %4455 = vrot.lane.b32.xlu0 %v3492, 32
  %v4456 = vpop.permute.xlu0 %4455
  %4459 = vrot.lane.b32.xlu0 %v3493, 48
  %v4460 = vpop.permute.xlu0 %4459
  %4463 = vrot.lane.b32.xlu0 %v3494, 64
  %v4464 = vpop.permute.xlu0 %4463
  %4467 = vrot.lane.b32.xlu0 %v3495, 80
  %v4468 = vpop.permute.xlu0 %4467
  %4471 = vrot.lane.b32.xlu0 %v3496, 96
  %v4472 = vpop.permute.xlu0 %4471
  %4475 = vrot.lane.b32.xlu0 %v3497, 112
  %v4476 = vpop.permute.xlu0 %4475
  %4479 = vrot.lane.b32.xlu0 %v3627, 16
  %v4480 = vpop.permute.xlu0 %4479
  %4483 = vrot.lane.b32.xlu0 %v3628, 32
  %v4484 = vpop.permute.xlu0 %4483
  %4487 = vrot.lane.b32.xlu0 %v3629, 48
  %v4488 = vpop.permute.xlu0 %4487
  %4491 = vrot.lane.b32.xlu0 %v3630, 64
  %v4492 = vpop.permute.xlu0 %4491
  %4495 = vrot.lane.b32.xlu0 %v3631, 80
  %v4496 = vpop.permute.xlu0 %4495
  %4499 = vrot.lane.b32.xlu0 %v3632, 96
  %v4500 = vpop.permute.xlu0 %4499
  %4503 = vrot.lane.b32.xlu0 %v3633, 112
  %v4504 = vpop.permute.xlu0 %4503
  %4507 = vrot.lane.b32.xlu0 %v3763, 16
  %v4508 = vpop.permute.xlu0 %4507
  %4511 = vrot.lane.b32.xlu0 %v3764, 32
  %v4512 = vpop.permute.xlu0 %4511
  %4515 = vrot.lane.b32.xlu0 %v3765, 48
  %v4516 = vpop.permute.xlu0 %4515
  %4519 = vrot.lane.b32.xlu0 %v3766, 64
  %v4520 = vpop.permute.xlu0 %4519
  %4523 = vrot.lane.b32.xlu0 %v3767, 80
  %v4524 = vpop.permute.xlu0 %4523
  %4527 = vrot.lane.b32.xlu0 %v3768, 96
  %v4528 = vpop.permute.xlu0 %4527
  %4531 = vrot.lane.b32.xlu0 %v3769, 112
  %v4532 = vpop.permute.xlu0 %4531
  %4535 = vrot.lane.b32.xlu0 %v3899, 16
  %v4536 = vpop.permute.xlu0 %4535
  %4539 = vrot.lane.b32.xlu0 %v3900, 32
  %v4540 = vpop.permute.xlu0 %4539
  %4543 = vrot.lane.b32.xlu0 %v3901, 48
  %v4544 = vpop.permute.xlu0 %4543
  %4547 = vrot.lane.b32.xlu0 %v3902, 64
  %v4548 = vpop.permute.xlu0 %4547
  %4551 = vrot.lane.b32.xlu0 %v3903, 80
  %v4552 = vpop.permute.xlu0 %4551
  %4555 = vrot.lane.b32.xlu0 %v3904, 96
  %v4556 = vpop.permute.xlu0 %4555
  %4559 = vrot.lane.b32.xlu0 %v3905, 112
  %v4560 = vpop.permute.xlu0 %4559
  %4563 = vrot.lane.b32.xlu0 %v4035, 16
  %v4564 = vpop.permute.xlu0 %4563
  %4567 = vrot.lane.b32.xlu0 %v4036, 32
  %v4568 = vpop.permute.xlu0 %4567
  %4571 = vrot.lane.b32.xlu0 %v4037, 48
  %v4572 = vpop.permute.xlu0 %4571
  %4575 = vrot.lane.b32.xlu0 %v4038, 64
  %v4576 = vpop.permute.xlu0 %4575
  %4579 = vrot.lane.b32.xlu0 %v4039, 80
  %v4580 = vpop.permute.xlu0 %4579
  %4583 = vrot.lane.b32.xlu0 %v4040, 96
  %v4584 = vpop.permute.xlu0 %4583
  %4587 = vrot.lane.b32.xlu0 %v4041, 112
  %v4588 = vpop.permute.xlu0 %4587
  %4591 = vrot.lane.b32.xlu0 %v4171, 16
  %v4592 = vpop.permute.xlu0 %4591
  %4595 = vrot.lane.b32.xlu0 %v4172, 32
  %v4596 = vpop.permute.xlu0 %4595
  %4599 = vrot.lane.b32.xlu0 %v4173, 48
  %v4600 = vpop.permute.xlu0 %4599
  %4603 = vrot.lane.b32.xlu0 %v4174, 64
  %v4604 = vpop.permute.xlu0 %4603
  %4607 = vrot.lane.b32.xlu0 %v4175, 80
  %v4608 = vpop.permute.xlu0 %4607
  %4611 = vrot.lane.b32.xlu0 %v4176, 96
  %v4612 = vpop.permute.xlu0 %4611
  %4615 = vrot.lane.b32.xlu0 %v4177, 112
  %v4616 = vpop.permute.xlu0 %4615
  %4619 = vrot.lane.b32.xlu0 %v4307, 16
  %v4620 = vpop.permute.xlu0 %4619
  %4623 = vrot.lane.b32.xlu0 %v4308, 32
  %v4624 = vpop.permute.xlu0 %4623
  %4627 = vrot.lane.b32.xlu0 %v4309, 48
  %v4628 = vpop.permute.xlu0 %4627
  %4631 = vrot.lane.b32.xlu0 %v4310, 64
  %v4632 = vpop.permute.xlu0 %4631
  %4635 = vrot.lane.b32.xlu0 %v4311, 80
  %v4636 = vpop.permute.xlu0 %4635
  %4639 = vrot.lane.b32.xlu0 %v4312, 96
  %v4640 = vpop.permute.xlu0 %4639
  %4643 = vrot.lane.b32.xlu0 %v4313, 112
  %v4644 = vpop.permute.xlu0 %4643
  %4647 = vrot.lane.b32.xlu0 %v4443, 16
  %v4648 = vpop.permute.xlu0 %4647
  %4651 = vrot.lane.b32.xlu0 %v4444, 32
  %v4652 = vpop.permute.xlu0 %4651
  %4655 = vrot.lane.b32.xlu0 %v4445, 48
  %v4656 = vpop.permute.xlu0 %4655
  %4659 = vrot.lane.b32.xlu0 %v4446, 64
  %v4660 = vpop.permute.xlu0 %4659
  %4663 = vrot.lane.b32.xlu0 %v4447, 80
  %v4664 = vpop.permute.xlu0 %4663
  %4667 = vrot.lane.b32.xlu0 %v4448, 96
  %v4668 = vpop.permute.xlu0 %4667
  %4671 = vrot.lane.b32.xlu0 %v4449, 112
  %v4672 = vpop.permute.xlu0 %4671
  %v4674 = vsel %vm2913, %v3490, %v4452
  %v4675 = vsel %vm287, %v4674, %v4456
  %vm4676 = vcmask 392192
  %v4677 = vsel %vm4676, %v4675, %v4460
  %vm4678 = vcmask 523264
  %v4679 = vsel %vm4678, %v4677, %v4464
  %vm4680 = vcmask 654336
  %v4681 = vsel %vm4680, %v4679, %v4468
  %vm4682 = vcmask 785408
  %v4683 = vsel %vm4682, %v4681, %v4472
  %vm4684 = vcmask 916480
  %v4685 = vsel %vm4684, %v4683, %v4476
  %v4686 = vsel %vm2913, %v3626, %v4480
  %v4687 = vsel %vm287, %v4686, %v4484
  %v4688 = vsel %vm4676, %v4687, %v4488
  %v4689 = vsel %vm4678, %v4688, %v4492
  %v4690 = vsel %vm4680, %v4689, %v4496
  %v4691 = vsel %vm4682, %v4690, %v4500
  %v4692 = vsel %vm4684, %v4691, %v4504
  %v4693 = vsel %vm2913, %v3762, %v4508
  %v4694 = vsel %vm287, %v4693, %v4512
  %v4695 = vsel %vm4676, %v4694, %v4516
  %v4696 = vsel %vm4678, %v4695, %v4520
  %v4697 = vsel %vm4680, %v4696, %v4524
  %v4698 = vsel %vm4682, %v4697, %v4528
  %v4699 = vsel %vm4684, %v4698, %v4532
  %v4700 = vsel %vm2913, %v3898, %v4536
  %v4701 = vsel %vm287, %v4700, %v4540
  %v4702 = vsel %vm4676, %v4701, %v4544
  %v4703 = vsel %vm4678, %v4702, %v4548
  %v4704 = vsel %vm4680, %v4703, %v4552
  %v4705 = vsel %vm4682, %v4704, %v4556
  %v4706 = vsel %vm4684, %v4705, %v4560
  %v4707 = vsel %vm2913, %v4034, %v4564
  %v4708 = vsel %vm287, %v4707, %v4568
  %v4709 = vsel %vm4676, %v4708, %v4572
  %v4710 = vsel %vm4678, %v4709, %v4576
  %v4711 = vsel %vm4680, %v4710, %v4580
  %v4712 = vsel %vm4682, %v4711, %v4584
  %v4713 = vsel %vm4684, %v4712, %v4588
  %v4714 = vsel %vm2913, %v4170, %v4592
  %v4715 = vsel %vm287, %v4714, %v4596
  %v4716 = vsel %vm4676, %v4715, %v4600
  %v4717 = vsel %vm4678, %v4716, %v4604
  %v4718 = vsel %vm4680, %v4717, %v4608
  %v4719 = vsel %vm4682, %v4718, %v4612
  %v4720 = vsel %vm4684, %v4719, %v4616
  %v4721 = vsel %vm2913, %v4306, %v4620
  %v4722 = vsel %vm287, %v4721, %v4624
  %v4723 = vsel %vm4676, %v4722, %v4628
  %v4724 = vsel %vm4678, %v4723, %v4632
  %v4725 = vsel %vm4680, %v4724, %v4636
  %v4726 = vsel %vm4682, %v4725, %v4640
  %v4727 = vsel %vm4684, %v4726, %v4644
  %v4728 = vsel %vm2913, %v4442, %v4648
  %v4729 = vsel %vm287, %v4728, %v4652
  %v4730 = vsel %vm4676, %v4729, %v4656
  %v4731 = vsel %vm4678, %v4730, %v4660
  %v4732 = vsel %vm4680, %v4731, %v4664
  %v4733 = vsel %vm4682, %v4732, %v4668
  %v4734 = vsel %vm4684, %v4733, %v4672
  %v4735 = vld [vmem:[%s3] sm:$0xff]
  %v4736 = vld [vmem:[%s3 + $0x8] sm:$0xff]
  %v4737 = vld [vmem:[%s3 + $0x10] sm:$0xff]
  %v4738 = vld [vmem:[%s3 + $0x18] sm:$0xff]
  %v4739 = vld [vmem:[%s3 + $0x20] sm:$0xff]
  %v4740 = vld [vmem:[%s3 + $0x28] sm:$0xff]
  %v4741 = vld [vmem:[%s3 + $0x30] sm:$0xff]
  %v4742 = vld [vmem:[%s3 + $0x38] sm:$0xff]
  %v4743 = vld [vmem:[%s3 + $0x40] sm:$0xff]
  %v4744 = vld [vmem:[%s3 + $0x48] sm:$0xff]
  %v4745 = vld [vmem:[%s3 + $0x50] sm:$0xff]
  %v4746 = vld [vmem:[%s3 + $0x58] sm:$0xff]
  %v4747 = vld [vmem:[%s3 + $0x60] sm:$0xff]
  %v4748 = vld [vmem:[%s3 + $0x68] sm:$0xff]
  %v4749 = vld [vmem:[%s3 + $0x70] sm:$0xff]
  %v4750 = vld [vmem:[%s3 + $0x78] sm:$0xff]
  %v4751 = vld [vmem:[%s3 + $0x80] sm:$0xff]
  %v4752 = vld [vmem:[%s3 + $0x88] sm:$0xff]
  %v4753 = vld [vmem:[%s3 + $0x90] sm:$0xff]
  %v4754 = vld [vmem:[%s3 + $0x98] sm:$0xff]
  %v4755 = vld [vmem:[%s3 + $0xa0] sm:$0xff]
  %v4756 = vld [vmem:[%s3 + $0xa8] sm:$0xff]
  %v4757 = vld [vmem:[%s3 + $0xb0] sm:$0xff]
  %v4758 = vld [vmem:[%s3 + $0xb8] sm:$0xff]
  %v4759 = vld [vmem:[%s3 + $0xc0] sm:$0xff]
  %v4760 = vld [vmem:[%s3 + $0xc8] sm:$0xff]
  %v4761 = vld [vmem:[%s3 + $0xd0] sm:$0xff]
  %v4762 = vld [vmem:[%s3 + $0xd8] sm:$0xff]
  %v4763 = vld [vmem:[%s3 + $0xe0] sm:$0xff]
  %v4764 = vld [vmem:[%s3 + $0xe8] sm:$0xff]
  %v4765 = vld [vmem:[%s3 + $0xf0] sm:$0xff]
  %v4766 = vld [vmem:[%s3 + $0xf8] sm:$0xff]
  %v4767 = vld [vmem:[%s3 + $0x100] sm:$0xff]
  %v4768 = vld [vmem:[%s3 + $0x108] sm:$0xff]
  %v4769 = vld [vmem:[%s3 + $0x110] sm:$0xff]
  %v4770 = vld [vmem:[%s3 + $0x118] sm:$0xff]
  %v4771 = vld [vmem:[%s3 + $0x120] sm:$0xff]
  %v4772 = vld [vmem:[%s3 + $0x128] sm:$0xff]
  %v4773 = vld [vmem:[%s3 + $0x130] sm:$0xff]
  %v4774 = vld [vmem:[%s3 + $0x138] sm:$0xff]
  %v4775 = vld [vmem:[%s3 + $0x140] sm:$0xff]
  %v4776 = vld [vmem:[%s3 + $0x148] sm:$0xff]
  %v4777 = vld [vmem:[%s3 + $0x150] sm:$0xff]
  %v4778 = vld [vmem:[%s3 + $0x158] sm:$0xff]
  %v4779 = vld [vmem:[%s3 + $0x160] sm:$0xff]
  %v4780 = vld [vmem:[%s3 + $0x168] sm:$0xff]
  %v4781 = vld [vmem:[%s3 + $0x170] sm:$0xff]
  %v4782 = vld [vmem:[%s3 + $0x178] sm:$0xff]
  %v4783 = vld [vmem:[%s3 + $0x180] sm:$0xff]
  %v4784 = vld [vmem:[%s3 + $0x188] sm:$0xff]
  %v4785 = vld [vmem:[%s3 + $0x190] sm:$0xff]
  %v4786 = vld [vmem:[%s3 + $0x198] sm:$0xff]
  %v4787 = vld [vmem:[%s3 + $0x1a0] sm:$0xff]
  %v4788 = vld [vmem:[%s3 + $0x1a8] sm:$0xff]
  %v4789 = vld [vmem:[%s3 + $0x1b0] sm:$0xff]
  %v4790 = vld [vmem:[%s3 + $0x1b8] sm:$0xff]
  %v4791 = vld [vmem:[%s3 + $0x1c0] sm:$0xff]
  %v4792 = vld [vmem:[%s3 + $0x1c8] sm:$0xff]
  %v4793 = vld [vmem:[%s3 + $0x1d0] sm:$0xff]
  %v4794 = vld [vmem:[%s3 + $0x1d8] sm:$0xff]
  %v4795 = vld [vmem:[%s3 + $0x1e0] sm:$0xff]
  %v4796 = vld [vmem:[%s3 + $0x1e8] sm:$0xff]
  %v4797 = vld [vmem:[%s3 + $0x1f0] sm:$0xff]
  %v4798 = vld [vmem:[%s3 + $0x1f8] sm:$0xff]
  %v4799 = vld [vmem:[%s3 + $0x200] sm:$0xff]
  %v4800 = vld [vmem:[%s3 + $0x208] sm:$0xff]
  %v4801 = vld [vmem:[%s3 + $0x210] sm:$0xff]
  %v4802 = vld [vmem:[%s3 + $0x218] sm:$0xff]
  %v4803 = vld [vmem:[%s3 + $0x220] sm:$0xff]
  %v4804 = vld [vmem:[%s3 + $0x228] sm:$0xff]
  %v4805 = vld [vmem:[%s3 + $0x230] sm:$0xff]
  %v4806 = vld [vmem:[%s3 + $0x238] sm:$0xff]
  %v4807 = vld [vmem:[%s3 + $0x240] sm:$0xff]
  %v4808 = vld [vmem:[%s3 + $0x248] sm:$0xff]
  %v4809 = vld [vmem:[%s3 + $0x250] sm:$0xff]
  %v4810 = vld [vmem:[%s3 + $0x258] sm:$0xff]
  %v4811 = vld [vmem:[%s3 + $0x260] sm:$0xff]
  %v4812 = vld [vmem:[%s3 + $0x268] sm:$0xff]
  %v4813 = vld [vmem:[%s3 + $0x270] sm:$0xff]
  %v4814 = vld [vmem:[%s3 + $0x278] sm:$0xff]
  %v4815 = vld [vmem:[%s3 + $0x280] sm:$0xff]
  %v4816 = vld [vmem:[%s3 + $0x288] sm:$0xff]
  %v4817 = vld [vmem:[%s3 + $0x290] sm:$0xff]
  %v4818 = vld [vmem:[%s3 + $0x298] sm:$0xff]
  %v4819 = vld [vmem:[%s3 + $0x2a0] sm:$0xff]
  %v4820 = vld [vmem:[%s3 + $0x2a8] sm:$0xff]
  %v4821 = vld [vmem:[%s3 + $0x2b0] sm:$0xff]
  %v4822 = vld [vmem:[%s3 + $0x2b8] sm:$0xff]
  %v4823 = vld [vmem:[%s3 + $0x2c0] sm:$0xff]
  %v4824 = vld [vmem:[%s3 + $0x2c8] sm:$0xff]
  %v4825 = vld [vmem:[%s3 + $0x2d0] sm:$0xff]
  %v4826 = vld [vmem:[%s3 + $0x2d8] sm:$0xff]
  %v4827 = vld [vmem:[%s3 + $0x2e0] sm:$0xff]
  %v4828 = vld [vmem:[%s3 + $0x2e8] sm:$0xff]
  %v4829 = vld [vmem:[%s3 + $0x2f0] sm:$0xff]
  %v4830 = vld [vmem:[%s3 + $0x2f8] sm:$0xff]
  %v4831 = vld [vmem:[%s3 + $0x300] sm:$0xff]
  %v4832 = vld [vmem:[%s3 + $0x308] sm:$0xff]
  %v4833 = vld [vmem:[%s3 + $0x310] sm:$0xff]
  %v4834 = vld [vmem:[%s3 + $0x318] sm:$0xff]
  %v4835 = vld [vmem:[%s3 + $0x320] sm:$0xff]
  %v4836 = vld [vmem:[%s3 + $0x328] sm:$0xff]
  %v4837 = vld [vmem:[%s3 + $0x330] sm:$0xff]
  %v4838 = vld [vmem:[%s3 + $0x338] sm:$0xff]
  %v4839 = vld [vmem:[%s3 + $0x340] sm:$0xff]
  %v4840 = vld [vmem:[%s3 + $0x348] sm:$0xff]
  %v4841 = vld [vmem:[%s3 + $0x350] sm:$0xff]
  %v4842 = vld [vmem:[%s3 + $0x358] sm:$0xff]
  %v4843 = vld [vmem:[%s3 + $0x360] sm:$0xff]
  %v4844 = vld [vmem:[%s3 + $0x368] sm:$0xff]
  %v4845 = vld [vmem:[%s3 + $0x370] sm:$0xff]
  %v4846 = vld [vmem:[%s3 + $0x378] sm:$0xff]
  %v4847 = vld [vmem:[%s3 + $0x380] sm:$0xff]
  %v4848 = vld [vmem:[%s3 + $0x388] sm:$0xff]
  %v4849 = vld [vmem:[%s3 + $0x390] sm:$0xff]
  %v4850 = vld [vmem:[%s3 + $0x398] sm:$0xff]
  %v4851 = vld [vmem:[%s3 + $0x3a0] sm:$0xff]
  %v4852 = vld [vmem:[%s3 + $0x3a8] sm:$0xff]
  %v4853 = vld [vmem:[%s3 + $0x3b0] sm:$0xff]
  %v4854 = vld [vmem:[%s3 + $0x3b8] sm:$0xff]
  %v4855 = vld [vmem:[%s3 + $0x3c0] sm:$0xff]
  %v4856 = vld [vmem:[%s3 + $0x3c8] sm:$0xff]
  %v4857 = vld [vmem:[%s3 + $0x3d0] sm:$0xff]
  %v4858 = vld [vmem:[%s3 + $0x3d8] sm:$0xff]
  %v4859 = vld [vmem:[%s3 + $0x3e0] sm:$0xff]
  %v4860 = vld [vmem:[%s3 + $0x3e8] sm:$0xff]
  %v4861 = vld [vmem:[%s3 + $0x3f0] sm:$0xff]
  %v4862 = vld [vmem:[%s3 + $0x3f8] sm:$0xff]
  %v4863 = vld [vmem:[%s4] sm:$0x1]
  %v4865 = vlaneseq
  %v4866 = vshrl.u32 %v4865, 7
  %v4867 = vsub.s32 0, %v4866
  %v4868 = vrot.slane %v4863, %v4867
  %4870 = vmatprep.subr.mxu0 0.0
  %4871 = vmatpush1.msra.mxu0 %v4735
  %4872 = vmatprep.subr.mxu0 0.0
  %4873 = vmatpush1.msra.mxu0 %v4736
  %4874 = vmatprep.subr.mxu0 0.0
  %4875 = vmatpush1.msra.mxu0 %v4737
  %4876 = vmatprep.subr.mxu0 0.0
  %4877 = vmatpush1.msra.mxu0 %v4738
  %4878 = vmatprep.subr.mxu0 0.0
  %4879 = vmatpush1.msra.mxu0 %v4739
  %4880 = vmatprep.subr.mxu0 0.0
  %4881 = vmatpush1.msra.mxu0 %v4740
  %4882 = vmatprep.subr.mxu0 0.0
  %4883 = vmatpush1.msra.mxu0 %v4741
  %4884 = vmatprep.subr.mxu0 0.0
  %4885 = vmatpush1.msra.mxu0 %v4742
  %4886 = vmatprep.subr.mxu0 0.0
  %4887 = vmatpush1.msra.mxu0 %v4743
  %4888 = vmatprep.subr.mxu0 0.0
  %4889 = vmatpush1.msra.mxu0 %v4744
  %4890 = vmatprep.subr.mxu0 0.0
  %4891 = vmatpush1.msra.mxu0 %v4745
  %4892 = vmatprep.subr.mxu0 0.0
  %4893 = vmatpush1.msra.mxu0 %v4746
  %4894 = vmatprep.subr.mxu0 0.0
  %4895 = vmatpush1.msra.mxu0 %v4747
  %4896 = vmatprep.subr.mxu0 0.0
  %4897 = vmatpush1.msra.mxu0 %v4748
  %4898 = vmatprep.subr.mxu0 0.0
  %4899 = vmatpush1.msra.mxu0 %v4749
  %4900 = vmatprep.subr.mxu0 0.0
  %4901 = vmatpush1.msra.mxu0 %v4750
  %4902 = vmatprep.subr.mxu0 0.0
  %4903 = vmatpush1.msra.mxu0 %v4751
  %4904 = vmatprep.subr.mxu0 0.0
  %4905 = vmatpush1.msra.mxu0 %v4752
  %4906 = vmatprep.subr.mxu0 0.0
  %4907 = vmatpush1.msra.mxu0 %v4753
  %4908 = vmatprep.subr.mxu0 0.0
  %4909 = vmatpush1.msra.mxu0 %v4754
  %4910 = vmatprep.subr.mxu0 0.0
  %4911 = vmatpush1.msra.mxu0 %v4755
  %4912 = vmatprep.subr.mxu0 0.0
  %4913 = vmatpush1.msra.mxu0 %v4756
  %4914 = vmatprep.subr.mxu0 0.0
  %4915 = vmatpush1.msra.mxu0 %v4757
  %4916 = vmatprep.subr.mxu0 0.0
  %4917 = vmatpush1.msra.mxu0 %v4758
  %4918 = vmatprep.subr.mxu0 0.0
  %4919 = vmatpush1.msra.mxu0 %v4759
  %4920 = vmatprep.subr.mxu0 0.0
  %4921 = vmatpush1.msra.mxu0 %v4760
  %4922 = vmatprep.subr.mxu0 0.0
  %4923 = vmatpush1.msra.mxu0 %v4761
  %4924 = vmatprep.subr.mxu0 0.0
  %4925 = vmatpush1.msra.mxu0 %v4762
  %4926 = vmatprep.subr.mxu0 0.0
  %4927 = vmatpush1.msra.mxu0 %v4763
  %4928 = vmatprep.subr.mxu0 0.0
  %4929 = vmatpush1.msra.mxu0 %v4764
  %4930 = vmatprep.subr.mxu0 0.0
  %4931 = vmatpush1.msra.mxu0 %v4765
  %4932 = vmatprep.subr.mxu0 0.0
  %4933 = vmatpush1.msra.mxu0 %v4766
  %4934 = vmatprep.mubr.f32.mxu0 %v4692
  %4935 = vmatmul.mubr.f32.gmra.mrb[0].mxu0 %v4685
  %v4936 = vpop.f32.mrb[0].mxu0
  %v4937 = vadd.f32 %v4868, %v4936
  %v4938 = vpop.f32.mrb[0].mxu0
  %4939 = vdwg.mxu0
  %4940 = vmatprep.subr.mxu0 0.0
  %4941 = vmatpush1.msra.mxu0 %v4767
  %4942 = vmatprep.subr.mxu0 0.0
  %4943 = vmatpush1.msra.mxu0 %v4768
  %4944 = vmatprep.subr.mxu0 0.0
  %4945 = vmatpush1.msra.mxu0 %v4769
  %4946 = vmatprep.subr.mxu0 0.0
  %4947 = vmatpush1.msra.mxu0 %v4770
  %4948 = vmatprep.subr.mxu0 0.0
  %4949 = vmatpush1.msra.mxu0 %v4771
  %4950 = vmatprep.subr.mxu0 0.0
  %4951 = vmatpush1.msra.mxu0 %v4772
  %4952 = vmatprep.subr.mxu0 0.0
  %4953 = vmatpush1.msra.mxu0 %v4773
  %4954 = vmatprep.subr.mxu0 0.0
  %4955 = vmatpush1.msra.mxu0 %v4774
  %4956 = vmatprep.subr.mxu0 0.0
  %4957 = vmatpush1.msra.mxu0 %v4775
  %4958 = vmatprep.subr.mxu0 0.0
  %4959 = vmatpush1.msra.mxu0 %v4776
  %4960 = vmatprep.subr.mxu0 0.0
  %4961 = vmatpush1.msra.mxu0 %v4777
  %4962 = vmatprep.subr.mxu0 0.0
  %4963 = vmatpush1.msra.mxu0 %v4778
  %4964 = vmatprep.subr.mxu0 0.0
  %4965 = vmatpush1.msra.mxu0 %v4779
  %4966 = vmatprep.subr.mxu0 0.0
  %4967 = vmatpush1.msra.mxu0 %v4780
  %4968 = vmatprep.subr.mxu0 0.0
  %4969 = vmatpush1.msra.mxu0 %v4781
  %4970 = vmatprep.subr.mxu0 0.0
  %4971 = vmatpush1.msra.mxu0 %v4782
  %4972 = vmatprep.subr.mxu0 0.0
  %4973 = vmatpush1.msra.mxu0 %v4783
  %4974 = vmatprep.subr.mxu0 0.0
  %4975 = vmatpush1.msra.mxu0 %v4784
  %4976 = vmatprep.subr.mxu0 0.0
  %4977 = vmatpush1.msra.mxu0 %v4785
  %4978 = vmatprep.subr.mxu0 0.0
  %4979 = vmatpush1.msra.mxu0 %v4786
  %4980 = vmatprep.subr.mxu0 0.0
  %4981 = vmatpush1.msra.mxu0 %v4787
  %4982 = vmatprep.subr.mxu0 0.0
  %4983 = vmatpush1.msra.mxu0 %v4788
  %4984 = vmatprep.subr.mxu0 0.0
  %4985 = vmatpush1.msra.mxu0 %v4789
  %4986 = vmatprep.subr.mxu0 0.0
  %4987 = vmatpush1.msra.mxu0 %v4790
  %4988 = vmatprep.subr.mxu0 0.0
  %4989 = vmatpush1.msra.mxu0 %v4791
  %4990 = vmatprep.subr.mxu0 0.0
  %4991 = vmatpush1.msra.mxu0 %v4792
  %4992 = vmatprep.subr.mxu0 0.0
  %4993 = vmatpush1.msra.mxu0 %v4793
  %4994 = vmatprep.subr.mxu0 0.0
  %4995 = vmatpush1.msra.mxu0 %v4794
  %4996 = vmatprep.subr.mxu0 0.0
  %4997 = vmatpush1.msra.mxu0 %v4795
  %4998 = vmatprep.subr.mxu0 0.0
  %4999 = vmatpush1.msra.mxu0 %v4796
  %5000 = vmatprep.subr.mxu0 0.0
  %5001 = vmatpush1.msra.mxu0 %v4797
  %5002 = vmatprep.subr.mxu0 0.0
  %5003 = vmatpush1.msra.mxu0 %v4798
  %5004 = vmatprep.mubr.f32.mxu0 %v4706
  %5005 = vmatmul.mubr.f32.gmra.mrb[0].mxu0 %v4699
  %v5006 = vpop.f32.mrb[0].mxu0
  %v5007 = vadd.f32 %v4937, %v5006
  %v5008 = vpop.f32.mrb[0].mxu0
  %5009 = vdwg.mxu0
  %5010 = vmatprep.subr.mxu0 0.0
  %5011 = vmatpush1.msra.mxu0 %v4799
  %5012 = vmatprep.subr.mxu0 0.0
  %5013 = vmatpush1.msra.mxu0 %v4800
  %5014 = vmatprep.subr.mxu0 0.0
  %5015 = vmatpush1.msra.mxu0 %v4801
  %5016 = vmatprep.subr.mxu0 0.0
  %5017 = vmatpush1.msra.mxu0 %v4802
  %5018 = vmatprep.subr.mxu0 0.0
  %5019 = vmatpush1.msra.mxu0 %v4803
  %5020 = vmatprep.subr.mxu0 0.0
  %5021 = vmatpush1.msra.mxu0 %v4804
  %5022 = vmatprep.subr.mxu0 0.0
  %5023 = vmatpush1.msra.mxu0 %v4805
  %5024 = vmatprep.subr.mxu0 0.0
  %5025 = vmatpush1.msra.mxu0 %v4806
  %5026 = vmatprep.subr.mxu0 0.0
  %5027 = vmatpush1.msra.mxu0 %v4807
  %5028 = vmatprep.subr.mxu0 0.0
  %5029 = vmatpush1.msra.mxu0 %v4808
  %5030 = vmatprep.subr.mxu0 0.0
  %5031 = vmatpush1.msra.mxu0 %v4809
  %5032 = vmatprep.subr.mxu0 0.0
  %5033 = vmatpush1.msra.mxu0 %v4810
  %5034 = vmatprep.subr.mxu0 0.0
  %5035 = vmatpush1.msra.mxu0 %v4811
  %5036 = vmatprep.subr.mxu0 0.0
  %5037 = vmatpush1.msra.mxu0 %v4812
  %5038 = vmatprep.subr.mxu0 0.0
  %5039 = vmatpush1.msra.mxu0 %v4813
  %5040 = vmatprep.subr.mxu0 0.0
  %5041 = vmatpush1.msra.mxu0 %v4814
  %5042 = vmatprep.subr.mxu0 0.0
  %5043 = vmatpush1.msra.mxu0 %v4815
  %5044 = vmatprep.subr.mxu0 0.0
  %5045 = vmatpush1.msra.mxu0 %v4816
  %5046 = vmatprep.subr.mxu0 0.0
  %5047 = vmatpush1.msra.mxu0 %v4817
  %5048 = vmatprep.subr.mxu0 0.0
  %5049 = vmatpush1.msra.mxu0 %v4818
  %5050 = vmatprep.subr.mxu0 0.0
  %5051 = vmatpush1.msra.mxu0 %v4819
  %5052 = vmatprep.subr.mxu0 0.0
  %5053 = vmatpush1.msra.mxu0 %v4820
  %5054 = vmatprep.subr.mxu0 0.0
  %5055 = vmatpush1.msra.mxu0 %v4821
  %5056 = vmatprep.subr.mxu0 0.0
  %5057 = vmatpush1.msra.mxu0 %v4822
  %5058 = vmatprep.subr.mxu0 0.0
  %5059 = vmatpush1.msra.mxu0 %v4823
  %5060 = vmatprep.subr.mxu0 0.0
  %5061 = vmatpush1.msra.mxu0 %v4824
  %5062 = vmatprep.subr.mxu0 0.0
  %5063 = vmatpush1.msra.mxu0 %v4825
  %5064 = vmatprep.subr.mxu0 0.0
  %5065 = vmatpush1.msra.mxu0 %v4826
  %5066 = vmatprep.subr.mxu0 0.0
  %5067 = vmatpush1.msra.mxu0 %v4827
  %5068 = vmatprep.subr.mxu0 0.0
  %5069 = vmatpush1.msra.mxu0 %v4828
  %5070 = vmatprep.subr.mxu0 0.0
  %5071 = vmatpush1.msra.mxu0 %v4829
  %5072 = vmatprep.subr.mxu0 0.0
  %5073 = vmatpush1.msra.mxu0 %v4830
  %5074 = vmatprep.mubr.f32.mxu0 %v4720
  %5075 = vmatmul.mubr.f32.gmra.mrb[0].mxu0 %v4713
  %v5076 = vpop.f32.mrb[0].mxu0
  %v5077 = vadd.f32 %v5007, %v5076
  %v5078 = vpop.f32.mrb[0].mxu0
  %5079 = vdwg.mxu0
  %5080 = vmatprep.subr.mxu0 0.0
  %5081 = vmatpush1.msra.mxu0 %v4831
  %5082 = vmatprep.subr.mxu0 0.0
  %5083 = vmatpush1.msra.mxu0 %v4832
  %5084 = vmatprep.subr.mxu0 0.0
  %5085 = vmatpush1.msra.mxu0 %v4833
  %5086 = vmatprep.subr.mxu0 0.0
  %5087 = vmatpush1.msra.mxu0 %v4834
  %5088 = vmatprep.subr.mxu0 0.0
  %5089 = vmatpush1.msra.mxu0 %v4835
  %5090 = vmatprep.subr.mxu0 0.0
  %5091 = vmatpush1.msra.mxu0 %v4836
  %5092 = vmatprep.subr.mxu0 0.0
  %5093 = vmatpush1.msra.mxu0 %v4837
  %5094 = vmatprep.subr.mxu0 0.0
  %5095 = vmatpush1.msra.mxu0 %v4838
  %5096 = vmatprep.subr.mxu0 0.0
  %5097 = vmatpush1.msra.mxu0 %v4839
  %5098 = vmatprep.subr.mxu0 0.0
  %5099 = vmatpush1.msra.mxu0 %v4840
  %5100 = vmatprep.subr.mxu0 0.0
  %5101 = vmatpush1.msra.mxu0 %v4841
  %5102 = vmatprep.subr.mxu0 0.0
  %5103 = vmatpush1.msra.mxu0 %v4842
  %5104 = vmatprep.subr.mxu0 0.0
  %5105 = vmatpush1.msra.mxu0 %v4843
  %5106 = vmatprep.subr.mxu0 0.0
  %5107 = vmatpush1.msra.mxu0 %v4844
  %5108 = vmatprep.subr.mxu0 0.0
  %5109 = vmatpush1.msra.mxu0 %v4845
  %5110 = vmatprep.subr.mxu0 0.0
  %5111 = vmatpush1.msra.mxu0 %v4846
  %5112 = vmatprep.subr.mxu0 0.0
  %5113 = vmatpush1.msra.mxu0 %v4847
  %5114 = vmatprep.subr.mxu0 0.0
  %5115 = vmatpush1.msra.mxu0 %v4848
  %5116 = vmatprep.subr.mxu0 0.0
  %5117 = vmatpush1.msra.mxu0 %v4849
  %5118 = vmatprep.subr.mxu0 0.0
  %5119 = vmatpush1.msra.mxu0 %v4850
  %5120 = vmatprep.subr.mxu0 0.0
  %5121 = vmatpush1.msra.mxu0 %v4851
  %5122 = vmatprep.subr.mxu0 0.0
  %5123 = vmatpush1.msra.mxu0 %v4852
  %5124 = vmatprep.subr.mxu0 0.0
  %5125 = vmatpush1.msra.mxu0 %v4853
  %5126 = vmatprep.subr.mxu0 0.0
  %5127 = vmatpush1.msra.mxu0 %v4854
  %5128 = vmatprep.subr.mxu0 0.0
  %5129 = vmatpush1.msra.mxu0 %v4855
  %5130 = vmatprep.subr.mxu0 0.0
  %5131 = vmatpush1.msra.mxu0 %v4856
  %5132 = vmatprep.subr.mxu0 0.0
  %5133 = vmatpush1.msra.mxu0 %v4857
  %5134 = vmatprep.subr.mxu0 0.0
  %5135 = vmatpush1.msra.mxu0 %v4858
  %5136 = vmatprep.subr.mxu0 0.0
  %5137 = vmatpush1.msra.mxu0 %v4859
  %5138 = vmatprep.subr.mxu0 0.0
  %5139 = vmatpush1.msra.mxu0 %v4860
  %5140 = vmatprep.subr.mxu0 0.0
  %5141 = vmatpush1.msra.mxu0 %v4861
  %5142 = vmatprep.subr.mxu0 0.0
  %5143 = vmatpush1.msra.mxu0 %v4862
  %5144 = vmatprep.mubr.f32.mxu0 %v4734
  %5145 = vmatmul.mubr.f32.gmra.mrb[0].mxu0 %v4727
  %v5146 = vpop.f32.mrb[0].mxu0
  %v5147 = vadd.f32 %v5077, %v5146
  %v5148 = vpop.f32.mrb[0].mxu0
  %5149 = vdwg.mxu0
  %5150 = vst [vmem:[%s5] sm:$0xff] %v5147
  // Predicated region
  $region22: #{student_forward.1} parent=0 // pred_check
    _
  $region23: #{student_forward.1} parent=0 // pred_check_branch
    %5152 = sbr.rel (0) target = $region25
  $region24: #{student_forward.1} parent=0 // pred_region
    _
  $region25: #{student_forward.1} parent=0 // pred_fallthru
    _
  // Predicated region
  $region26: #{student_forward.1} parent=0 // pred_check
    _
  $region27: #{student_forward.1} parent=0 // pred_check_branch
    %5154 = sbr.rel (0) target = $region29
  $region28: #{student_forward.1} parent=0 // pred_region
    _
  $region29: #{student_forward.1} parent=0 // pred_fallthru
    _

</llo_original>
